<compile_context>
chip_gen: v7x
topology: tpu7x:2x2x1
jax: 0.10.0
libtpu: 0.0.40
codegen_flags: <defaults>
</compile_context>

<pallas_src>
import functools

import jax
import jax.numpy as jnp
from jax.experimental import pallas as pl
from jax.experimental.pallas import tpu as pltpu

EPS = 1e-5
MXU_DTYPE = jnp.bfloat16        # MXU operand dtype; accumulation is f32.
ACT_DTYPE = jnp.bfloat16        # inter-call activation storage (y1, y2).
VMEM_LIMIT = 48 * 1024 * 1024   # > 16/32 MiB scoped defaults, < v7x 64 MiB.


# ----------------------------------------------------------------------------
# In-kernel helpers
# ----------------------------------------------------------------------------
def _mod_iota(n_rows, period):
    """(n_rows, 1) int32 iota modulo `period` (cheap AND for powers of two)."""
    it = jax.lax.broadcasted_iota(jnp.int32, (n_rows, 1), 0)
    if period & (period - 1) == 0:
        return jnp.bitwise_and(it, period - 1)
    return jax.lax.rem(it, period)


def _conv3x3_mxu(x2d, w_ref, H, W):
    """'Same' 3x3 conv (stride 1, zero pad 1), dx taps fused per ky row.

    x2d   : (R, Cin) f32, R = imgs_per_block*H*W, row m = (img*H + h)*W + w.
    w_ref : Ref[(3, 3*Cin, Cout)] bf16, w_ref[ky] = [w[ky,0] | w[ky,1] | w[ky,2]].
    returns (R, Cout) f32.

    Tap (ky,kx) reads source row m + (ky-1)*W + (kx-1).  The dx=+-1 shifts are
    sublane rolls of column-masked copies (the rolled-around rows land on
    masked columns, so they are already zero); the three dx variants are
    concatenated along channels into an (R, 3*Cin) operand so each ky is one
    K=3*Cin matmul.  The dy=+-1 shifts are rolls of that fused operand with a
    per-image row mask (period H*W, so packed images never bleed into each
    other).
    """
    R, cin = x2d.shape
    HW = H * W
    cout = w_ref.shape[-1]
    zero = jnp.zeros_like(x2d)

    # Column masks: sources that a dx=-1 (resp. dx=+1) tap would read across
    # the left (resp. right) image edge.
    col = _mod_iota(R, W)
    x_dxm = pltpu.roll(jnp.where(col < (W - 1), x2d, zero), shift=1, axis=0)
    x_dxp = pltpu.roll(jnp.where(col > 0, x2d, zero), shift=R - 1, axis=0)
    x3 = jnp.concatenate([x_dxm, x2d, x_dxp], axis=1)          # (R, 3*Cin) f32

    row = _mod_iota(R, HW)                 # spatial row index inside each image
    acc = jnp.zeros((R, cout), jnp.float32)
    for ky in range(3):
        dy = ky - 1
        if dy == 0:
            xk = x3
        else:
            xk = pltpu.roll(x3, shift=(-dy * W) % R, axis=0)
            keep = (row < HW - W) if dy > 0 else (row >= W)
            xk = jnp.where(keep, xk, jnp.zeros_like(xk))
        # Keep the accumulate expressed as acc = acc + dot(...) so Mosaic can
        # accumulate in the MRB on v7x (fewer MRF pops on v5e/v6e).
        acc = acc + jnp.dot(xk.astype(MXU_DTYPE), w_ref[ky],
                            preferred_element_type=jnp.float32)
    return acc


# ----------------------------------------------------------------------------
# Kernels
# ----------------------------------------------------------------------------
def _conv_stats_kernel(*refs, H, W, fuse_bn_relu):
    """[optional BN+ReLU of input] -> 3x3 conv (MXU) -> fused BN statistics."""
    if fuse_bn_relu:
        x_ref, w_ref, scale_ref, shift_ref, y_ref, sum_ref, ssq_ref = refs
    else:
        x_ref, w_ref, y_ref, sum_ref, ssq_ref = refs

    imgs, HW, cin = x_ref.shape
    x = x_ref[...].astype(jnp.float32).reshape(imgs * HW, cin)
    if fuse_bn_relu:
        # BN of the *previous* conv as a fused multiply-add, then ReLU (f32).
        x = jnp.maximum(x * scale_ref[...] + shift_ref[...], 0.0)

    acc = _conv3x3_mxu(x, w_ref, H, W)                  # (imgs*HW, Cout) f32
    cout = acc.shape[1]
    y_ref[...] = acc.reshape(imgs, HW, cout).astype(y_ref.dtype)   # bf16 store

    # BN statistics taken from the still-live f32 accumulator.
    sum_ref[...] = jnp.sum(acc, axis=0).reshape(1, 1, cout)
    ssq_ref[...] = jnp.sum(acc * acc, axis=0).reshape(1, 1, cout)


def _bn_add_relu_kernel(y_ref, res_ref, scale_ref, shift_ref, out_ref):
    """Streaming bn2 (scale/shift) + identity residual + ReLU on row blocks."""
    y = y_ref[...].astype(jnp.float32) * scale_ref[...] + shift_ref[...]
    out_ref[...] = jnp.maximum(y + res_ref[...], 0.0)


# ----------------------------------------------------------------------------
# Block-size heuristics
# ----------------------------------------------------------------------------
def _pick_imgs_per_block(N, HW, target_rows=512):
    """Smallest divisor of N giving >= target_rows MXU rows per block, while
    keeping at least two grid steps (pipelining + both v7x TensorCores)."""
    limit = max(1, N // 2)
    best = 1
    for b in range(1, limit + 1):
        if N % b == 0:
            best = b
            if b * HW >= target_rows:
                break
    return best


def _pick_row_block(total_rows, max_rows=2048):
    """Largest multiple-of-8 divisor of total_rows <= max_rows with >= 2 grid
    steps; falls back to one full block (always legal)."""
    cap = min(max_rows, total_rows)
    start = (cap // 8) * 8
    for cand in range(start, 7, -8):
        if total_rows % cand == 0 and total_rows // cand >= 2:
            return cand
    return total_rows


# ----------------------------------------------------------------------------
# pallas_call builders
# ----------------------------------------------------------------------------
def _conv_bn_stats_call(x, w3, H, W, scale=None, shift=None, imgs_per_block=1):
    """conv3x3 (+ optional fused BN/ReLU of the input) over a batch grid."""
    N, HW, cin = x.shape
    cout = w3.shape[-1]
    B = imgs_per_block
    G = N // B
    fuse = scale is not None

    blk = lambda g: (g, 0, 0)          # per-block (B images) windows
    rep3 = lambda g: (0, 0, 0)         # weights: broadcast across the grid
    rep2 = lambda g: (0, 0)            # scale / shift rows

    in_specs = [pl.BlockSpec((B, HW, cin), blk),
                pl.BlockSpec((3, 3 * cin, cout), rep3)]
    args = [x, w3]
    if fuse:
        in_specs += [pl.BlockSpec((1, cin), rep2),
                     pl.BlockSpec((1, cin), rep2)]
        args += [scale, shift]

    kernel = functools.partial(_conv_stats_kernel, H=H, W=W, fuse_bn_relu=fuse)
    return pl.pallas_call(
        kernel,
        out_shape=(jax.ShapeDtypeStruct((N, HW, cout), ACT_DTYPE),
                   jax.ShapeDtypeStruct((G, 1, cout), jnp.float32),
                   jax.ShapeDtypeStruct((G, 1, cout), jnp.float32)),
        grid_spec=pltpu.PrefetchScalarGridSpec(
            num_scalar_prefetch=0,
            grid=(G,),
            in_specs=in_specs,
            out_specs=(pl.BlockSpec((B, HW, cout), blk),
                       pl.BlockSpec((1, 1, cout), blk),
                       pl.BlockSpec((1, 1, cout), blk)),
        ),
        compiler_params=pltpu.CompilerParams(
            dimension_semantics=("parallel",),
            vmem_limit_bytes=VMEM_LIMIT),
    )(*args)


def _bn_add_relu_call(y2_flat, res_flat, scale, shift, row_block):
    T, C = res_flat.shape
    G = T // row_block
    blk = lambda g: (g, 0)
    rep = lambda g: (0, 0)
    return pl.pallas_call(
        _bn_add_relu_kernel,
        out_shape=jax.ShapeDtypeStruct((T, C), jnp.float32),
        grid_spec=pltpu.PrefetchScalarGridSpec(
            num_scalar_prefetch=0,
            grid=(G,),
            in_specs=[pl.BlockSpec((row_block, C), blk),
                      pl.BlockSpec((row_block, C), blk),
                      pl.BlockSpec((1, C), rep),
                      pl.BlockSpec((1, C), rep)],
            out_specs=pl.BlockSpec((row_block, C), blk),
        ),
        input_output_aliases={1: 0},   # output reuses the residual's HBM buffer
        compiler_params=pltpu.CompilerParams(
            dimension_semantics=("parallel",),
            vmem_limit_bytes=VMEM_LIMIT),
    )(y2_flat, res_flat, scale, shift)


# ----------------------------------------------------------------------------
# Wrapper (PyTorch NCHW boundary)
# ----------------------------------------------------------------------------
def _bn_scale_shift(sums, sumsqs, count, gamma, beta):
    """Fold per-block (sum, sumsq) rows into per-channel BN scale/shift."""
    mean = jnp.sum(sums, axis=(0, 1)) / count                    # (C,)
    var = jnp.sum(sumsqs, axis=(0, 1)) / count - mean * mean     # biased
    scale = gamma * jax.lax.rsqrt(var + EPS)
    shift = beta - mean * scale
    return scale.reshape(1, -1), shift.reshape(1, -1)


def residual_block(x_nchw, w1_oihw, w2_oihw, g1, b1, g2, b2):
    """ResidualBlock forward (stride=1, downsample=None). NCHW in / NCHW out."""
    N, C, H, W = x_nchw.shape
    assert w1_oihw.shape[0] == w1_oihw.shape[1] == C, \
        "identity residual needs in_ch == out_ch"
    HW = H * W
    count = N * HW

    # Layout glue at the boundary: NCHW -> per-image row-major (H*W, C);
    # OIHW -> fused-tap (ky, 3*Cin, Cout) weights in the MXU operand dtype.
    x_flat = jnp.transpose(x_nchw, (0, 2, 3, 1)).reshape(N, HW, C)
    w1 = jnp.transpose(w1_oihw, (2, 3, 1, 0)).reshape(3, 3 * C, C).astype(MXU_DTYPE)
    w2 = jnp.transpose(w2_oihw, (2, 3, 1, 0)).reshape(3, 3 * C, C).astype(MXU_DTYPE)

    B = _pick_imgs_per_block(N, HW)

    # conv1 (+ fused BN1 statistics); y1 stored bf16.
    y1, s1, q1 = _conv_bn_stats_call(x_flat, w1, H, W, imgs_per_block=B)
    scale1, shift1 = _bn_scale_shift(s1, q1, count, g1, b1)

    # bn1 + relu + conv2 (+ fused BN2 statistics); y2 stored bf16.
    y2, s2, q2 = _conv_bn_stats_call(y1, w2, H, W, scale=scale1, shift=shift1,
                                     imgs_per_block=B)
    scale2, shift2 = _bn_scale_shift(s2, q2, count, g2, b2)

    # bn2 + identity residual + relu, streamed over large image-agnostic blocks.
    rb = _pick_row_block(N * HW)
    out_flat = _bn_add_relu_call(y2.reshape(N * HW, C),
                                 x_flat.reshape(N * HW, C),
                                 scale2, shift2, rb)
    return jnp.transpose(out_flat.reshape(N, H, W, C), (0, 3, 1, 2))


# ----------------------------------------------------------------------------
# Pure-JAX reference (mirrors the PyTorch module)
# ----------------------------------------------------------------------------
def residual_block_reference(x, w1, w2, g1, b1, g2, b2,
                             conv_dtype=jnp.float32):
    """NCHW reference. `conv_dtype` controls the conv-operand dtype so the
    same reference can model the bf16 MXU operands (accumulation stays f32)."""
    dn = ("NCHW", "OIHW", "NCHW")

    def conv(a, w):
        return jax.lax.conv_general_dilated(
            a.astype(conv_dtype), w.astype(conv_dtype), (1, 1),
            ((1, 1), (1, 1)), dimension_numbers=dn,
            preferred_element_type=jnp.float32)

    def bn(y, g, b):
        m = y.mean(axis=(0, 2, 3), keepdims=True)
        v = ((y - m) ** 2).mean(axis=(0, 2, 3), keepdims=True)
        return (y - m) * jax.lax.rsqrt(v + EPS) * g.reshape(1, -1, 1, 1) \
            + b.reshape(1, -1, 1, 1)

    y = jnp.maximum(bn(conv(x, w1), g1, b1), 0.0)
    y = bn(conv(y, w2), g2, b2)
    return jnp.maximum(y + x, 0.0)


if __name__ == "__main__":
    fwd = jax.jit(residual_block)

    def run_case(N, C, H, W, seed):
        key = jax.random.PRNGKey(seed)
        ks = jax.random.split(key, 6)
        x = jax.random.normal(ks[0], (N, C, H, W), jnp.float32)
        w1 = 0.3 * jax.random.normal(ks[1], (C, C, 3, 3), jnp.float32)
        w2 = 0.3 * jax.random.normal(ks[2], (C, C, 3, 3), jnp.float32)
        g1 = 1.0 + 0.1 * jax.random.normal(ks[3], (C,), jnp.float32)
        b1 = 0.1 * jax.random.normal(ks[4], (C,), jnp.float32)
        g2 = 1.0 + 0.1 * jax.random.normal(ks[5], (C,), jnp.float32)
        b2 = jnp.zeros((C,), jnp.float32)

        out = jax.block_until_ready(fwd(x, w1, w2, g1, b1, g2, b2))
        assert out.shape == (N, C, H, W)

        # Tight check vs. a reference that models the bf16 MXU operands
        # (f32 accumulation; tolerance covers the bf16 y1/y2 storage), plus a
        # looser sanity check vs. the pure-f32 module.
        ref_b = residual_block_reference(x, w1, w2, g1, b1, g2, b2,
                                         conv_dtype=jnp.bfloat16)
        ref_f = residual_block_reference(x, w1, w2, g1, b1, g2, b2,
                                         conv_dtype=jnp.float32)
        err_b = float(jnp.max(jnp.abs(out - ref_b)))
        err_f = float(jnp.max(jnp.abs(out - ref_f)))
        assert jnp.allclose(out, ref_b, atol=5e-2, rtol=5e-2), \
            f"shape ({N},{C},{H},{W}): bf16-operand reference max err {err_b}"
        assert jnp.allclose(out, ref_f, atol=2e-1, rtol=2e-1), \
            f"shape ({N},{C},{H},{W}): f32 reference max err {err_f}"

    # Primary case (spec shape) + a case with H != W and non-power-of-two W
    # to exercise the modulo masks and the row-block picker.
    run_case(2, 4, 16, 16, 0)
    run_case(2, 8, 8, 6, 0)
    print("KERNEL_OK")
</pallas_src>

<mosaic_0001>
module attributes {stable_mosaic.version = 11 : i64} {
  func.func @_conv_stats_kernel(%arg0: i32, %arg1: memref<1x256x4xbf16, #tpu.memory_space<vmem>>, %arg2: memref<3x12x4xbf16, #tpu.memory_space<vmem>>, %arg3: memref<1x4xf32, #tpu.memory_space<vmem>>, %arg4: memref<1x4xf32, #tpu.memory_space<vmem>>, %arg5: memref<1x256x4xbf16, #tpu.memory_space<vmem>>, %arg6: memref<1x1x4xf32, #tpu.memory_space<vmem>>, %arg7: memref<1x1x4xf32, #tpu.memory_space<vmem>>) attributes {dimension_semantics = [#tpu.dimension_semantics<parallel>], iteration_bounds = array<i64: 2>, scalar_prefetch = 0 : i64, scratch_operands = 0 : i64, tpu.core_type = #tpu.core_type<tc>, window_params = [{transform_indices = @transform_0, window_bounds = array<i64: 1, 256, 4>}, {pipeline_mode = #tpu.pipeline_mode<synchronous>, transform_indices = @transform_1, window_bounds = array<i64: 3, 12, 4>}, {pipeline_mode = #tpu.pipeline_mode<synchronous>, transform_indices = @transform_2, window_bounds = array<i64: 1, 4>}, {pipeline_mode = #tpu.pipeline_mode<synchronous>, transform_indices = @transform_3, window_bounds = array<i64: 1, 4>}, {transform_indices = @transform_4, window_bounds = array<i64: 1, 256, 4>}, {transform_indices = @transform_5, window_bounds = array<i64: 1, 1, 4>}, {transform_indices = @transform_6, window_bounds = array<i64: 1, 1, 4>}]} {
    %c0 = arith.constant 0 : index
    %c0_0 = arith.constant 0 : index
    %c0_1 = arith.constant 0 : index
    %0 = vector.load %arg1[%c0, %c0_0, %c0_1] : memref<1x256x4xbf16, #tpu.memory_space<vmem>>, vector<1x256x4xbf16>
    %1 = arith.extf %0 : vector<1x256x4xbf16> to vector<1x256x4xf32>
    %2 = vector.shape_cast %1 : vector<1x256x4xf32> to vector<256x4xf32>
    %c0_2 = arith.constant 0 : index
    %c0_3 = arith.constant 0 : index
    %3 = vector.load %arg3[%c0_2, %c0_3] : memref<1x4xf32, #tpu.memory_space<vmem>>, vector<1x4xf32>
    %4 = vector.broadcast %3 : vector<1x4xf32> to vector<256x4xf32>
    %5 = arith.mulf %2, %4 : vector<256x4xf32>
    %c0_4 = arith.constant 0 : index
    %c0_5 = arith.constant 0 : index
    %6 = vector.load %arg4[%c0_4, %c0_5] : memref<1x4xf32, #tpu.memory_space<vmem>>, vector<1x4xf32>
    %7 = vector.broadcast %6 : vector<1x4xf32> to vector<256x4xf32>
    %8 = arith.addf %5, %7 : vector<256x4xf32>
    %cst = arith.constant 0.000000e+00 : f32
    %9 = vector.broadcast %cst : f32 to vector<256x4xf32>
    %10 = arith.maximumf %8, %9 : vector<256x4xf32>
    %cst_6 = arith.constant 0.000000e+00 : f32
    %11 = vector.broadcast %cst_6 : f32 to vector<256x4xf32>
    %12 = tpu.iota {dimensions = array<i32: 0>} : vector<256x1xi32>
    %c15_i32 = arith.constant 15 : i32
    %13 = vector.broadcast %c15_i32 : i32 to vector<256x1xi32>
    %14 = arith.andi %12, %13 : vector<256x1xi32>
    %c15_i32_7 = arith.constant 15 : i32
    %15 = vector.broadcast %c15_i32_7 : i32 to vector<256x1xi32>
    %16 = arith.cmpi slt, %14, %15 : vector<256x1xi32>
    %17 = vector.shape_cast %16 : vector<256x1xi1> to vector<256x1xi1>
    %18 = vector.broadcast %17 : vector<256x1xi1> to vector<256x4xi1>
    %19 = arith.select %18, %10, %11 : vector<256x4xi1>, vector<256x4xf32>
    %c1_i32 = arith.constant 1 : i32
    %20 = tpu.dynamic_rotate %19 by %c1_i32 dim 0 : vector<256x4xf32>, i32 -> vector<256x4xf32>
    %c0_i32 = arith.constant 0 : i32
    %21 = vector.broadcast %c0_i32 : i32 to vector<256x1xi32>
    %22 = arith.cmpi sgt, %14, %21 : vector<256x1xi32>
    %23 = vector.shape_cast %22 : vector<256x1xi1> to vector<256x1xi1>
    %24 = vector.broadcast %23 : vector<256x1xi1> to vector<256x4xi1>
    %25 = arith.select %24, %10, %11 : vector<256x4xi1>, vector<256x4xf32>
    %c255_i32 = arith.constant 255 : i32
    %26 = tpu.dynamic_rotate %25 by %c255_i32 dim 0 : vector<256x4xf32>, i32 -> vector<256x4xf32>
    %27 = tpu.concatenate %20, %10, %26 in 1 : vector<256x4xf32>, vector<256x4xf32>, vector<256x4xf32> -> vector<256x12xf32>
    %28 = tpu.iota {dimensions = array<i32: 0>} : vector<256x1xi32>
    %c255_i32_8 = arith.constant 255 : i32
    %29 = vector.broadcast %c255_i32_8 : i32 to vector<256x1xi32>
    %30 = arith.andi %28, %29 : vector<256x1xi32>
    %cst_9 = arith.constant 0.000000e+00 : f32
    %31 = vector.broadcast %cst_9 : f32 to vector<256x4xf32>
    %c16_i32 = arith.constant 16 : i32
    %32 = tpu.dynamic_rotate %27 by %c16_i32 dim 0 : vector<256x12xf32>, i32 -> vector<256x12xf32>
    %c16_i32_10 = arith.constant 16 : i32
    %33 = vector.broadcast %c16_i32_10 : i32 to vector<256x1xi32>
    %34 = arith.cmpi sge, %30, %33 : vector<256x1xi32>
    %cst_11 = arith.constant 0.000000e+00 : f32
    %35 = vector.broadcast %cst_11 : f32 to vector<256x12xf32>
    %36 = vector.shape_cast %34 : vector<256x1xi1> to vector<256x1xi1>
    %37 = vector.broadcast %36 : vector<256x1xi1> to vector<256x12xi1>
    %38 = arith.select %37, %32, %35 : vector<256x12xi1>, vector<256x12xf32>
    %39 = arith.truncf %38 : vector<256x12xf32> to vector<256x12xbf16>
    %c0_12 = arith.constant 0 : index
    %c0_13 = arith.constant 0 : index
    %c0_14 = arith.constant 0 : index
    %40 = vector.load %arg2[%c0_12, %c0_13, %c0_14] : memref<3x12x4xbf16, #tpu.memory_space<vmem>>, vector<1x12x4xbf16>
    %41 = vector.shape_cast %40 : vector<1x12x4xbf16> to vector<12x4xbf16>
    %cst_15 = arith.constant dense<0.000000e+00> : vector<256x4xf32>
    %42 = tpu.matmul %39, %41, %cst_15 {dimension_numbers = #tpu.dot_dimension_numbers<[1], [0], [0], [1], [0, 0, 1, 1], [], []>} : vector<256x12xbf16>, vector<12x4xbf16>, vector<256x4xf32> -> vector<256x4xf32>
    %43 = arith.addf %31, %42 : vector<256x4xf32>
    %44 = arith.truncf %27 : vector<256x12xf32> to vector<256x12xbf16>
    %c1 = arith.constant 1 : index
    %c0_16 = arith.constant 0 : index
    %c0_17 = arith.constant 0 : index
    %45 = vector.load %arg2[%c1, %c0_16, %c0_17] : memref<3x12x4xbf16, #tpu.memory_space<vmem>>, vector<1x12x4xbf16>
    %46 = vector.shape_cast %45 : vector<1x12x4xbf16> to vector<12x4xbf16>
    %cst_18 = arith.constant dense<0.000000e+00> : vector<256x4xf32>
    %47 = tpu.matmul %44, %46, %cst_18 {dimension_numbers = #tpu.dot_dimension_numbers<[1], [0], [0], [1], [0, 0, 1, 1], [], []>} : vector<256x12xbf16>, vector<12x4xbf16>, vector<256x4xf32> -> vector<256x4xf32>
    %48 = arith.addf %43, %47 : vector<256x4xf32>
    %c240_i32 = arith.constant 240 : i32
    %49 = tpu.dynamic_rotate %27 by %c240_i32 dim 0 : vector<256x12xf32>, i32 -> vector<256x12xf32>
    %c240_i32_19 = arith.constant 240 : i32
    %50 = vector.broadcast %c240_i32_19 : i32 to vector<256x1xi32>
    %51 = arith.cmpi slt, %30, %50 : vector<256x1xi32>
    %cst_20 = arith.constant 0.000000e+00 : f32
    %52 = vector.broadcast %cst_20 : f32 to vector<256x12xf32>
    %53 = vector.shape_cast %51 : vector<256x1xi1> to vector<256x1xi1>
    %54 = vector.broadcast %53 : vector<256x1xi1> to vector<256x12xi1>
    %55 = arith.select %54, %49, %52 : vector<256x12xi1>, vector<256x12xf32>
    %56 = arith.truncf %55 : vector<256x12xf32> to vector<256x12xbf16>
    %c2 = arith.constant 2 : index
    %c0_21 = arith.constant 0 : index
    %c0_22 = arith.constant 0 : index
    %57 = vector.load %arg2[%c2, %c0_21, %c0_22] : memref<3x12x4xbf16, #tpu.memory_space<vmem>>, vector<1x12x4xbf16>
    %58 = vector.shape_cast %57 : vector<1x12x4xbf16> to vector<12x4xbf16>
    %cst_23 = arith.constant dense<0.000000e+00> : vector<256x4xf32>
    %59 = tpu.matmul %56, %58, %cst_23 {dimension_numbers = #tpu.dot_dimension_numbers<[1], [0], [0], [1], [0, 0, 1, 1], [], []>} : vector<256x12xbf16>, vector<12x4xbf16>, vector<256x4xf32> -> vector<256x4xf32>
    %60 = arith.addf %48, %59 : vector<256x4xf32>
    %61 = vector.shape_cast %60 : vector<256x4xf32> to vector<1x256x4xf32>
    %62 = arith.truncf %61 : vector<1x256x4xf32> to vector<1x256x4xbf16>
    %c0_24 = arith.constant 0 : index
    %c0_25 = arith.constant 0 : index
    %c0_26 = arith.constant 0 : index
    %63 = vector.load %arg5[%c0_24, %c0_25, %c0_26] : memref<1x256x4xbf16, #tpu.memory_space<vmem>>, vector<1x256x4xbf16>
    tpu.vector_store %arg5[%c0_24, %c0_25, %c0_26], %62 {strides = array<i32>} : memref<1x256x4xbf16, #tpu.memory_space<vmem>>, vector<1x256x4xbf16>,
    %cst_27 = arith.constant dense<0.000000e+00> : vector<4xf32>
    %64 = vector.multi_reduction <add>, %60, %cst_27 [0] : vector<256x4xf32> to vector<4xf32>
    %65 = vector.shape_cast %64 : vector<4xf32> to vector<1x1x4xf32>
    %c0_28 = arith.constant 0 : index
    %c0_29 = arith.constant 0 : index
    %c0_30 = arith.constant 0 : index
    %66 = vector.load %arg6[%c0_28, %c0_29, %c0_30] : memref<1x1x4xf32, #tpu.memory_space<vmem>>, vector<1x1x4xf32>
    tpu.vector_store %arg6[%c0_28, %c0_29, %c0_30], %65 {strides = array<i32>} : memref<1x1x4xf32, #tpu.memory_space<vmem>>, vector<1x1x4xf32>,
    %67 = arith.mulf %60, %60 : vector<256x4xf32>
    %cst_31 = arith.constant dense<0.000000e+00> : vector<4xf32>
    %68 = vector.multi_reduction <add>, %67, %cst_31 [0] : vector<256x4xf32> to vector<4xf32>
    %69 = vector.shape_cast %68 : vector<4xf32> to vector<1x1x4xf32>
    %c0_32 = arith.constant 0 : index
    %c0_33 = arith.constant 0 : index
    %c0_34 = arith.constant 0 : index
    %70 = vector.load %arg7[%c0_32, %c0_33, %c0_34] : memref<1x1x4xf32, #tpu.memory_space<vmem>>, vector<1x1x4xf32>
    tpu.vector_store %arg7[%c0_32, %c0_33, %c0_34], %69 {strides = array<i32>} : memref<1x1x4xf32, #tpu.memory_space<vmem>>, vector<1x1x4xf32>,
    return
  }
  func.func @transform_0(%arg0: i32) -> (i32, i32, i32) {
    %c0_i32 = arith.constant 0 : i32
    %c0_i32_0 = arith.constant 0 : i32
    %c0_i32_1 = arith.constant 0 : i32
    return %arg0, %c0_i32, %c0_i32_0 : i32, i32, i32
  }
  func.func @transform_1(%arg0: i32) -> (i32, i32, i32) {
    %c0_i32 = arith.constant 0 : i32
    %c0_i32_0 = arith.constant 0 : i32
    %c0_i32_1 = arith.constant 0 : i32
    %c0_i32_2 = arith.constant 0 : i32
    return %c0_i32, %c0_i32_0, %c0_i32_1 : i32, i32, i32
  }
  func.func @transform_2(%arg0: i32) -> (i32, i32) {
    %c0_i32 = arith.constant 0 : i32
    %c0_i32_0 = arith.constant 0 : i32
    %c0_i32_1 = arith.constant 0 : i32
    return %c0_i32, %c0_i32_0 : i32, i32
  }
  func.func @transform_3(%arg0: i32) -> (i32, i32) {
    %c0_i32 = arith.constant 0 : i32
    %c0_i32_0 = arith.constant 0 : i32
    %c0_i32_1 = arith.constant 0 : i32
    return %c0_i32, %c0_i32_0 : i32, i32
  }
  func.func @transform_4(%arg0: i32) -> (i32, i32, i32) {
    %c0_i32 = arith.constant 0 : i32
    %c0_i32_0 = arith.constant 0 : i32
    %c0_i32_1 = arith.constant 0 : i32
    return %arg0, %c0_i32, %c0_i32_0 : i32, i32, i32
  }
  func.func @transform_5(%arg0: i32) -> (i32, i32, i32) {
    %c0_i32 = arith.constant 0 : i32
    %c0_i32_0 = arith.constant 0 : i32
    %c0_i32_1 = arith.constant 0 : i32
    return %arg0, %c0_i32, %c0_i32_0 : i32, i32, i32
  }
  func.func @transform_6(%arg0: i32) -> (i32, i32, i32) {
    %c0_i32 = arith.constant 0 : i32
    %c0_i32_0 = arith.constant 0 : i32
    %c0_i32_1 = arith.constant 0 : i32
    return %arg0, %c0_i32, %c0_i32_0 : i32, i32, i32
  }
}

module attributes {stable_mosaic.version = 11 : i64} {
  func.func @_conv_stats_kernel(%arg0: i32, %arg1: memref<1x256x4xf32, #tpu.memory_space<vmem>>, %arg2: memref<3x12x4xbf16, #tpu.memory_space<vmem>>, %arg3: memref<1x256x4xbf16, #tpu.memory_space<vmem>>, %arg4: memref<1x1x4xf32, #tpu.memory_space<vmem>>, %arg5: memref<1x1x4xf32, #tpu.memory_space<vmem>>) attributes {dimension_semantics = [#tpu.dimension_semantics<parallel>], iteration_bounds = array<i64: 2>, scalar_prefetch = 0 : i64, scratch_operands = 0 : i64, tpu.core_type = #tpu.core_type<tc>, window_params = [{transform_indices = @transform_0, window_bounds = array<i64: 1, 256, 4>}, {pipeline_mode = #tpu.pipeline_mode<synchronous>, transform_indices = @transform_1, window_bounds = array<i64: 3, 12, 4>}, {transform_indices = @transform_2, window_bounds = array<i64: 1, 256, 4>}, {transform_indices = @transform_3, window_bounds = array<i64: 1, 1, 4>}, {transform_indices = @transform_4, window_bounds = array<i64: 1, 1, 4>}]} {
    %c0 = arith.constant 0 : index
    %c0_0 = arith.constant 0 : index
    %c0_1 = arith.constant 0 : index
    %0 = vector.load %arg1[%c0, %c0_0, %c0_1] : memref<1x256x4xf32, #tpu.memory_space<vmem>>, vector<1x256x4xf32>
    %1 = vector.shape_cast %0 : vector<1x256x4xf32> to vector<256x4xf32>
    %cst = arith.constant 0.000000e+00 : f32
    %2 = vector.broadcast %cst : f32 to vector<256x4xf32>
    %3 = tpu.iota {dimensions = array<i32: 0>} : vector<256x1xi32>
    %c15_i32 = arith.constant 15 : i32
    %4 = vector.broadcast %c15_i32 : i32 to vector<256x1xi32>
    %5 = arith.andi %3, %4 : vector<256x1xi32>
    %c15_i32_2 = arith.constant 15 : i32
    %6 = vector.broadcast %c15_i32_2 : i32 to vector<256x1xi32>
    %7 = arith.cmpi slt, %5, %6 : vector<256x1xi32>
    %8 = vector.shape_cast %7 : vector<256x1xi1> to vector<256x1xi1>
    %9 = vector.broadcast %8 : vector<256x1xi1> to vector<256x4xi1>
    %10 = arith.select %9, %1, %2 : vector<256x4xi1>, vector<256x4xf32>
    %c1_i32 = arith.constant 1 : i32
    %11 = tpu.dynamic_rotate %10 by %c1_i32 dim 0 : vector<256x4xf32>, i32 -> vector<256x4xf32>
    %c0_i32 = arith.constant 0 : i32
    %12 = vector.broadcast %c0_i32 : i32 to vector<256x1xi32>
    %13 = arith.cmpi sgt, %5, %12 : vector<256x1xi32>
    %14 = vector.shape_cast %13 : vector<256x1xi1> to vector<256x1xi1>
    %15 = vector.broadcast %14 : vector<256x1xi1> to vector<256x4xi1>
    %16 = arith.select %15, %1, %2 : vector<256x4xi1>, vector<256x4xf32>
    %c255_i32 = arith.constant 255 : i32
    %17 = tpu.dynamic_rotate %16 by %c255_i32 dim 0 : vector<256x4xf32>, i32 -> vector<256x4xf32>
    %18 = tpu.concatenate %11, %1, %17 in 1 : vector<256x4xf32>, vector<256x4xf32>, vector<256x4xf32> -> vector<256x12xf32>
    %19 = tpu.iota {dimensions = array<i32: 0>} : vector<256x1xi32>
    %c255_i32_3 = arith.constant 255 : i32
    %20 = vector.broadcast %c255_i32_3 : i32 to vector<256x1xi32>
    %21 = arith.andi %19, %20 : vector<256x1xi32>
    %cst_4 = arith.constant 0.000000e+00 : f32
    %22 = vector.broadcast %cst_4 : f32 to vector<256x4xf32>
    %c16_i32 = arith.constant 16 : i32
    %23 = tpu.dynamic_rotate %18 by %c16_i32 dim 0 : vector<256x12xf32>, i32 -> vector<256x12xf32>
    %c16_i32_5 = arith.constant 16 : i32
    %24 = vector.broadcast %c16_i32_5 : i32 to vector<256x1xi32>
    %25 = arith.cmpi sge, %21, %24 : vector<256x1xi32>
    %cst_6 = arith.constant 0.000000e+00 : f32
    %26 = vector.broadcast %cst_6 : f32 to vector<256x12xf32>
    %27 = vector.shape_cast %25 : vector<256x1xi1> to vector<256x1xi1>
    %28 = vector.broadcast %27 : vector<256x1xi1> to vector<256x12xi1>
    %29 = arith.select %28, %23, %26 : vector<256x12xi1>, vector<256x12xf32>
    %30 = arith.truncf %29 : vector<256x12xf32> to vector<256x12xbf16>
    %c0_7 = arith.constant 0 : index
    %c0_8 = arith.constant 0 : index
    %c0_9 = arith.constant 0 : index
    %31 = vector.load %arg2[%c0_7, %c0_8, %c0_9] : memref<3x12x4xbf16, #tpu.memory_space<vmem>>, vector<1x12x4xbf16>
    %32 = vector.shape_cast %31 : vector<1x12x4xbf16> to vector<12x4xbf16>
    %cst_10 = arith.constant dense<0.000000e+00> : vector<256x4xf32>
    %33 = tpu.matmul %30, %32, %cst_10 {dimension_numbers = #tpu.dot_dimension_numbers<[1], [0], [0], [1], [0, 0, 1, 1], [], []>} : vector<256x12xbf16>, vector<12x4xbf16>, vector<256x4xf32> -> vector<256x4xf32>
    %34 = arith.addf %22, %33 : vector<256x4xf32>
    %35 = arith.truncf %18 : vector<256x12xf32> to vector<256x12xbf16>
    %c1 = arith.constant 1 : index
    %c0_11 = arith.constant 0 : index
    %c0_12 = arith.constant 0 : index
    %36 = vector.load %arg2[%c1, %c0_11, %c0_12] : memref<3x12x4xbf16, #tpu.memory_space<vmem>>, vector<1x12x4xbf16>
    %37 = vector.shape_cast %36 : vector<1x12x4xbf16> to vector<12x4xbf16>
    %cst_13 = arith.constant dense<0.000000e+00> : vector<256x4xf32>
    %38 = tpu.matmul %35, %37, %cst_13 {dimension_numbers = #tpu.dot_dimension_numbers<[1], [0], [0], [1], [0, 0, 1, 1], [], []>} : vector<256x12xbf16>, vector<12x4xbf16>, vector<256x4xf32> -> vector<256x4xf32>
    %39 = arith.addf %34, %38 : vector<256x4xf32>
    %c240_i32 = arith.constant 240 : i32
    %40 = tpu.dynamic_rotate %18 by %c240_i32 dim 0 : vector<256x12xf32>, i32 -> vector<256x12xf32>
    %c240_i32_14 = arith.constant 240 : i32
    %41 = vector.broadcast %c240_i32_14 : i32 to vector<256x1xi32>
    %42 = arith.cmpi slt, %21, %41 : vector<256x1xi32>
    %cst_15 = arith.constant 0.000000e+00 : f32
    %43 = vector.broadcast %cst_15 : f32 to vector<256x12xf32>
    %44 = vector.shape_cast %42 : vector<256x1xi1> to vector<256x1xi1>
    %45 = vector.broadcast %44 : vector<256x1xi1> to vector<256x12xi1>
    %46 = arith.select %45, %40, %43 : vector<256x12xi1>, vector<256x12xf32>
    %47 = arith.truncf %46 : vector<256x12xf32> to vector<256x12xbf16>
    %c2 = arith.constant 2 : index
    %c0_16 = arith.constant 0 : index
    %c0_17 = arith.constant 0 : index
    %48 = vector.load %arg2[%c2, %c0_16, %c0_17] : memref<3x12x4xbf16, #tpu.memory_space<vmem>>, vector<1x12x4xbf16>
    %49 = vector.shape_cast %48 : vector<1x12x4xbf16> to vector<12x4xbf16>
    %cst_18 = arith.constant dense<0.000000e+00> : vector<256x4xf32>
    %50 = tpu.matmul %47, %49, %cst_18 {dimension_numbers = #tpu.dot_dimension_numbers<[1], [0], [0], [1], [0, 0, 1, 1], [], []>} : vector<256x12xbf16>, vector<12x4xbf16>, vector<256x4xf32> -> vector<256x4xf32>
    %51 = arith.addf %39, %50 : vector<256x4xf32>
    %52 = vector.shape_cast %51 : vector<256x4xf32> to vector<1x256x4xf32>
    %53 = arith.truncf %52 : vector<1x256x4xf32> to vector<1x256x4xbf16>
    %c0_19 = arith.constant 0 : index
    %c0_20 = arith.constant 0 : index
    %c0_21 = arith.constant 0 : index
    %54 = vector.load %arg3[%c0_19, %c0_20, %c0_21] : memref<1x256x4xbf16, #tpu.memory_space<vmem>>, vector<1x256x4xbf16>
    tpu.vector_store %arg3[%c0_19, %c0_20, %c0_21], %53 {strides = array<i32>} : memref<1x256x4xbf16, #tpu.memory_space<vmem>>, vector<1x256x4xbf16>,
    %cst_22 = arith.constant dense<0.000000e+00> : vector<4xf32>
    %55 = vector.multi_reduction <add>, %51, %cst_22 [0] : vector<256x4xf32> to vector<4xf32>
    %56 = vector.shape_cast %55 : vector<4xf32> to vector<1x1x4xf32>
    %c0_23 = arith.constant 0 : index
    %c0_24 = arith.constant 0 : index
    %c0_25 = arith.constant 0 : index
    %57 = vector.load %arg4[%c0_23, %c0_24, %c0_25] : memref<1x1x4xf32, #tpu.memory_space<vmem>>, vector<1x1x4xf32>
    tpu.vector_store %arg4[%c0_23, %c0_24, %c0_25], %56 {strides = array<i32>} : memref<1x1x4xf32, #tpu.memory_space<vmem>>, vector<1x1x4xf32>,
    %58 = arith.mulf %51, %51 : vector<256x4xf32>
    %cst_26 = arith.constant dense<0.000000e+00> : vector<4xf32>
    %59 = vector.multi_reduction <add>, %58, %cst_26 [0] : vector<256x4xf32> to vector<4xf32>
    %60 = vector.shape_cast %59 : vector<4xf32> to vector<1x1x4xf32>
    %c0_27 = arith.constant 0 : index
    %c0_28 = arith.constant 0 : index
    %c0_29 = arith.constant 0 : index
    %61 = vector.load %arg5[%c0_27, %c0_28, %c0_29] : memref<1x1x4xf32, #tpu.memory_space<vmem>>, vector<1x1x4xf32>
    tpu.vector_store %arg5[%c0_27, %c0_28, %c0_29], %60 {strides = array<i32>} : memref<1x1x4xf32, #tpu.memory_space<vmem>>, vector<1x1x4xf32>,
    return
  }
  func.func @transform_0(%arg0: i32) -> (i32, i32, i32) {
    %c0_i32 = arith.constant 0 : i32
    %c0_i32_0 = arith.constant 0 : i32
    %c0_i32_1 = arith.constant 0 : i32
    return %arg0, %c0_i32, %c0_i32_0 : i32, i32, i32
  }
  func.func @transform_1(%arg0: i32) -> (i32, i32, i32) {
    %c0_i32 = arith.constant 0 : i32
    %c0_i32_0 = arith.constant 0 : i32
    %c0_i32_1 = arith.constant 0 : i32
    %c0_i32_2 = arith.constant 0 : i32
    return %c0_i32, %c0_i32_0, %c0_i32_1 : i32, i32, i32
  }
  func.func @transform_2(%arg0: i32) -> (i32, i32, i32) {
    %c0_i32 = arith.constant 0 : i32
    %c0_i32_0 = arith.constant 0 : i32
    %c0_i32_1 = arith.constant 0 : i32
    return %arg0, %c0_i32, %c0_i32_0 : i32, i32, i32
  }
  func.func @transform_3(%arg0: i32) -> (i32, i32, i32) {
    %c0_i32 = arith.constant 0 : i32
    %c0_i32_0 = arith.constant 0 : i32
    %c0_i32_1 = arith.constant 0 : i32
    return %arg0, %c0_i32, %c0_i32_0 : i32, i32, i32
  }
  func.func @transform_4(%arg0: i32) -> (i32, i32, i32) {
    %c0_i32 = arith.constant 0 : i32
    %c0_i32_0 = arith.constant 0 : i32
    %c0_i32_1 = arith.constant 0 : i32
    return %arg0, %c0_i32, %c0_i32_0 : i32, i32, i32
  }
}

module attributes {stable_mosaic.version = 11 : i64} {
  func.func @_bn_add_relu_kernel(%arg0: i32, %arg1: memref<256x4xbf16, #tpu.memory_space<vmem>>, %arg2: memref<256x4xf32, #tpu.memory_space<vmem>>, %arg3: memref<1x4xf32, #tpu.memory_space<vmem>>, %arg4: memref<1x4xf32, #tpu.memory_space<vmem>>, %arg5: memref<256x4xf32, #tpu.memory_space<vmem>>) attributes {dimension_semantics = [#tpu.dimension_semantics<parallel>], iteration_bounds = array<i64: 2>, scalar_prefetch = 0 : i64, scratch_operands = 0 : i64, tpu.core_type = #tpu.core_type<tc>, window_params = [{transform_indices = @transform_0, window_bounds = array<i64: 256, 4>}, {transform_indices = @transform_1, window_bounds = array<i64: 256, 4>}, {pipeline_mode = #tpu.pipeline_mode<synchronous>, transform_indices = @transform_2, window_bounds = array<i64: 1, 4>}, {pipeline_mode = #tpu.pipeline_mode<synchronous>, transform_indices = @transform_3, window_bounds = array<i64: 1, 4>}, {transform_indices = @transform_4, window_bounds = array<i64: 256, 4>}]} {
    %c0 = arith.constant 0 : index
    %c0_0 = arith.constant 0 : index
    %0 = vector.load %arg1[%c0, %c0_0] : memref<256x4xbf16, #tpu.memory_space<vmem>>, vector<256x4xbf16>
    %1 = arith.extf %0 : vector<256x4xbf16> to vector<256x4xf32>
    %c0_1 = arith.constant 0 : index
    %c0_2 = arith.constant 0 : index
    %2 = vector.load %arg3[%c0_1, %c0_2] : memref<1x4xf32, #tpu.memory_space<vmem>>, vector<1x4xf32>
    %3 = vector.broadcast %2 : vector<1x4xf32> to vector<256x4xf32>
    %4 = arith.mulf %1, %3 : vector<256x4xf32>
    %c0_3 = arith.constant 0 : index
    %c0_4 = arith.constant 0 : index
    %5 = vector.load %arg4[%c0_3, %c0_4] : memref<1x4xf32, #tpu.memory_space<vmem>>, vector<1x4xf32>
    %6 = vector.broadcast %5 : vector<1x4xf32> to vector<256x4xf32>
    %7 = arith.addf %4, %6 : vector<256x4xf32>
    %c0_5 = arith.constant 0 : index
    %c0_6 = arith.constant 0 : index
    %8 = vector.load %arg2[%c0_5, %c0_6] : memref<256x4xf32, #tpu.memory_space<vmem>>, vector<256x4xf32>
    %9 = arith.addf %7, %8 : vector<256x4xf32>
    %cst = arith.constant 0.000000e+00 : f32
    %10 = vector.broadcast %cst : f32 to vector<256x4xf32>
    %11 = arith.maximumf %9, %10 : vector<256x4xf32>
    %c0_7 = arith.constant 0 : index
    %c0_8 = arith.constant 0 : index
    %12 = vector.load %arg5[%c0_7, %c0_8] : memref<256x4xf32, #tpu.memory_space<vmem>>, vector<256x4xf32>
    tpu.vector_store %arg5[%c0_7, %c0_8], %11 {strides = array<i32>} : memref<256x4xf32, #tpu.memory_space<vmem>>, vector<256x4xf32>,
    return
  }
  func.func @transform_0(%arg0: i32) -> (i32, i32) {
    %c0_i32 = arith.constant 0 : i32
    %c0_i32_0 = arith.constant 0 : i32
    return %arg0, %c0_i32 : i32, i32
  }
  func.func @transform_1(%arg0: i32) -> (i32, i32) {
    %c0_i32 = arith.constant 0 : i32
    %c0_i32_0 = arith.constant 0 : i32
    return %arg0, %c0_i32 : i32, i32
  }
  func.func @transform_2(%arg0: i32) -> (i32, i32) {
    %c0_i32 = arith.constant 0 : i32
    %c0_i32_0 = arith.constant 0 : i32
    %c0_i32_1 = arith.constant 0 : i32
    return %c0_i32, %c0_i32_0 : i32, i32
  }
  func.func @transform_3(%arg0: i32) -> (i32, i32) {
    %c0_i32 = arith.constant 0 : i32
    %c0_i32_0 = arith.constant 0 : i32
    %c0_i32_1 = arith.constant 0 : i32
    return %c0_i32, %c0_i32_0 : i32, i32
  }
  func.func @transform_4(%arg0: i32) -> (i32, i32) {
    %c0_i32 = arith.constant 0 : i32
    %c0_i32_0 = arith.constant 0 : i32
    return %arg0, %c0_i32 : i32, i32
  }
}

</mosaic_0001>

<llo_original>
// kernel: residual_block.5
$region0: #{residual_block.5}
  #allocation0 [shape = 'u32[]', space=smem, size = 0x4, offset = 0x4, fixed_abs, tag = 'smem constant byte address 0x4 - core index']
  #allocation1 [shape = 'u32[144,128]{1,0:T(1,128)}', space=vmem, size = 0x12000, scoped, tag = 'internal scratch']
  %s0 = inlined_call_operand.vmem [shape: bf16[512,4], index: 0, kind: input, shape index: {}]
  %s1 = inlined_call_operand.vmem [shape: f32[512,4], index: 1, kind: input, shape index: {}, may-alias: {1,4}]
  %s2 = inlined_call_operand.vmem [shape: f32[1,4], index: 2, kind: input, shape index: {}]
  %s3 = inlined_call_operand.vmem [shape: f32[1,4], index: 3, kind: input, shape index: {}]
  %s4 = inlined_call_operand.vmem [shape: f32[512,4], index: 4, kind: output, shape index: {}, may-alias: {1,4}]
  %s5 = sld [smem:[#allocation0]]
  $region49: #{residual_block.5} parent=0
    _
  %s7 = ssub.s32 1, %s5
  %s8 = scalar_select 0, %s7, %s5
  loop: start=0, step=1, limit=4
  $region2: #{residual_block.5} parent=0 // loop_pre_header
    _
  $region3: #{residual_block.5} parent=0 // loop_header
    %s10 = sphi 0, %s14
    %p11 = scmp.ge.s32.totalorder %s10, 4
    %s20 = sphi 0, %s22
    %s23 = sphi 0, %s20
    %s24 = sphi 0, %s23
    %s40 = sphi 0, %s24
    %s46 = sphi 0, %s48
    %s49 = sphi 0, %s46
    %s50 = sphi 0, %s49
    %s66 = sphi 0, %s50
    %s70 = sphi 0, %s70
    %s72 = sphi 0, %s70
    %s73 = sphi 0, %s72
    %s87 = sphi 0, %s73
    %s91 = sphi 0, %s91
    %s93 = sphi 0, %s91
    %s94 = sphi 0, %s93
    %s108 = sphi 0, %s94
    %s114 = sphi 0, %s116
    %s117 = sphi 0, %s114
    %s118 = sphi 0, %s117
    %s134 = sphi 0, %s118
  $region4: #{residual_block.5} parent=0 // loop_header_branch
    %13 = sbr.rel (%p11) target = $region8
  $region5: #{residual_block.5} parent=0 // loop_body
    %s15 = ssub.s32 %s10, 1
    %s16 = ssub.s32 %s10, 2
    %s17 = sadd.s32 %s10, 1
    %s18 = ssub.s32 %s10, %s17
    %p19 = scmp.eq.s32.totalorder %s18, 0
    %s21 = sadd.s32 %s20, 1
    %s22 = scalar_select %p19, %s20, %s21
    %p25 = pneg %p19
    %p26 = scmp.eq.s32.totalorder %s10, 1
    %p27 = por %p25, %p26
    %p28 = scmp.ne.s32.totalorder %s20, %s23
    %p29 = scmp.eq.s32.totalorder %s10, 0
    %p30 = por %p28, %p29
    %p31 = scmp.ne.s32.totalorder %s20, %s23
    %p32 = scmp.eq.s32.totalorder %s15, 1
    %p33 = por %p31, %p32
    %p34 = scmp.ne.s32.totalorder %s23, %s24
    %p35 = scmp.eq.s32.totalorder %s15, 0
    %p36 = por %p34, %p35
    %p37 = scmp.ne.s32.totalorder %s23, %s24
    %p38 = scmp.eq.s32.totalorder %s16, 1
    %p39 = por %p37, %p38
    %p41 = scmp.ne.s32.totalorder %s24, %s40
    %p42 = scmp.eq.s32.totalorder %s16, 0
    %p43 = por %p41, %p42
    %s44 = ssub.s32 %s10, %s17
    %p45 = scmp.eq.s32.totalorder %s44, 0
    %s47 = sadd.s32 %s46, 1
    %s48 = scalar_select %p45, %s46, %s47
    %p51 = pneg %p45
    %p52 = scmp.eq.s32.totalorder %s10, 1
    %p53 = por %p51, %p52
    %p54 = scmp.ne.s32.totalorder %s46, %s49
    %p55 = scmp.eq.s32.totalorder %s10, 0
    %p56 = por %p54, %p55
    %p57 = scmp.ne.s32.totalorder %s46, %s49
    %p58 = scmp.eq.s32.totalorder %s15, 1
    %p59 = por %p57, %p58
    %p60 = scmp.ne.s32.totalorder %s49, %s50
    %p61 = scmp.eq.s32.totalorder %s15, 0
    %p62 = por %p60, %p61
    %p63 = scmp.ne.s32.totalorder %s49, %s50
    %p64 = scmp.eq.s32.totalorder %s16, 1
    %p65 = por %p63, %p64
    %p67 = scmp.ne.s32.totalorder %s50, %s66
    %p68 = scmp.eq.s32.totalorder %s16, 0
    %p69 = por %p67, %p68
    %s71 = sadd.s32 %s70, 1
    %p74 = scmp.eq.s32.totalorder %s10, 1
    %p75 = scmp.ne.s32.totalorder %s70, %s72
    %p76 = scmp.eq.s32.totalorder %s10, 0
    %p77 = por %p75, %p76
    %p78 = scmp.ne.s32.totalorder %s70, %s72
    %p79 = scmp.eq.s32.totalorder %s15, 1
    %p80 = por %p78, %p79
    %p81 = scmp.ne.s32.totalorder %s72, %s73
    %p82 = scmp.eq.s32.totalorder %s15, 0
    %p83 = por %p81, %p82
    %p84 = scmp.ne.s32.totalorder %s72, %s73
    %p85 = scmp.eq.s32.totalorder %s16, 1
    %p86 = por %p84, %p85
    %p88 = scmp.ne.s32.totalorder %s73, %s87
    %p89 = scmp.eq.s32.totalorder %s16, 0
    %p90 = por %p88, %p89
    %s92 = sadd.s32 %s91, 1
    %p95 = scmp.eq.s32.totalorder %s10, 1
    %p96 = scmp.ne.s32.totalorder %s91, %s93
    %p97 = scmp.eq.s32.totalorder %s10, 0
    %p98 = por %p96, %p97
    %p99 = scmp.ne.s32.totalorder %s91, %s93
    %p100 = scmp.eq.s32.totalorder %s15, 1
    %p101 = por %p99, %p100
    %p102 = scmp.ne.s32.totalorder %s93, %s94
    %p103 = scmp.eq.s32.totalorder %s15, 0
    %p104 = por %p102, %p103
    %p105 = scmp.ne.s32.totalorder %s93, %s94
    %p106 = scmp.eq.s32.totalorder %s16, 1
    %p107 = por %p105, %p106
    %p109 = scmp.ne.s32.totalorder %s94, %s108
    %p110 = scmp.eq.s32.totalorder %s16, 0
    %p111 = por %p109, %p110
    %s112 = ssub.s32 %s10, %s17
    %p113 = scmp.eq.s32.totalorder %s112, 0
    %s115 = sadd.s32 %s114, 1
    %s116 = scalar_select %p113, %s114, %s115
    %p119 = pneg %p113
    %p120 = scmp.eq.s32.totalorder %s10, 1
    %p121 = por %p119, %p120
    %p122 = scmp.ne.s32.totalorder %s114, %s117
    %p123 = scmp.eq.s32.totalorder %s10, 0
    %p124 = por %p122, %p123
    %p125 = scmp.ne.s32.totalorder %s114, %s117
    %p126 = scmp.eq.s32.totalorder %s15, 1
    %p127 = por %p125, %p126
    %p128 = scmp.ne.s32.totalorder %s117, %s118
    %p129 = scmp.eq.s32.totalorder %s15, 0
    %p130 = por %p128, %p129
    %p131 = scmp.ne.s32.totalorder %s117, %s118
    %p132 = scmp.eq.s32.totalorder %s16, 1
    %p133 = por %p131, %p132
    %p135 = scmp.ne.s32.totalorder %s118, %s134
    %p136 = scmp.eq.s32.totalorder %s16, 0
    %p137 = por %p135, %p136
    %p138 = scmp.le.s32.totalorder 1, %s10
    %p139 = scmp.lt.s32.totalorder %s10, 3
    %p140 = pnand %p138, %p139
    %p141 = pneg %p140
    // Predicated region
    $region9: #{residual_block.5} parent=5 // pred_check
      _
    $region10: #{residual_block.5} parent=5 // pred_check_branch
      %143 = sbr.rel (%p140) target = $region12
    $region11: #{residual_block.5} parent=5 // pred_region
      %s144 = ssub.s32 %s10, 1
      // Predicated region
      $region13: #{residual_block.5} parent=11 // pred_check
        %p145 = pneg %p83
      $region14: #{residual_block.5} parent=11 // pred_check_branch
        %147 = sbr.rel (%p145) target = $region16
      $region15: #{residual_block.5} parent=11 // pred_region
        _
      $region16: #{residual_block.5} parent=11 // pred_fallthru
        _
      // Predicated region
      $region17: #{residual_block.5} parent=11 // pred_check
        %p148 = pneg %p104
      $region18: #{residual_block.5} parent=11 // pred_check_branch
        %150 = sbr.rel (%p148) target = $region20
      $region19: #{residual_block.5} parent=11 // pred_region
        _
      $region20: #{residual_block.5} parent=11 // pred_fallthru
        _
    $region12: #{residual_block.5} parent=5 // pred_fallthru
      _
    %p151 = scmp.lt.s32.totalorder %s10, 2
    // Predicated region
    $region21: #{residual_block.5} parent=5 // pred_check
      %p152 = pneg %p151
    $region22: #{residual_block.5} parent=5 // pred_check_branch
      %154 = sbr.rel (%p152) target = $region24
    $region23: #{residual_block.5} parent=5 // pred_region
      // Predicated region
      $region25: #{residual_block.5} parent=23 // pred_check
        %p155 = pneg %p30
      $region26: #{residual_block.5} parent=23 // pred_check_branch
        %157 = sbr.rel (%p155) target = $region28
      $region27: #{residual_block.5} parent=23 // pred_region
        %s158 = smul.u32 32, %s10
        %p159 = scmp.lt.s32.totalorder %s158, 63
        %s160 = scalar_select %p159, %s158, 63
        %s161 = smul.addr %s160, 4
        %s162 = scalar_lea.vmem %s0, %s161
        %s163 = smul.u32 32, %s10
      $region28: #{residual_block.5} parent=23 // pred_fallthru
        _
      // Predicated region
      $region29: #{residual_block.5} parent=23 // pred_check
        %p164 = pneg %p56
      $region30: #{residual_block.5} parent=23 // pred_check_branch
        %166 = sbr.rel (%p164) target = $region32
      $region31: #{residual_block.5} parent=23 // pred_region
        %s167 = smul.u32 32, %s10
        %p168 = scmp.lt.s32.totalorder %s167, 63
        %s169 = scalar_select %p168, %s167, 63
        %s170 = smul.addr %s169, 8
        %s171 = scalar_lea.vmem %s1, %s170
        %s172 = smul.u32 32, %s10
      $region32: #{residual_block.5} parent=23 // pred_fallthru
        _
    $region24: #{residual_block.5} parent=5 // pred_fallthru
      _
    %p173 = scmp.le.s32.totalorder 1, %s10
    %p174 = scmp.lt.s32.totalorder %s10, 3
    %p175 = pnand %p173, %p174
    %p176 = pneg %p175
    // Predicated region
    $region33: #{residual_block.5} parent=5 // pred_check
      _
    $region34: #{residual_block.5} parent=5 // pred_check_branch
      %178 = sbr.rel (%p175) target = $region36
    $region35: #{residual_block.5} parent=5 // pred_region
      %s179 = ssub.s32 %s10, 1
      %s180 = smul.u32 32, %s15
      %p181 = scmp.lt.s32.totalorder %s180, 63
      %s182 = scalar_select %p181, %s180, 63
      %s183 = smul.addr %s182, 4
      %s184 = scalar_lea.vmem %s0, %s183
      %p185 = pneg %p36
      %p186 = pneg %p33
      %s187 = smul.u32 32, %s15
      %p188 = scmp.lt.s32.totalorder %s187, 63
      %s189 = scalar_select %p188, %s187, 63
      %s190 = smul.addr %s189, 8
      %s191 = scalar_lea.vmem %s1, %s190
      %p192 = pneg %p62
      %p193 = pneg %p59
      %p194 = pneg %p83
      %p195 = pneg %p80
      %p196 = pneg %p104
      %p197 = pneg %p101
      %p198 = pneg %p130
      %p199 = pneg %p127
      %s200 = smul.u32 32, %s15
      %p201 = scmp.lt.s32.totalorder %s200, 63
      %s202 = scalar_select %p201, %s200, 63
      %s203 = smul.addr %s202, 8
      %s204 = scalar_lea.vmem %s4, %s203
      %s205 = smul.u32 32, %s15
      %p206 = scmp.lt.s32.totalorder %s205, 63
      %s207 = scalar_select %p206, %s205, 63
      %s208 = smul.addr %s207, 4
      %s209 = scalar_lea.vmem %s0, %s208
      %s210 = smul.u32 32, %s15
      %s211 = smul.u32 32, %s15
      %p212 = scmp.lt.s32.totalorder %s211, 63
      %s213 = scalar_select %p212, %s211, 63
      %s214 = smul.addr %s213, 8
      %s215 = scalar_lea.vmem %s1, %s214
      %s216 = smul.u32 32, %s15
      %s217 = smul.u32 32, %s15
      %p218 = scmp.lt.s32.totalorder %s217, 63
      %s219 = scalar_select %p218, %s217, 63
      %s220 = smul.addr %s219, 8
      %s221 = scalar_lea.vmem %s4, %s220
      %s222 = smul.u32 32, %s15
      %v223 = vld [vmem:[%s209] sm:$0xf]
      %v224 = vld [vmem:[%s209 + $0x4] sm:$0xf]
      %v225 = vld [vmem:[%s209 + $0x8] sm:$0xf]
      %v226 = vld [vmem:[%s209 + $0xc] sm:$0xf]
      %v227 = vld [vmem:[%s209 + $0x10] sm:$0xf]
      %v228 = vld [vmem:[%s209 + $0x14] sm:$0xf]
      %v229 = vld [vmem:[%s209 + $0x18] sm:$0xf]
      %v230 = vld [vmem:[%s209 + $0x1c] sm:$0xf]
      %v231 = vld [vmem:[%s209 + $0x20] sm:$0xf]
      %v232 = vld [vmem:[%s209 + $0x24] sm:$0xf]
      %v233 = vld [vmem:[%s209 + $0x28] sm:$0xf]
      %v234 = vld [vmem:[%s209 + $0x2c] sm:$0xf]
      %v235 = vld [vmem:[%s209 + $0x30] sm:$0xf]
      %v236 = vld [vmem:[%s209 + $0x34] sm:$0xf]
      %v237 = vld [vmem:[%s209 + $0x38] sm:$0xf]
      %v238 = vld [vmem:[%s209 + $0x3c] sm:$0xf]
      %v239 = vld [vmem:[%s209 + $0x40] sm:$0xf]
      %v240 = vld [vmem:[%s209 + $0x44] sm:$0xf]
      %v241 = vld [vmem:[%s209 + $0x48] sm:$0xf]
      %v242 = vld [vmem:[%s209 + $0x4c] sm:$0xf]
      %v243 = vld [vmem:[%s209 + $0x50] sm:$0xf]
      %v244 = vld [vmem:[%s209 + $0x54] sm:$0xf]
      %v245 = vld [vmem:[%s209 + $0x58] sm:$0xf]
      %v246 = vld [vmem:[%s209 + $0x5c] sm:$0xf]
      %v247 = vld [vmem:[%s209 + $0x60] sm:$0xf]
      %v248 = vld [vmem:[%s209 + $0x64] sm:$0xf]
      %v249 = vld [vmem:[%s209 + $0x68] sm:$0xf]
      %v250 = vld [vmem:[%s209 + $0x6c] sm:$0xf]
      %v251 = vld [vmem:[%s209 + $0x70] sm:$0xf]
      %v252 = vld [vmem:[%s209 + $0x74] sm:$0xf]
      %v253 = vld [vmem:[%s209 + $0x78] sm:$0xf]
      %v254 = vld [vmem:[%s209 + $0x7c] sm:$0xf]
      %v255 = vunpack.c.l.bf16 %v223
      %v256 = vunpack.c.l.bf16 %v224
      %v257 = vunpack.c.l.bf16 %v225
      %v258 = vunpack.c.l.bf16 %v226
      %v259 = vunpack.c.l.bf16 %v227
      %v260 = vunpack.c.l.bf16 %v228
      %v261 = vunpack.c.l.bf16 %v229
      %v262 = vunpack.c.l.bf16 %v230
      %v263 = vunpack.c.l.bf16 %v231
      %v264 = vunpack.c.l.bf16 %v232
      %v265 = vunpack.c.l.bf16 %v233
      %v266 = vunpack.c.l.bf16 %v234
      %v267 = vunpack.c.l.bf16 %v235
      %v268 = vunpack.c.l.bf16 %v236
      %v269 = vunpack.c.l.bf16 %v237
      %v270 = vunpack.c.l.bf16 %v238
      %v271 = vunpack.c.l.bf16 %v239
      %v272 = vunpack.c.l.bf16 %v240
      %v273 = vunpack.c.l.bf16 %v241
      %v274 = vunpack.c.l.bf16 %v242
      %v275 = vunpack.c.l.bf16 %v243
      %v276 = vunpack.c.l.bf16 %v244
      %v277 = vunpack.c.l.bf16 %v245
      %v278 = vunpack.c.l.bf16 %v246
      %v279 = vunpack.c.l.bf16 %v247
      %v280 = vunpack.c.l.bf16 %v248
      %v281 = vunpack.c.l.bf16 %v249
      %v282 = vunpack.c.l.bf16 %v250
      %v283 = vunpack.c.l.bf16 %v251
      %v284 = vunpack.c.l.bf16 %v252
      %v285 = vunpack.c.l.bf16 %v253
      %v286 = vunpack.c.l.bf16 %v254
      %v287 = vld [vmem:[%s2] sm:$0x1]
      %v289 = vlaneseq
      %v290 = vshrl.u32 %v289, 7
      %v291 = vsub.s32 0, %v290
      %v292 = vrot.slane %v287, %v291
      %v294 = vmul.f32 %v255, %v292
      %v295 = vmul.f32 %v256, %v292
      %v296 = vmul.f32 %v257, %v292
      %v297 = vmul.f32 %v258, %v292
      %v298 = vmul.f32 %v259, %v292
      %v299 = vmul.f32 %v260, %v292
      %v300 = vmul.f32 %v261, %v292
      %v301 = vmul.f32 %v262, %v292
      %v302 = vmul.f32 %v263, %v292
      %v303 = vmul.f32 %v264, %v292
      %v304 = vmul.f32 %v265, %v292
      %v305 = vmul.f32 %v266, %v292
      %v306 = vmul.f32 %v267, %v292
      %v307 = vmul.f32 %v268, %v292
      %v308 = vmul.f32 %v269, %v292
      %v309 = vmul.f32 %v270, %v292
      %v310 = vmul.f32 %v271, %v292
      %v311 = vmul.f32 %v272, %v292
      %v312 = vmul.f32 %v273, %v292
      %v313 = vmul.f32 %v274, %v292
      %v314 = vmul.f32 %v275, %v292
      %v315 = vmul.f32 %v276, %v292
      %v316 = vmul.f32 %v277, %v292
      %v317 = vmul.f32 %v278, %v292
      %v318 = vmul.f32 %v279, %v292
      %v319 = vmul.f32 %v280, %v292
      %v320 = vmul.f32 %v281, %v292
      %v321 = vmul.f32 %v282, %v292
      %v322 = vmul.f32 %v283, %v292
      %v323 = vmul.f32 %v284, %v292
      %v324 = vmul.f32 %v285, %v292
      %v325 = vmul.f32 %v286, %v292
      %v326 = vld [vmem:[%s3] sm:$0x1]
      %v328 = vlaneseq
      %v329 = vshrl.u32 %v328, 7
      %v330 = vsub.s32 0, %v329
      %v331 = vrot.slane %v326, %v330
      %v333 = vadd.f32 %v294, %v331
      %v334 = vadd.f32 %v295, %v331
      %v335 = vadd.f32 %v296, %v331
      %v336 = vadd.f32 %v297, %v331
      %v337 = vadd.f32 %v298, %v331
      %v338 = vadd.f32 %v299, %v331
      %v339 = vadd.f32 %v300, %v331
      %v340 = vadd.f32 %v301, %v331
      %v341 = vadd.f32 %v302, %v331
      %v342 = vadd.f32 %v303, %v331
      %v343 = vadd.f32 %v304, %v331
      %v344 = vadd.f32 %v305, %v331
      %v345 = vadd.f32 %v306, %v331
      %v346 = vadd.f32 %v307, %v331
      %v347 = vadd.f32 %v308, %v331
      %v348 = vadd.f32 %v309, %v331
      %v349 = vadd.f32 %v310, %v331
      %v350 = vadd.f32 %v311, %v331
      %v351 = vadd.f32 %v312, %v331
      %v352 = vadd.f32 %v313, %v331
      %v353 = vadd.f32 %v314, %v331
      %v354 = vadd.f32 %v315, %v331
      %v355 = vadd.f32 %v316, %v331
      %v356 = vadd.f32 %v317, %v331
      %v357 = vadd.f32 %v318, %v331
      %v358 = vadd.f32 %v319, %v331
      %v359 = vadd.f32 %v320, %v331
      %v360 = vadd.f32 %v321, %v331
      %v361 = vadd.f32 %v322, %v331
      %v362 = vadd.f32 %v323, %v331
      %v363 = vadd.f32 %v324, %v331
      %v364 = vadd.f32 %v325, %v331
      %v365 = vld [vmem:[%s215] sm:$0xff]
      %v366 = vld [vmem:[%s215 + $0x8] sm:$0xff]
      %v367 = vld [vmem:[%s215 + $0x10] sm:$0xff]
      %v368 = vld [vmem:[%s215 + $0x18] sm:$0xff]
      %v369 = vld [vmem:[%s215 + $0x20] sm:$0xff]
      %v370 = vld [vmem:[%s215 + $0x28] sm:$0xff]
      %v371 = vld [vmem:[%s215 + $0x30] sm:$0xff]
      %v372 = vld [vmem:[%s215 + $0x38] sm:$0xff]
      %v373 = vld [vmem:[%s215 + $0x40] sm:$0xff]
      %v374 = vld [vmem:[%s215 + $0x48] sm:$0xff]
      %v375 = vld [vmem:[%s215 + $0x50] sm:$0xff]
      %v376 = vld [vmem:[%s215 + $0x58] sm:$0xff]
      %v377 = vld [vmem:[%s215 + $0x60] sm:$0xff]
      %v378 = vld [vmem:[%s215 + $0x68] sm:$0xff]
      %v379 = vld [vmem:[%s215 + $0x70] sm:$0xff]
      %v380 = vld [vmem:[%s215 + $0x78] sm:$0xff]
      %v381 = vld [vmem:[%s215 + $0x80] sm:$0xff]
      %v382 = vld [vmem:[%s215 + $0x88] sm:$0xff]
      %v383 = vld [vmem:[%s215 + $0x90] sm:$0xff]
      %v384 = vld [vmem:[%s215 + $0x98] sm:$0xff]
      %v385 = vld [vmem:[%s215 + $0xa0] sm:$0xff]
      %v386 = vld [vmem:[%s215 + $0xa8] sm:$0xff]
      %v387 = vld [vmem:[%s215 + $0xb0] sm:$0xff]
      %v388 = vld [vmem:[%s215 + $0xb8] sm:$0xff]
      %v389 = vld [vmem:[%s215 + $0xc0] sm:$0xff]
      %v390 = vld [vmem:[%s215 + $0xc8] sm:$0xff]
      %v391 = vld [vmem:[%s215 + $0xd0] sm:$0xff]
      %v392 = vld [vmem:[%s215 + $0xd8] sm:$0xff]
      %v393 = vld [vmem:[%s215 + $0xe0] sm:$0xff]
      %v394 = vld [vmem:[%s215 + $0xe8] sm:$0xff]
      %v395 = vld [vmem:[%s215 + $0xf0] sm:$0xff]
      %v396 = vld [vmem:[%s215 + $0xf8] sm:$0xff]
      %v397 = vadd.f32 %v333, %v365
      %v398 = vadd.f32 %v334, %v366
      %v399 = vadd.f32 %v335, %v367
      %v400 = vadd.f32 %v336, %v368
      %v401 = vadd.f32 %v337, %v369
      %v402 = vadd.f32 %v338, %v370
      %v403 = vadd.f32 %v339, %v371
      %v404 = vadd.f32 %v340, %v372
      %v405 = vadd.f32 %v341, %v373
      %v406 = vadd.f32 %v342, %v374
      %v407 = vadd.f32 %v343, %v375
      %v408 = vadd.f32 %v344, %v376
      %v409 = vadd.f32 %v345, %v377
      %v410 = vadd.f32 %v346, %v378
      %v411 = vadd.f32 %v347, %v379
      %v412 = vadd.f32 %v348, %v380
      %v413 = vadd.f32 %v349, %v381
      %v414 = vadd.f32 %v350, %v382
      %v415 = vadd.f32 %v351, %v383
      %v416 = vadd.f32 %v352, %v384
      %v417 = vadd.f32 %v353, %v385
      %v418 = vadd.f32 %v354, %v386
      %v419 = vadd.f32 %v355, %v387
      %v420 = vadd.f32 %v356, %v388
      %v421 = vadd.f32 %v357, %v389
      %v422 = vadd.f32 %v358, %v390
      %v423 = vadd.f32 %v359, %v391
      %v424 = vadd.f32 %v360, %v392
      %v425 = vadd.f32 %v361, %v393
      %v426 = vadd.f32 %v362, %v394
      %v427 = vadd.f32 %v363, %v395
      %v428 = vadd.f32 %v364, %v396
      %v429 = vmax.f32 %v397, 0.0
      %v430 = vmax.f32 %v398, 0.0
      %v431 = vmax.f32 %v399, 0.0
      %v432 = vmax.f32 %v400, 0.0
      %v433 = vmax.f32 %v401, 0.0
      %v434 = vmax.f32 %v402, 0.0
      %v435 = vmax.f32 %v403, 0.0
      %v436 = vmax.f32 %v404, 0.0
      %v437 = vmax.f32 %v405, 0.0
      %v438 = vmax.f32 %v406, 0.0
      %v439 = vmax.f32 %v407, 0.0
      %v440 = vmax.f32 %v408, 0.0
      %v441 = vmax.f32 %v409, 0.0
      %v442 = vmax.f32 %v410, 0.0
      %v443 = vmax.f32 %v411, 0.0
      %v444 = vmax.f32 %v412, 0.0
      %v445 = vmax.f32 %v413, 0.0
      %v446 = vmax.f32 %v414, 0.0
      %v447 = vmax.f32 %v415, 0.0
      %v448 = vmax.f32 %v416, 0.0
      %v449 = vmax.f32 %v417, 0.0
      %v450 = vmax.f32 %v418, 0.0
      %v451 = vmax.f32 %v419, 0.0
      %v452 = vmax.f32 %v420, 0.0
      %v453 = vmax.f32 %v421, 0.0
      %v454 = vmax.f32 %v422, 0.0
      %v455 = vmax.f32 %v423, 0.0
      %v456 = vmax.f32 %v424, 0.0
      %v457 = vmax.f32 %v425, 0.0
      %v458 = vmax.f32 %v426, 0.0
      %v459 = vmax.f32 %v427, 0.0
      %v460 = vmax.f32 %v428, 0.0
      %vm461 = vcmask 31744
      %462 = vst.msk [vmem:[%s221] sm:$0xff] %vm461, %v429
      %463 = vst.msk [vmem:[%s221 + $0x8] sm:$0xff] %vm461, %v430
      %464 = vst.msk [vmem:[%s221 + $0x10] sm:$0xff] %vm461, %v431
      %465 = vst.msk [vmem:[%s221 + $0x18] sm:$0xff] %vm461, %v432
      %466 = vst.msk [vmem:[%s221 + $0x20] sm:$0xff] %vm461, %v433
      %467 = vst.msk [vmem:[%s221 + $0x28] sm:$0xff] %vm461, %v434
      %468 = vst.msk [vmem:[%s221 + $0x30] sm:$0xff] %vm461, %v435
      %469 = vst.msk [vmem:[%s221 + $0x38] sm:$0xff] %vm461, %v436
      %470 = vst.msk [vmem:[%s221 + $0x40] sm:$0xff] %vm461, %v437
      %471 = vst.msk [vmem:[%s221 + $0x48] sm:$0xff] %vm461, %v438
      %472 = vst.msk [vmem:[%s221 + $0x50] sm:$0xff] %vm461, %v439
      %473 = vst.msk [vmem:[%s221 + $0x58] sm:$0xff] %vm461, %v440
      %474 = vst.msk [vmem:[%s221 + $0x60] sm:$0xff] %vm461, %v441
      %475 = vst.msk [vmem:[%s221 + $0x68] sm:$0xff] %vm461, %v442
      %476 = vst.msk [vmem:[%s221 + $0x70] sm:$0xff] %vm461, %v443
      %477 = vst.msk [vmem:[%s221 + $0x78] sm:$0xff] %vm461, %v444
      %478 = vst.msk [vmem:[%s221 + $0x80] sm:$0xff] %vm461, %v445
      %479 = vst.msk [vmem:[%s221 + $0x88] sm:$0xff] %vm461, %v446
      %480 = vst.msk [vmem:[%s221 + $0x90] sm:$0xff] %vm461, %v447
      %481 = vst.msk [vmem:[%s221 + $0x98] sm:$0xff] %vm461, %v448
      %482 = vst.msk [vmem:[%s221 + $0xa0] sm:$0xff] %vm461, %v449
      %483 = vst.msk [vmem:[%s221 + $0xa8] sm:$0xff] %vm461, %v450
      %484 = vst.msk [vmem:[%s221 + $0xb0] sm:$0xff] %vm461, %v451
      %485 = vst.msk [vmem:[%s221 + $0xb8] sm:$0xff] %vm461, %v452
      %486 = vst.msk [vmem:[%s221 + $0xc0] sm:$0xff] %vm461, %v453
      %487 = vst.msk [vmem:[%s221 + $0xc8] sm:$0xff] %vm461, %v454
      %488 = vst.msk [vmem:[%s221 + $0xd0] sm:$0xff] %vm461, %v455
      %489 = vst.msk [vmem:[%s221 + $0xd8] sm:$0xff] %vm461, %v456
      %490 = vst.msk [vmem:[%s221 + $0xe0] sm:$0xff] %vm461, %v457
      %491 = vst.msk [vmem:[%s221 + $0xe8] sm:$0xff] %vm461, %v458
      %492 = vst.msk [vmem:[%s221 + $0xf0] sm:$0xff] %vm461, %v459
      %493 = vst.msk [vmem:[%s221 + $0xf8] sm:$0xff] %vm461, %v460
      %s494 = smul.u32 32, %s15
      %p495 = scmp.lt.s32.totalorder %s494, 63
      %s496 = scalar_select %p495, %s494, 63
      %s497 = smul.addr %s496, 8
      %s498 = scalar_lea.vmem %s4, %s497
      // Predicated region
      $region37: #{residual_block.5} parent=35 // pred_check
        %p499 = pneg %p127
      $region38: #{residual_block.5} parent=35 // pred_check_branch
        %501 = sbr.rel (%p499) target = $region40
      $region39: #{residual_block.5} parent=35 // pred_region
        %s502 = smul.u32 32, %s15
      $region40: #{residual_block.5} parent=35 // pred_fallthru
        _
    $region36: #{residual_block.5} parent=5 // pred_fallthru
      _
    %p503 = scmp.le.s32.totalorder 2, %s10
    // Predicated region
    $region41: #{residual_block.5} parent=5 // pred_check
      %p504 = pneg %p503
    $region42: #{residual_block.5} parent=5 // pred_check_branch
      %506 = sbr.rel (%p504) target = $region44
    $region43: #{residual_block.5} parent=5 // pred_region
      %s507 = ssub.s32 %s10, 2
      // Predicated region
      $region45: #{residual_block.5} parent=43 // pred_check
        %p508 = pneg %p133
      $region46: #{residual_block.5} parent=43 // pred_check_branch
        %510 = sbr.rel (%p508) target = $region48
      $region47: #{residual_block.5} parent=43 // pred_region
        %s511 = smul.u32 32, %s16
        %p512 = scmp.lt.s32.totalorder %s511, 63
        %s513 = scalar_select %p512, %s511, 63
        %s514 = smul.addr %s513, 8
        %s515 = scalar_lea.vmem %s4, %s514
      $region48: #{residual_block.5} parent=43 // pred_fallthru
        _
    $region44: #{residual_block.5} parent=5 // pred_fallthru
      _
  $region6: #{residual_block.5} parent=0 // loop_footer
    %s14 = sadd.s32 1, %s10
  $region7: #{residual_block.5} parent=0 // loop_footer_branch
    %9 = sbr.rel target = $region3
  $region8: #{residual_block.5} parent=0 // loop_exit
    _

// kernel: residual_block.4
$region0: #{residual_block.4}
  #allocation0 [shape = 'u32[]', space=smem, size = 0x4, offset = 0x4, fixed_abs, tag = 'smem constant byte address 0x4 - core index']
  #allocation1 [shape = 'u32[144,128]{1,0:T(1,128)}', space=vmem, size = 0x12000, scoped, tag = 'internal scratch']
  %s0 = inlined_call_operand.vmem [shape: bf16[2,256,4], index: 0, kind: input, shape index: {}]
  %s1 = inlined_call_operand.vmem [shape: bf16[3,12,4], index: 1, kind: input, shape index: {}]
  %s2 = inlined_call_operand.vmem [shape: f32[1,4], index: 2, kind: input, shape index: {}]
  %s3 = inlined_call_operand.vmem [shape: f32[1,4], index: 3, kind: input, shape index: {}]
  %s4 = inlined_call_operand.vmem [shape: bf16[2,256,4], index: 4, kind: output, shape index: {0}]
  %s5 = inlined_call_operand.vmem [shape: f32[2,1,4], index: 5, kind: output, shape index: {1}]
  %s6 = inlined_call_operand.vmem [shape: f32[2,1,4], index: 6, kind: output, shape index: {2}]
  %7 = xla_tuple %s4, %s5, %s6
  %s8 = sld [smem:[#allocation0]]
  $region65: #{residual_block.4} parent=0
    _
  %s10 = ssub.s32 1, %s8
  %s11 = scalar_select 0, %s10, %s8
  loop: start=0, step=1, limit=4
  $region2: #{residual_block.4} parent=0 // loop_pre_header
    _
  $region3: #{residual_block.4} parent=0 // loop_header
    %s13 = sphi 0, %s17
    %p14 = scmp.ge.s32.totalorder %s13, 4
    %s23 = sphi 0, %s25
    %s26 = sphi 0, %s23
    %s27 = sphi 0, %s26
    %s43 = sphi 0, %s27
    %s47 = sphi 0, %s47
    %s49 = sphi 0, %s47
    %s50 = sphi 0, %s49
    %s64 = sphi 0, %s50
    %s68 = sphi 0, %s68
    %s70 = sphi 0, %s68
    %s71 = sphi 0, %s70
    %s85 = sphi 0, %s71
    %s89 = sphi 0, %s89
    %s91 = sphi 0, %s89
    %s92 = sphi 0, %s91
    %s106 = sphi 0, %s92
    %s112 = sphi 0, %s114
    %s115 = sphi 0, %s112
    %s116 = sphi 0, %s115
    %s132 = sphi 0, %s116
    %s138 = sphi 0, %s140
    %s141 = sphi 0, %s138
    %s142 = sphi 0, %s141
    %s158 = sphi 0, %s142
    %s164 = sphi 0, %s166
    %s167 = sphi 0, %s164
    %s168 = sphi 0, %s167
    %s184 = sphi 0, %s168
  $region4: #{residual_block.4} parent=0 // loop_header_branch
    %16 = sbr.rel (%p14) target = $region8
  $region5: #{residual_block.4} parent=0 // loop_body
    %s18 = ssub.s32 %s13, 1
    %s19 = ssub.s32 %s13, 2
    %s20 = sadd.s32 %s13, 1
    %s21 = ssub.s32 %s13, %s20
    %p22 = scmp.eq.s32.totalorder %s21, 0
    %s24 = sadd.s32 %s23, 1
    %s25 = scalar_select %p22, %s23, %s24
    %p28 = pneg %p22
    %p29 = scmp.eq.s32.totalorder %s13, 1
    %p30 = por %p28, %p29
    %p31 = scmp.ne.s32.totalorder %s23, %s26
    %p32 = scmp.eq.s32.totalorder %s13, 0
    %p33 = por %p31, %p32
    %p34 = scmp.ne.s32.totalorder %s23, %s26
    %p35 = scmp.eq.s32.totalorder %s18, 1
    %p36 = por %p34, %p35
    %p37 = scmp.ne.s32.totalorder %s26, %s27
    %p38 = scmp.eq.s32.totalorder %s18, 0
    %p39 = por %p37, %p38
    %p40 = scmp.ne.s32.totalorder %s26, %s27
    %p41 = scmp.eq.s32.totalorder %s19, 1
    %p42 = por %p40, %p41
    %p44 = scmp.ne.s32.totalorder %s27, %s43
    %p45 = scmp.eq.s32.totalorder %s19, 0
    %p46 = por %p44, %p45
    %s48 = sadd.s32 %s47, 1
    %p51 = scmp.eq.s32.totalorder %s13, 1
    %p52 = scmp.ne.s32.totalorder %s47, %s49
    %p53 = scmp.eq.s32.totalorder %s13, 0
    %p54 = por %p52, %p53
    %p55 = scmp.ne.s32.totalorder %s47, %s49
    %p56 = scmp.eq.s32.totalorder %s18, 1
    %p57 = por %p55, %p56
    %p58 = scmp.ne.s32.totalorder %s49, %s50
    %p59 = scmp.eq.s32.totalorder %s18, 0
    %p60 = por %p58, %p59
    %p61 = scmp.ne.s32.totalorder %s49, %s50
    %p62 = scmp.eq.s32.totalorder %s19, 1
    %p63 = por %p61, %p62
    %p65 = scmp.ne.s32.totalorder %s50, %s64
    %p66 = scmp.eq.s32.totalorder %s19, 0
    %p67 = por %p65, %p66
    %s69 = sadd.s32 %s68, 1
    %p72 = scmp.eq.s32.totalorder %s13, 1
    %p73 = scmp.ne.s32.totalorder %s68, %s70
    %p74 = scmp.eq.s32.totalorder %s13, 0
    %p75 = por %p73, %p74
    %p76 = scmp.ne.s32.totalorder %s68, %s70
    %p77 = scmp.eq.s32.totalorder %s18, 1
    %p78 = por %p76, %p77
    %p79 = scmp.ne.s32.totalorder %s70, %s71
    %p80 = scmp.eq.s32.totalorder %s18, 0
    %p81 = por %p79, %p80
    %p82 = scmp.ne.s32.totalorder %s70, %s71
    %p83 = scmp.eq.s32.totalorder %s19, 1
    %p84 = por %p82, %p83
    %p86 = scmp.ne.s32.totalorder %s71, %s85
    %p87 = scmp.eq.s32.totalorder %s19, 0
    %p88 = por %p86, %p87
    %s90 = sadd.s32 %s89, 1
    %p93 = scmp.eq.s32.totalorder %s13, 1
    %p94 = scmp.ne.s32.totalorder %s89, %s91
    %p95 = scmp.eq.s32.totalorder %s13, 0
    %p96 = por %p94, %p95
    %p97 = scmp.ne.s32.totalorder %s89, %s91
    %p98 = scmp.eq.s32.totalorder %s18, 1
    %p99 = por %p97, %p98
    %p100 = scmp.ne.s32.totalorder %s91, %s92
    %p101 = scmp.eq.s32.totalorder %s18, 0
    %p102 = por %p100, %p101
    %p103 = scmp.ne.s32.totalorder %s91, %s92
    %p104 = scmp.eq.s32.totalorder %s19, 1
    %p105 = por %p103, %p104
    %p107 = scmp.ne.s32.totalorder %s92, %s106
    %p108 = scmp.eq.s32.totalorder %s19, 0
    %p109 = por %p107, %p108
    %s110 = ssub.s32 %s13, %s20
    %p111 = scmp.eq.s32.totalorder %s110, 0
    %s113 = sadd.s32 %s112, 1
    %s114 = scalar_select %p111, %s112, %s113
    %p117 = pneg %p111
    %p118 = scmp.eq.s32.totalorder %s13, 1
    %p119 = por %p117, %p118
    %p120 = scmp.ne.s32.totalorder %s112, %s115
    %p121 = scmp.eq.s32.totalorder %s13, 0
    %p122 = por %p120, %p121
    %p123 = scmp.ne.s32.totalorder %s112, %s115
    %p124 = scmp.eq.s32.totalorder %s18, 1
    %p125 = por %p123, %p124
    %p126 = scmp.ne.s32.totalorder %s115, %s116
    %p127 = scmp.eq.s32.totalorder %s18, 0
    %p128 = por %p126, %p127
    %p129 = scmp.ne.s32.totalorder %s115, %s116
    %p130 = scmp.eq.s32.totalorder %s19, 1
    %p131 = por %p129, %p130
    %p133 = scmp.ne.s32.totalorder %s116, %s132
    %p134 = scmp.eq.s32.totalorder %s19, 0
    %p135 = por %p133, %p134
    %s136 = ssub.s32 %s13, %s20
    %p137 = scmp.eq.s32.totalorder %s136, 0
    %s139 = sadd.s32 %s138, 1
    %s140 = scalar_select %p137, %s138, %s139
    %p143 = pneg %p137
    %p144 = scmp.eq.s32.totalorder %s13, 1
    %p145 = por %p143, %p144
    %p146 = scmp.ne.s32.totalorder %s138, %s141
    %p147 = scmp.eq.s32.totalorder %s13, 0
    %p148 = por %p146, %p147
    %p149 = scmp.ne.s32.totalorder %s138, %s141
    %p150 = scmp.eq.s32.totalorder %s18, 1
    %p151 = por %p149, %p150
    %p152 = scmp.ne.s32.totalorder %s141, %s142
    %p153 = scmp.eq.s32.totalorder %s18, 0
    %p154 = por %p152, %p153
    %p155 = scmp.ne.s32.totalorder %s141, %s142
    %p156 = scmp.eq.s32.totalorder %s19, 1
    %p157 = por %p155, %p156
    %p159 = scmp.ne.s32.totalorder %s142, %s158
    %p160 = scmp.eq.s32.totalorder %s19, 0
    %p161 = por %p159, %p160
    %s162 = ssub.s32 %s13, %s20
    %p163 = scmp.eq.s32.totalorder %s162, 0
    %s165 = sadd.s32 %s164, 1
    %s166 = scalar_select %p163, %s164, %s165
    %p169 = pneg %p163
    %p170 = scmp.eq.s32.totalorder %s13, 1
    %p171 = por %p169, %p170
    %p172 = scmp.ne.s32.totalorder %s164, %s167
    %p173 = scmp.eq.s32.totalorder %s13, 0
    %p174 = por %p172, %p173
    %p175 = scmp.ne.s32.totalorder %s164, %s167
    %p176 = scmp.eq.s32.totalorder %s18, 1
    %p177 = por %p175, %p176
    %p178 = scmp.ne.s32.totalorder %s167, %s168
    %p179 = scmp.eq.s32.totalorder %s18, 0
    %p180 = por %p178, %p179
    %p181 = scmp.ne.s32.totalorder %s167, %s168
    %p182 = scmp.eq.s32.totalorder %s19, 1
    %p183 = por %p181, %p182
    %p185 = scmp.ne.s32.totalorder %s168, %s184
    %p186 = scmp.eq.s32.totalorder %s19, 0
    %p187 = por %p185, %p186
    %p188 = scmp.le.s32.totalorder 1, %s13
    %p189 = scmp.lt.s32.totalorder %s13, 3
    %p190 = pnand %p188, %p189
    %p191 = pneg %p190
    // Predicated region
    $region9: #{residual_block.4} parent=5 // pred_check
      _
    $region10: #{residual_block.4} parent=5 // pred_check_branch
      %193 = sbr.rel (%p190) target = $region12
    $region11: #{residual_block.4} parent=5 // pred_region
      %s194 = ssub.s32 %s13, 1
      // Predicated region
      $region13: #{residual_block.4} parent=11 // pred_check
        %p195 = pneg %p60
      $region14: #{residual_block.4} parent=11 // pred_check_branch
        %197 = sbr.rel (%p195) target = $region16
      $region15: #{residual_block.4} parent=11 // pred_region
        _
      $region16: #{residual_block.4} parent=11 // pred_fallthru
        _
      // Predicated region
      $region17: #{residual_block.4} parent=11 // pred_check
        %p198 = pneg %p81
      $region18: #{residual_block.4} parent=11 // pred_check_branch
        %200 = sbr.rel (%p198) target = $region20
      $region19: #{residual_block.4} parent=11 // pred_region
        _
      $region20: #{residual_block.4} parent=11 // pred_fallthru
        _
      // Predicated region
      $region21: #{residual_block.4} parent=11 // pred_check
        %p201 = pneg %p102
      $region22: #{residual_block.4} parent=11 // pred_check_branch
        %203 = sbr.rel (%p201) target = $region24
      $region23: #{residual_block.4} parent=11 // pred_region
        _
      $region24: #{residual_block.4} parent=11 // pred_fallthru
        _
    $region12: #{residual_block.4} parent=5 // pred_fallthru
      _
    %p204 = scmp.lt.s32.totalorder %s13, 2
    // Predicated region
    $region25: #{residual_block.4} parent=5 // pred_check
      %p205 = pneg %p204
    $region26: #{residual_block.4} parent=5 // pred_check_branch
      %207 = sbr.rel (%p205) target = $region28
    $region27: #{residual_block.4} parent=5 // pred_region
      // Predicated region
      $region29: #{residual_block.4} parent=27 // pred_check
        %p208 = pneg %p33
      $region30: #{residual_block.4} parent=27 // pred_check_branch
        %210 = sbr.rel (%p208) target = $region32
      $region31: #{residual_block.4} parent=27 // pred_region
        %p211 = scmp.lt.s32.totalorder %s13, 1
        %s212 = scalar_select %p211, %s13, 1
        %s213 = smul.addr %s212, 32
        %s214 = smul.addr %s213, 4
        %s215 = scalar_lea.vmem %s0, %s214
      $region32: #{residual_block.4} parent=27 // pred_fallthru
        _
    $region28: #{residual_block.4} parent=5 // pred_fallthru
      _
    %p216 = scmp.le.s32.totalorder 1, %s13
    %p217 = scmp.lt.s32.totalorder %s13, 3
    %p218 = pnand %p216, %p217
    %p219 = pneg %p218
    // Predicated region
    $region33: #{residual_block.4} parent=5 // pred_check
      _
    $region34: #{residual_block.4} parent=5 // pred_check_branch
      %221 = sbr.rel (%p218) target = $region36
    $region35: #{residual_block.4} parent=5 // pred_region
      %s222 = ssub.s32 %s13, 1
      %p223 = scmp.lt.s32.totalorder %s18, 1
      %s224 = scalar_select %p223, %s18, 1
      %s225 = smul.addr %s224, 32
      %s226 = smul.addr %s225, 4
      %s227 = scalar_lea.vmem %s0, %s226
      %p228 = pneg %p39
      %p229 = pneg %p36
      %p230 = pneg %p60
      %p231 = pneg %p57
      %p232 = pneg %p81
      %p233 = pneg %p78
      %p234 = pneg %p102
      %p235 = pneg %p99
      %p236 = pneg %p128
      %p237 = pneg %p125
      %p238 = scmp.lt.s32.totalorder %s18, 1
      %s239 = scalar_select %p238, %s18, 1
      %s240 = smul.addr %s239, 32
      %s241 = smul.addr %s240, 4
      %s242 = scalar_lea.vmem %s4, %s241
      %p243 = pneg %p154
      %p244 = pneg %p151
      %p245 = scmp.lt.s32.totalorder %s18, 1
      %s246 = scalar_select %p245, %s18, 1
      %s247 = scalar_lea.vmem %s5, %s246
      %p248 = pneg %p180
      %p249 = pneg %p177
      %p250 = scmp.lt.s32.totalorder %s18, 1
      %s251 = scalar_select %p250, %s18, 1
      %s252 = scalar_lea.vmem %s6, %s251
      %p253 = scmp.lt.s32.totalorder %s18, 1
      %s254 = scalar_select %p253, %s18, 1
      %s255 = smul.addr %s254, 32
      %s256 = smul.addr %s255, 4
      %s257 = scalar_lea.vmem %s0, %s256
      %p258 = scmp.lt.s32.totalorder %s18, 1
      %s259 = scalar_select %p258, %s18, 1
      %s260 = smul.addr %s259, 32
      %s261 = smul.addr %s260, 4
      %s262 = scalar_lea.vmem %s4, %s261
      %p263 = scmp.lt.s32.totalorder %s18, 1
      %s264 = scalar_select %p263, %s18, 1
      %s265 = scalar_lea.vmem %s5, %s264
      %p266 = scmp.lt.s32.totalorder %s18, 1
      %s267 = scalar_select %p266, %s18, 1
      %s268 = scalar_lea.vmem %s6, %s267
      %v270 = vld [vmem:[%s257] sm:$0xf]
      %v271 = vld [vmem:[%s257 + $0x4] sm:$0xf]
      %v272 = vld [vmem:[%s257 + $0x8] sm:$0xf]
      %v273 = vld [vmem:[%s257 + $0xc] sm:$0xf]
      %v274 = vld [vmem:[%s257 + $0x10] sm:$0xf]
      %v275 = vld [vmem:[%s257 + $0x14] sm:$0xf]
      %v276 = vld [vmem:[%s257 + $0x18] sm:$0xf]
      %v277 = vld [vmem:[%s257 + $0x1c] sm:$0xf]
      %v278 = vld [vmem:[%s257 + $0x20] sm:$0xf]
      %v279 = vld [vmem:[%s257 + $0x24] sm:$0xf]
      %v280 = vld [vmem:[%s257 + $0x28] sm:$0xf]
      %v281 = vld [vmem:[%s257 + $0x2c] sm:$0xf]
      %v282 = vld [vmem:[%s257 + $0x30] sm:$0xf]
      %v283 = vld [vmem:[%s257 + $0x34] sm:$0xf]
      %v284 = vld [vmem:[%s257 + $0x38] sm:$0xf]
      %v285 = vld [vmem:[%s257 + $0x3c] sm:$0xf]
      %v286 = vld [vmem:[%s257 + $0x40] sm:$0xf]
      %v287 = vld [vmem:[%s257 + $0x44] sm:$0xf]
      %v288 = vld [vmem:[%s257 + $0x48] sm:$0xf]
      %v289 = vld [vmem:[%s257 + $0x4c] sm:$0xf]
      %v290 = vld [vmem:[%s257 + $0x50] sm:$0xf]
      %v291 = vld [vmem:[%s257 + $0x54] sm:$0xf]
      %v292 = vld [vmem:[%s257 + $0x58] sm:$0xf]
      %v293 = vld [vmem:[%s257 + $0x5c] sm:$0xf]
      %v294 = vld [vmem:[%s257 + $0x60] sm:$0xf]
      %v295 = vld [vmem:[%s257 + $0x64] sm:$0xf]
      %v296 = vld [vmem:[%s257 + $0x68] sm:$0xf]
      %v297 = vld [vmem:[%s257 + $0x6c] sm:$0xf]
      %v298 = vld [vmem:[%s257 + $0x70] sm:$0xf]
      %v299 = vld [vmem:[%s257 + $0x74] sm:$0xf]
      %v300 = vld [vmem:[%s257 + $0x78] sm:$0xf]
      %v301 = vld [vmem:[%s257 + $0x7c] sm:$0xf]
      %v302 = vunpack.c.l.bf16 %v270
      %v303 = vunpack.c.l.bf16 %v271
      %v304 = vunpack.c.l.bf16 %v272
      %v305 = vunpack.c.l.bf16 %v273
      %v306 = vunpack.c.l.bf16 %v274
      %v307 = vunpack.c.l.bf16 %v275
      %v308 = vunpack.c.l.bf16 %v276
      %v309 = vunpack.c.l.bf16 %v277
      %v310 = vunpack.c.l.bf16 %v278
      %v311 = vunpack.c.l.bf16 %v279
      %v312 = vunpack.c.l.bf16 %v280
      %v313 = vunpack.c.l.bf16 %v281
      %v314 = vunpack.c.l.bf16 %v282
      %v315 = vunpack.c.l.bf16 %v283
      %v316 = vunpack.c.l.bf16 %v284
      %v317 = vunpack.c.l.bf16 %v285
      %v318 = vunpack.c.l.bf16 %v286
      %v319 = vunpack.c.l.bf16 %v287
      %v320 = vunpack.c.l.bf16 %v288
      %v321 = vunpack.c.l.bf16 %v289
      %v322 = vunpack.c.l.bf16 %v290
      %v323 = vunpack.c.l.bf16 %v291
      %v324 = vunpack.c.l.bf16 %v292
      %v325 = vunpack.c.l.bf16 %v293
      %v326 = vunpack.c.l.bf16 %v294
      %v327 = vunpack.c.l.bf16 %v295
      %v328 = vunpack.c.l.bf16 %v296
      %v329 = vunpack.c.l.bf16 %v297
      %v330 = vunpack.c.l.bf16 %v298
      %v331 = vunpack.c.l.bf16 %v299
      %v332 = vunpack.c.l.bf16 %v300
      %v333 = vunpack.c.l.bf16 %v301
      %v334 = vld [vmem:[%s2] sm:$0x1]
      %v336 = vlaneseq
      %v337 = vshrl.u32 %v336, 7
      %v338 = vsub.s32 0, %v337
      %v339 = vrot.slane %v334, %v338
      %v341 = vmul.f32 %v302, %v339
      %v342 = vmul.f32 %v303, %v339
      %v343 = vmul.f32 %v304, %v339
      %v344 = vmul.f32 %v305, %v339
      %v345 = vmul.f32 %v306, %v339
      %v346 = vmul.f32 %v307, %v339
      %v347 = vmul.f32 %v308, %v339
      %v348 = vmul.f32 %v309, %v339
      %v349 = vmul.f32 %v310, %v339
      %v350 = vmul.f32 %v311, %v339
      %v351 = vmul.f32 %v312, %v339
      %v352 = vmul.f32 %v313, %v339
      %v353 = vmul.f32 %v314, %v339
      %v354 = vmul.f32 %v315, %v339
      %v355 = vmul.f32 %v316, %v339
      %v356 = vmul.f32 %v317, %v339
      %v357 = vmul.f32 %v318, %v339
      %v358 = vmul.f32 %v319, %v339
      %v359 = vmul.f32 %v320, %v339
      %v360 = vmul.f32 %v321, %v339
      %v361 = vmul.f32 %v322, %v339
      %v362 = vmul.f32 %v323, %v339
      %v363 = vmul.f32 %v324, %v339
      %v364 = vmul.f32 %v325, %v339
      %v365 = vmul.f32 %v326, %v339
      %v366 = vmul.f32 %v327, %v339
      %v367 = vmul.f32 %v328, %v339
      %v368 = vmul.f32 %v329, %v339
      %v369 = vmul.f32 %v330, %v339
      %v370 = vmul.f32 %v331, %v339
      %v371 = vmul.f32 %v332, %v339
      %v372 = vmul.f32 %v333, %v339
      %v373 = vld [vmem:[%s3] sm:$0x1]
      %v375 = vlaneseq
      %v376 = vshrl.u32 %v375, 7
      %v377 = vsub.s32 0, %v376
      %v378 = vrot.slane %v373, %v377
      %v380 = vadd.f32 %v341, %v378
      %v381 = vadd.f32 %v342, %v378
      %v382 = vadd.f32 %v343, %v378
      %v383 = vadd.f32 %v344, %v378
      %v384 = vadd.f32 %v345, %v378
      %v385 = vadd.f32 %v346, %v378
      %v386 = vadd.f32 %v347, %v378
      %v387 = vadd.f32 %v348, %v378
      %v388 = vadd.f32 %v349, %v378
      %v389 = vadd.f32 %v350, %v378
      %v390 = vadd.f32 %v351, %v378
      %v391 = vadd.f32 %v352, %v378
      %v392 = vadd.f32 %v353, %v378
      %v393 = vadd.f32 %v354, %v378
      %v394 = vadd.f32 %v355, %v378
      %v395 = vadd.f32 %v356, %v378
      %v396 = vadd.f32 %v357, %v378
      %v397 = vadd.f32 %v358, %v378
      %v398 = vadd.f32 %v359, %v378
      %v399 = vadd.f32 %v360, %v378
      %v400 = vadd.f32 %v361, %v378
      %v401 = vadd.f32 %v362, %v378
      %v402 = vadd.f32 %v363, %v378
      %v403 = vadd.f32 %v364, %v378
      %v404 = vadd.f32 %v365, %v378
      %v405 = vadd.f32 %v366, %v378
      %v406 = vadd.f32 %v367, %v378
      %v407 = vadd.f32 %v368, %v378
      %v408 = vadd.f32 %v369, %v378
      %v409 = vadd.f32 %v370, %v378
      %v410 = vadd.f32 %v371, %v378
      %v411 = vadd.f32 %v372, %v378
      %v412 = vmax.f32 %v380, 0.0
      %v413 = vmax.f32 %v381, 0.0
      %v414 = vmax.f32 %v382, 0.0
      %v415 = vmax.f32 %v383, 0.0
      %v416 = vmax.f32 %v384, 0.0
      %v417 = vmax.f32 %v385, 0.0
      %v418 = vmax.f32 %v386, 0.0
      %v419 = vmax.f32 %v387, 0.0
      %v420 = vmax.f32 %v388, 0.0
      %v421 = vmax.f32 %v389, 0.0
      %v422 = vmax.f32 %v390, 0.0
      %v423 = vmax.f32 %v391, 0.0
      %v424 = vmax.f32 %v392, 0.0
      %v425 = vmax.f32 %v393, 0.0
      %v426 = vmax.f32 %v394, 0.0
      %v427 = vmax.f32 %v395, 0.0
      %v428 = vmax.f32 %v396, 0.0
      %v429 = vmax.f32 %v397, 0.0
      %v430 = vmax.f32 %v398, 0.0
      %v431 = vmax.f32 %v399, 0.0
      %v432 = vmax.f32 %v400, 0.0
      %v433 = vmax.f32 %v401, 0.0
      %v434 = vmax.f32 %v402, 0.0
      %v435 = vmax.f32 %v403, 0.0
      %v436 = vmax.f32 %v404, 0.0
      %v437 = vmax.f32 %v405, 0.0
      %v438 = vmax.f32 %v406, 0.0
      %v439 = vmax.f32 %v407, 0.0
      %v440 = vmax.f32 %v408, 0.0
      %v441 = vmax.f32 %v409, 0.0
      %v442 = vmax.f32 %v410, 0.0
      %v443 = vmax.f32 %v411, 0.0
      %v444 = vlaneseq
      %v445 = vshrl.u32 %v444, 7
      %v446 = vadd.s32 %v445, 8
      %v447 = vadd.s32 %v445, 16
      %v448 = vadd.s32 %v445, 24
      %v449 = vadd.s32 %v445, 32
      %v450 = vadd.s32 %v445, 40
      %v451 = vadd.s32 %v445, 48
      %v452 = vadd.s32 %v445, 56
      %v453 = vadd.s32 %v445, 64
      %v454 = vadd.s32 %v445, 72
      %v455 = vadd.s32 %v445, 80
      %v456 = vadd.s32 %v445, 88
      %v457 = vadd.s32 %v445, 96
      %v458 = vadd.s32 %v445, 104
      %v459 = vadd.s32 %v445, 112
      %v460 = vadd.s32 %v445, 120
      %v461 = vadd.s32 %v445, 128
      %v462 = vadd.s32 %v445, 136
      %v463 = vadd.s32 %v445, 144
      %v464 = vadd.s32 %v445, 152
      %v465 = vadd.s32 %v445, 160
      %v466 = vadd.s32 %v445, 168
      %v467 = vadd.s32 %v445, 176
      %v468 = vadd.s32 %v445, 184
      %v469 = vadd.s32 %v445, 192
      %v470 = vadd.s32 %v445, 200
      %v471 = vadd.s32 %v445, 208
      %v472 = vadd.s32 %v445, 216
      %v473 = vadd.s32 %v445, 224
      %v474 = vadd.s32 %v445, 232
      %v475 = vadd.s32 %v445, 240
      %v476 = vadd.s32 %v445, 248
      %v477 = vand.u32 %v445, 15
      %v478 = vand.u32 %v446, 15
      %v479 = vand.u32 %v447, 15
      %v480 = vand.u32 %v448, 15
      %v481 = vand.u32 %v449, 15
      %v482 = vand.u32 %v450, 15
      %v483 = vand.u32 %v451, 15
      %v484 = vand.u32 %v452, 15
      %v485 = vand.u32 %v453, 15
      %v486 = vand.u32 %v454, 15
      %v487 = vand.u32 %v455, 15
      %v488 = vand.u32 %v456, 15
      %v489 = vand.u32 %v457, 15
      %v490 = vand.u32 %v458, 15
      %v491 = vand.u32 %v459, 15
      %v492 = vand.u32 %v460, 15
      %v493 = vand.u32 %v461, 15
      %v494 = vand.u32 %v462, 15
      %v495 = vand.u32 %v463, 15
      %v496 = vand.u32 %v464, 15
      %v497 = vand.u32 %v465, 15
      %v498 = vand.u32 %v466, 15
      %v499 = vand.u32 %v467, 15
      %v500 = vand.u32 %v468, 15
      %v501 = vand.u32 %v469, 15
      %v502 = vand.u32 %v470, 15
      %v503 = vand.u32 %v471, 15
      %v504 = vand.u32 %v472, 15
      %v505 = vand.u32 %v473, 15
      %v506 = vand.u32 %v474, 15
      %v507 = vand.u32 %v475, 15
      %v508 = vand.u32 %v476, 15
      %vm509 = vcmp.lt.s32.totalorder %v477, 15
      %vm510 = vcmp.lt.s32.totalorder %v478, 15
      %vm511 = vcmp.lt.s32.totalorder %v479, 15
      %vm512 = vcmp.lt.s32.totalorder %v480, 15
      %vm513 = vcmp.lt.s32.totalorder %v481, 15
      %vm514 = vcmp.lt.s32.totalorder %v482, 15
      %vm515 = vcmp.lt.s32.totalorder %v483, 15
      %vm516 = vcmp.lt.s32.totalorder %v484, 15
      %vm517 = vcmp.lt.s32.totalorder %v485, 15
      %vm518 = vcmp.lt.s32.totalorder %v486, 15
      %vm519 = vcmp.lt.s32.totalorder %v487, 15
      %vm520 = vcmp.lt.s32.totalorder %v488, 15
      %vm521 = vcmp.lt.s32.totalorder %v489, 15
      %vm522 = vcmp.lt.s32.totalorder %v490, 15
      %vm523 = vcmp.lt.s32.totalorder %v491, 15
      %vm524 = vcmp.lt.s32.totalorder %v492, 15
      %vm525 = vcmp.lt.s32.totalorder %v493, 15
      %vm526 = vcmp.lt.s32.totalorder %v494, 15
      %vm527 = vcmp.lt.s32.totalorder %v495, 15
      %vm528 = vcmp.lt.s32.totalorder %v496, 15
      %vm529 = vcmp.lt.s32.totalorder %v497, 15
      %vm530 = vcmp.lt.s32.totalorder %v498, 15
      %vm531 = vcmp.lt.s32.totalorder %v499, 15
      %vm532 = vcmp.lt.s32.totalorder %v500, 15
      %vm533 = vcmp.lt.s32.totalorder %v501, 15
      %vm534 = vcmp.lt.s32.totalorder %v502, 15
      %vm535 = vcmp.lt.s32.totalorder %v503, 15
      %vm536 = vcmp.lt.s32.totalorder %v504, 15
      %vm537 = vcmp.lt.s32.totalorder %v505, 15
      %vm538 = vcmp.lt.s32.totalorder %v506, 15
      %vm539 = vcmp.lt.s32.totalorder %v507, 15
      %vm540 = vcmp.lt.s32.totalorder %v508, 15
      %v541 = vsel %vm509, 1, 0
      %v542 = vsel %vm510, 1, 0
      %v543 = vsel %vm511, 1, 0
      %v544 = vsel %vm512, 1, 0
      %v545 = vsel %vm513, 1, 0
      %v546 = vsel %vm514, 1, 0
      %v547 = vsel %vm515, 1, 0
      %v548 = vsel %vm516, 1, 0
      %v549 = vsel %vm517, 1, 0
      %v550 = vsel %vm518, 1, 0
      %v551 = vsel %vm519, 1, 0
      %v552 = vsel %vm520, 1, 0
      %v553 = vsel %vm521, 1, 0
      %v554 = vsel %vm522, 1, 0
      %v555 = vsel %vm523, 1, 0
      %v556 = vsel %vm524, 1, 0
      %v557 = vsel %vm525, 1, 0
      %v558 = vsel %vm526, 1, 0
      %v559 = vsel %vm527, 1, 0
      %v560 = vsel %vm528, 1, 0
      %v561 = vsel %vm529, 1, 0
      %v562 = vsel %vm530, 1, 0
      %v563 = vsel %vm531, 1, 0
      %v564 = vsel %vm532, 1, 0
      %v565 = vsel %vm533, 1, 0
      %v566 = vsel %vm534, 1, 0
      %v567 = vsel %vm535, 1, 0
      %v568 = vsel %vm536, 1, 0
      %v569 = vsel %vm537, 1, 0
      %v570 = vsel %vm538, 1, 0
      %v571 = vsel %vm539, 1, 0
      %v572 = vsel %vm540, 1, 0
      %vm573 = vcmp.eq.s32.totalorder %v541, 1
      %vm574 = vcmp.eq.s32.totalorder %v542, 1
      %vm575 = vcmp.eq.s32.totalorder %v543, 1
      %vm576 = vcmp.eq.s32.totalorder %v544, 1
      %vm577 = vcmp.eq.s32.totalorder %v545, 1
      %vm578 = vcmp.eq.s32.totalorder %v546, 1
      %vm579 = vcmp.eq.s32.totalorder %v547, 1
      %vm580 = vcmp.eq.s32.totalorder %v548, 1
      %vm581 = vcmp.eq.s32.totalorder %v549, 1
      %vm582 = vcmp.eq.s32.totalorder %v550, 1
      %vm583 = vcmp.eq.s32.totalorder %v551, 1
      %vm584 = vcmp.eq.s32.totalorder %v552, 1
      %vm585 = vcmp.eq.s32.totalorder %v553, 1
      %vm586 = vcmp.eq.s32.totalorder %v554, 1
      %vm587 = vcmp.eq.s32.totalorder %v555, 1
      %vm588 = vcmp.eq.s32.totalorder %v556, 1
      %vm589 = vcmp.eq.s32.totalorder %v557, 1
      %vm590 = vcmp.eq.s32.totalorder %v558, 1
      %vm591 = vcmp.eq.s32.totalorder %v559, 1
      %vm592 = vcmp.eq.s32.totalorder %v560, 1
      %vm593 = vcmp.eq.s32.totalorder %v561, 1
      %vm594 = vcmp.eq.s32.totalorder %v562, 1
      %vm595 = vcmp.eq.s32.totalorder %v563, 1
      %vm596 = vcmp.eq.s32.totalorder %v564, 1
      %vm597 = vcmp.eq.s32.totalorder %v565, 1
      %vm598 = vcmp.eq.s32.totalorder %v566, 1
      %vm599 = vcmp.eq.s32.totalorder %v567, 1
      %vm600 = vcmp.eq.s32.totalorder %v568, 1
      %vm601 = vcmp.eq.s32.totalorder %v569, 1
      %vm602 = vcmp.eq.s32.totalorder %v570, 1
      %vm603 = vcmp.eq.s32.totalorder %v571, 1
      %vm604 = vcmp.eq.s32.totalorder %v572, 1
      %v605 = vsel %vm573, %v412, 0.0
      %v606 = vsel %vm574, %v413, 0.0
      %v607 = vsel %vm575, %v414, 0.0
      %v608 = vsel %vm576, %v415, 0.0
      %v609 = vsel %vm577, %v416, 0.0
      %v610 = vsel %vm578, %v417, 0.0
      %v611 = vsel %vm579, %v418, 0.0
      %v612 = vsel %vm580, %v419, 0.0
      %v613 = vsel %vm581, %v420, 0.0
      %v614 = vsel %vm582, %v421, 0.0
      %v615 = vsel %vm583, %v422, 0.0
      %v616 = vsel %vm584, %v423, 0.0
      %v617 = vsel %vm585, %v424, 0.0
      %v618 = vsel %vm586, %v425, 0.0
      %v619 = vsel %vm587, %v426, 0.0
      %v620 = vsel %vm588, %v427, 0.0
      %v621 = vsel %vm589, %v428, 0.0
      %v622 = vsel %vm590, %v429, 0.0
      %v623 = vsel %vm591, %v430, 0.0
      %v624 = vsel %vm592, %v431, 0.0
      %v625 = vsel %vm593, %v432, 0.0
      %v626 = vsel %vm594, %v433, 0.0
      %v627 = vsel %vm595, %v434, 0.0
      %v628 = vsel %vm596, %v435, 0.0
      %v629 = vsel %vm597, %v436, 0.0
      %v630 = vsel %vm598, %v437, 0.0
      %v631 = vsel %vm599, %v438, 0.0
      %v632 = vsel %vm600, %v439, 0.0
      %v633 = vsel %vm601, %v440, 0.0
      %v634 = vsel %vm602, %v441, 0.0
      %v635 = vsel %vm603, %v442, 0.0
      %v636 = vsel %vm604, %v443, 0.0
      %v637 = vrot.slane %v605, 7
      %v638 = vrot.slane %v606, 7
      %v639 = vrot.slane %v607, 7
      %v640 = vrot.slane %v608, 7
      %v641 = vrot.slane %v609, 7
      %v642 = vrot.slane %v610, 7
      %v643 = vrot.slane %v611, 7
      %v644 = vrot.slane %v612, 7
      %v645 = vrot.slane %v613, 7
      %v646 = vrot.slane %v614, 7
      %v647 = vrot.slane %v615, 7
      %v648 = vrot.slane %v616, 7
      %v649 = vrot.slane %v617, 7
      %v650 = vrot.slane %v618, 7
      %v651 = vrot.slane %v619, 7
      %v652 = vrot.slane %v620, 7
      %v653 = vrot.slane %v621, 7
      %v654 = vrot.slane %v622, 7
      %v655 = vrot.slane %v623, 7
      %v656 = vrot.slane %v624, 7
      %v657 = vrot.slane %v625, 7
      %v658 = vrot.slane %v626, 7
      %v659 = vrot.slane %v627, 7
      %v660 = vrot.slane %v628, 7
      %v661 = vrot.slane %v629, 7
      %v662 = vrot.slane %v630, 7
      %v663 = vrot.slane %v631, 7
      %v664 = vrot.slane %v632, 7
      %v665 = vrot.slane %v633, 7
      %v666 = vrot.slane %v634, 7
      %v667 = vrot.slane %v635, 7
      %v668 = vrot.slane %v636, 7
      %vm669 = vcmp.lt.s32.totalorder %v445, 1
      %v670 = vsel %vm669, %v667, %v668
      %v671 = vsel %vm669, %v666, %v667
      %v672 = vsel %vm669, %v665, %v666
      %v673 = vsel %vm669, %v664, %v665
      %v674 = vsel %vm669, %v663, %v664
      %v675 = vsel %vm669, %v662, %v663
      %v676 = vsel %vm669, %v661, %v662
      %v677 = vsel %vm669, %v660, %v661
      %v678 = vsel %vm669, %v659, %v660
      %v679 = vsel %vm669, %v658, %v659
      %v680 = vsel %vm669, %v657, %v658
      %v681 = vsel %vm669, %v656, %v657
      %v682 = vsel %vm669, %v655, %v656
      %v683 = vsel %vm669, %v654, %v655
      %v684 = vsel %vm669, %v653, %v654
      %v685 = vsel %vm669, %v652, %v653
      %v686 = vsel %vm669, %v651, %v652
      %v687 = vsel %vm669, %v650, %v651
      %v688 = vsel %vm669, %v649, %v650
      %v689 = vsel %vm669, %v648, %v649
      %v690 = vsel %vm669, %v647, %v648
      %v691 = vsel %vm669, %v646, %v647
      %v692 = vsel %vm669, %v645, %v646
      %v693 = vsel %vm669, %v644, %v645
      %v694 = vsel %vm669, %v643, %v644
      %v695 = vsel %vm669, %v642, %v643
      %v696 = vsel %vm669, %v641, %v642
      %v697 = vsel %vm669, %v640, %v641
      %v698 = vsel %vm669, %v639, %v640
      %v699 = vsel %vm669, %v638, %v639
      %v700 = vsel %vm669, %v637, %v638
      %v701 = vsel %vm669, %v668, %v637
      %vm702 = vcmp.gt.s32.totalorder %v477, 0
      %vm703 = vcmp.gt.s32.totalorder %v478, 0
      %vm704 = vcmp.gt.s32.totalorder %v479, 0
      %vm705 = vcmp.gt.s32.totalorder %v480, 0
      %vm706 = vcmp.gt.s32.totalorder %v481, 0
      %vm707 = vcmp.gt.s32.totalorder %v482, 0
      %vm708 = vcmp.gt.s32.totalorder %v483, 0
      %vm709 = vcmp.gt.s32.totalorder %v484, 0
      %vm710 = vcmp.gt.s32.totalorder %v485, 0
      %vm711 = vcmp.gt.s32.totalorder %v486, 0
      %vm712 = vcmp.gt.s32.totalorder %v487, 0
      %vm713 = vcmp.gt.s32.totalorder %v488, 0
      %vm714 = vcmp.gt.s32.totalorder %v489, 0
      %vm715 = vcmp.gt.s32.totalorder %v490, 0
      %vm716 = vcmp.gt.s32.totalorder %v491, 0
      %vm717 = vcmp.gt.s32.totalorder %v492, 0
      %vm718 = vcmp.gt.s32.totalorder %v493, 0
      %vm719 = vcmp.gt.s32.totalorder %v494, 0
      %vm720 = vcmp.gt.s32.totalorder %v495, 0
      %vm721 = vcmp.gt.s32.totalorder %v496, 0
      %vm722 = vcmp.gt.s32.totalorder %v497, 0
      %vm723 = vcmp.gt.s32.totalorder %v498, 0
      %vm724 = vcmp.gt.s32.totalorder %v499, 0
      %vm725 = vcmp.gt.s32.totalorder %v500, 0
      %vm726 = vcmp.gt.s32.totalorder %v501, 0
      %vm727 = vcmp.gt.s32.totalorder %v502, 0
      %vm728 = vcmp.gt.s32.totalorder %v503, 0
      %vm729 = vcmp.gt.s32.totalorder %v504, 0
      %vm730 = vcmp.gt.s32.totalorder %v505, 0
      %vm731 = vcmp.gt.s32.totalorder %v506, 0
      %vm732 = vcmp.gt.s32.totalorder %v507, 0
      %vm733 = vcmp.gt.s32.totalorder %v508, 0
      %v734 = vsel %vm702, 1, 0
      %v735 = vsel %vm703, 1, 0
      %v736 = vsel %vm704, 1, 0
      %v737 = vsel %vm705, 1, 0
      %v738 = vsel %vm706, 1, 0
      %v739 = vsel %vm707, 1, 0
      %v740 = vsel %vm708, 1, 0
      %v741 = vsel %vm709, 1, 0
      %v742 = vsel %vm710, 1, 0
      %v743 = vsel %vm711, 1, 0
      %v744 = vsel %vm712, 1, 0
      %v745 = vsel %vm713, 1, 0
      %v746 = vsel %vm714, 1, 0
      %v747 = vsel %vm715, 1, 0
      %v748 = vsel %vm716, 1, 0
      %v749 = vsel %vm717, 1, 0
      %v750 = vsel %vm718, 1, 0
      %v751 = vsel %vm719, 1, 0
      %v752 = vsel %vm720, 1, 0
      %v753 = vsel %vm721, 1, 0
      %v754 = vsel %vm722, 1, 0
      %v755 = vsel %vm723, 1, 0
      %v756 = vsel %vm724, 1, 0
      %v757 = vsel %vm725, 1, 0
      %v758 = vsel %vm726, 1, 0
      %v759 = vsel %vm727, 1, 0
      %v760 = vsel %vm728, 1, 0
      %v761 = vsel %vm729, 1, 0
      %v762 = vsel %vm730, 1, 0
      %v763 = vsel %vm731, 1, 0
      %v764 = vsel %vm732, 1, 0
      %v765 = vsel %vm733, 1, 0
      %vm766 = vcmp.eq.s32.totalorder %v734, 1
      %vm767 = vcmp.eq.s32.totalorder %v735, 1
      %vm768 = vcmp.eq.s32.totalorder %v736, 1
      %vm769 = vcmp.eq.s32.totalorder %v737, 1
      %vm770 = vcmp.eq.s32.totalorder %v738, 1
      %vm771 = vcmp.eq.s32.totalorder %v739, 1
      %vm772 = vcmp.eq.s32.totalorder %v740, 1
      %vm773 = vcmp.eq.s32.totalorder %v741, 1
      %vm774 = vcmp.eq.s32.totalorder %v742, 1
      %vm775 = vcmp.eq.s32.totalorder %v743, 1
      %vm776 = vcmp.eq.s32.totalorder %v744, 1
      %vm777 = vcmp.eq.s32.totalorder %v745, 1
      %vm778 = vcmp.eq.s32.totalorder %v746, 1
      %vm779 = vcmp.eq.s32.totalorder %v747, 1
      %vm780 = vcmp.eq.s32.totalorder %v748, 1
      %vm781 = vcmp.eq.s32.totalorder %v749, 1
      %vm782 = vcmp.eq.s32.totalorder %v750, 1
      %vm783 = vcmp.eq.s32.totalorder %v751, 1
      %vm784 = vcmp.eq.s32.totalorder %v752, 1
      %vm785 = vcmp.eq.s32.totalorder %v753, 1
      %vm786 = vcmp.eq.s32.totalorder %v754, 1
      %vm787 = vcmp.eq.s32.totalorder %v755, 1
      %vm788 = vcmp.eq.s32.totalorder %v756, 1
      %vm789 = vcmp.eq.s32.totalorder %v757, 1
      %vm790 = vcmp.eq.s32.totalorder %v758, 1
      %vm791 = vcmp.eq.s32.totalorder %v759, 1
      %vm792 = vcmp.eq.s32.totalorder %v760, 1
      %vm793 = vcmp.eq.s32.totalorder %v761, 1
      %vm794 = vcmp.eq.s32.totalorder %v762, 1
      %vm795 = vcmp.eq.s32.totalorder %v763, 1
      %vm796 = vcmp.eq.s32.totalorder %v764, 1
      %vm797 = vcmp.eq.s32.totalorder %v765, 1
      %v798 = vsel %vm766, %v412, 0.0
      %v799 = vsel %vm767, %v413, 0.0
      %v800 = vsel %vm768, %v414, 0.0
      %v801 = vsel %vm769, %v415, 0.0
      %v802 = vsel %vm770, %v416, 0.0
      %v803 = vsel %vm771, %v417, 0.0
      %v804 = vsel %vm772, %v418, 0.0
      %v805 = vsel %vm773, %v419, 0.0
      %v806 = vsel %vm774, %v420, 0.0
      %v807 = vsel %vm775, %v421, 0.0
      %v808 = vsel %vm776, %v422, 0.0
      %v809 = vsel %vm777, %v423, 0.0
      %v810 = vsel %vm778, %v424, 0.0
      %v811 = vsel %vm779, %v425, 0.0
      %v812 = vsel %vm780, %v426, 0.0
      %v813 = vsel %vm781, %v427, 0.0
      %v814 = vsel %vm782, %v428, 0.0
      %v815 = vsel %vm783, %v429, 0.0
      %v816 = vsel %vm784, %v430, 0.0
      %v817 = vsel %vm785, %v431, 0.0
      %v818 = vsel %vm786, %v432, 0.0
      %v819 = vsel %vm787, %v433, 0.0
      %v820 = vsel %vm788, %v434, 0.0
      %v821 = vsel %vm789, %v435, 0.0
      %v822 = vsel %vm790, %v436, 0.0
      %v823 = vsel %vm791, %v437, 0.0
      %v824 = vsel %vm792, %v438, 0.0
      %v825 = vsel %vm793, %v439, 0.0
      %v826 = vsel %vm794, %v440, 0.0
      %v827 = vsel %vm795, %v441, 0.0
      %v828 = vsel %vm796, %v442, 0.0
      %v829 = vsel %vm797, %v443, 0.0
      %v830 = vrot.slane %v798, 1
      %v831 = vrot.slane %v799, 1
      %v832 = vrot.slane %v800, 1
      %v833 = vrot.slane %v801, 1
      %v834 = vrot.slane %v802, 1
      %v835 = vrot.slane %v803, 1
      %v836 = vrot.slane %v804, 1
      %v837 = vrot.slane %v805, 1
      %v838 = vrot.slane %v806, 1
      %v839 = vrot.slane %v807, 1
      %v840 = vrot.slane %v808, 1
      %v841 = vrot.slane %v809, 1
      %v842 = vrot.slane %v810, 1
      %v843 = vrot.slane %v811, 1
      %v844 = vrot.slane %v812, 1
      %v845 = vrot.slane %v813, 1
      %v846 = vrot.slane %v814, 1
      %v847 = vrot.slane %v815, 1
      %v848 = vrot.slane %v816, 1
      %v849 = vrot.slane %v817, 1
      %v850 = vrot.slane %v818, 1
      %v851 = vrot.slane %v819, 1
      %v852 = vrot.slane %v820, 1
      %v853 = vrot.slane %v821, 1
      %v854 = vrot.slane %v822, 1
      %v855 = vrot.slane %v823, 1
      %v856 = vrot.slane %v824, 1
      %v857 = vrot.slane %v825, 1
      %v858 = vrot.slane %v826, 1
      %v859 = vrot.slane %v827, 1
      %v860 = vrot.slane %v828, 1
      %v861 = vrot.slane %v829, 1
      %vm862 = vcmp.lt.s32.totalorder %v445, 7
      %v863 = vsel %vm862, %v860, %v861
      %v864 = vsel %vm862, %v859, %v860
      %v865 = vsel %vm862, %v858, %v859
      %v866 = vsel %vm862, %v857, %v858
      %v867 = vsel %vm862, %v856, %v857
      %v868 = vsel %vm862, %v855, %v856
      %v869 = vsel %vm862, %v854, %v855
      %v870 = vsel %vm862, %v853, %v854
      %v871 = vsel %vm862, %v852, %v853
      %v872 = vsel %vm862, %v851, %v852
      %v873 = vsel %vm862, %v850, %v851
      %v874 = vsel %vm862, %v849, %v850
      %v875 = vsel %vm862, %v848, %v849
      %v876 = vsel %vm862, %v847, %v848
      %v877 = vsel %vm862, %v846, %v847
      %v878 = vsel %vm862, %v845, %v846
      %v879 = vsel %vm862, %v844, %v845
      %v880 = vsel %vm862, %v843, %v844
      %v881 = vsel %vm862, %v842, %v843
      %v882 = vsel %vm862, %v841, %v842
      %v883 = vsel %vm862, %v840, %v841
      %v884 = vsel %vm862, %v839, %v840
      %v885 = vsel %vm862, %v838, %v839
      %v886 = vsel %vm862, %v837, %v838
      %v887 = vsel %vm862, %v836, %v837
      %v888 = vsel %vm862, %v835, %v836
      %v889 = vsel %vm862, %v834, %v835
      %v890 = vsel %vm862, %v833, %v834
      %v891 = vsel %vm862, %v832, %v833
      %v892 = vsel %vm862, %v831, %v832
      %v893 = vsel %vm862, %v830, %v831
      %v894 = vsel %vm862, %v861, %v830
      %927 = vrot.lane.b32.xlu0 %v412, 4
      %v928 = vpop.permute.xlu0 %927
      %929 = vrot.lane.b32.xlu0 %v413, 4
      %v930 = vpop.permute.xlu0 %929
      %931 = vrot.lane.b32.xlu0 %v414, 4
      %v932 = vpop.permute.xlu0 %931
      %933 = vrot.lane.b32.xlu0 %v415, 4
      %v934 = vpop.permute.xlu0 %933
      %935 = vrot.lane.b32.xlu0 %v416, 4
      %v936 = vpop.permute.xlu0 %935
      %937 = vrot.lane.b32.xlu0 %v417, 4
      %v938 = vpop.permute.xlu0 %937
      %939 = vrot.lane.b32.xlu0 %v418, 4
      %v940 = vpop.permute.xlu0 %939
      %941 = vrot.lane.b32.xlu0 %v419, 4
      %v942 = vpop.permute.xlu0 %941
      %943 = vrot.lane.b32.xlu0 %v420, 4
      %v944 = vpop.permute.xlu0 %943
      %945 = vrot.lane.b32.xlu0 %v421, 4
      %v946 = vpop.permute.xlu0 %945
      %947 = vrot.lane.b32.xlu0 %v422, 4
      %v948 = vpop.permute.xlu0 %947
      %949 = vrot.lane.b32.xlu0 %v423, 4
      %v950 = vpop.permute.xlu0 %949
      %951 = vrot.lane.b32.xlu0 %v424, 4
      %v952 = vpop.permute.xlu0 %951
      %953 = vrot.lane.b32.xlu0 %v425, 4
      %v954 = vpop.permute.xlu0 %953
      %955 = vrot.lane.b32.xlu0 %v426, 4
      %v956 = vpop.permute.xlu0 %955
      %957 = vrot.lane.b32.xlu0 %v427, 4
      %v958 = vpop.permute.xlu0 %957
      %959 = vrot.lane.b32.xlu0 %v428, 4
      %v960 = vpop.permute.xlu0 %959
      %961 = vrot.lane.b32.xlu0 %v429, 4
      %v962 = vpop.permute.xlu0 %961
      %963 = vrot.lane.b32.xlu0 %v430, 4
      %v964 = vpop.permute.xlu0 %963
      %965 = vrot.lane.b32.xlu0 %v431, 4
      %v966 = vpop.permute.xlu0 %965
      %967 = vrot.lane.b32.xlu0 %v432, 4
      %v968 = vpop.permute.xlu0 %967
      %969 = vrot.lane.b32.xlu0 %v433, 4
      %v970 = vpop.permute.xlu0 %969
      %971 = vrot.lane.b32.xlu0 %v434, 4
      %v972 = vpop.permute.xlu0 %971
      %973 = vrot.lane.b32.xlu0 %v435, 4
      %v974 = vpop.permute.xlu0 %973
      %975 = vrot.lane.b32.xlu0 %v436, 4
      %v976 = vpop.permute.xlu0 %975
      %977 = vrot.lane.b32.xlu0 %v437, 4
      %v978 = vpop.permute.xlu0 %977
      %979 = vrot.lane.b32.xlu0 %v438, 4
      %v980 = vpop.permute.xlu0 %979
      %981 = vrot.lane.b32.xlu0 %v439, 4
      %v982 = vpop.permute.xlu0 %981
      %983 = vrot.lane.b32.xlu0 %v440, 4
      %v984 = vpop.permute.xlu0 %983
      %985 = vrot.lane.b32.xlu0 %v441, 4
      %v986 = vpop.permute.xlu0 %985
      %987 = vrot.lane.b32.xlu0 %v442, 4
      %v988 = vpop.permute.xlu0 %987
      %989 = vrot.lane.b32.xlu0 %v443, 4
      %v990 = vpop.permute.xlu0 %989
      %1055 = vrot.lane.b32.xlu0 %v893, 8
      %v1056 = vpop.permute.xlu0 %1055
      %1057 = vrot.lane.b32.xlu0 %v892, 8
      %v1058 = vpop.permute.xlu0 %1057
      %1059 = vrot.lane.b32.xlu0 %v891, 8
      %v1060 = vpop.permute.xlu0 %1059
      %1061 = vrot.lane.b32.xlu0 %v890, 8
      %v1062 = vpop.permute.xlu0 %1061
      %1063 = vrot.lane.b32.xlu0 %v889, 8
      %v1064 = vpop.permute.xlu0 %1063
      %1065 = vrot.lane.b32.xlu0 %v888, 8
      %v1066 = vpop.permute.xlu0 %1065
      %1067 = vrot.lane.b32.xlu0 %v887, 8
      %v1068 = vpop.permute.xlu0 %1067
      %1069 = vrot.lane.b32.xlu0 %v886, 8
      %v1070 = vpop.permute.xlu0 %1069
      %1071 = vrot.lane.b32.xlu0 %v885, 8
      %v1072 = vpop.permute.xlu0 %1071
      %1073 = vrot.lane.b32.xlu0 %v884, 8
      %v1074 = vpop.permute.xlu0 %1073
      %1075 = vrot.lane.b32.xlu0 %v883, 8
      %v1076 = vpop.permute.xlu0 %1075
      %1077 = vrot.lane.b32.xlu0 %v882, 8
      %v1078 = vpop.permute.xlu0 %1077
      %1079 = vrot.lane.b32.xlu0 %v881, 8
      %v1080 = vpop.permute.xlu0 %1079
      %1081 = vrot.lane.b32.xlu0 %v880, 8
      %v1082 = vpop.permute.xlu0 %1081
      %1083 = vrot.lane.b32.xlu0 %v879, 8
      %v1084 = vpop.permute.xlu0 %1083
      %1085 = vrot.lane.b32.xlu0 %v878, 8
      %v1086 = vpop.permute.xlu0 %1085
      %1087 = vrot.lane.b32.xlu0 %v877, 8
      %v1088 = vpop.permute.xlu0 %1087
      %1089 = vrot.lane.b32.xlu0 %v876, 8
      %v1090 = vpop.permute.xlu0 %1089
      %1091 = vrot.lane.b32.xlu0 %v875, 8
      %v1092 = vpop.permute.xlu0 %1091
      %1093 = vrot.lane.b32.xlu0 %v874, 8
      %v1094 = vpop.permute.xlu0 %1093
      %1095 = vrot.lane.b32.xlu0 %v873, 8
      %v1096 = vpop.permute.xlu0 %1095
      %1097 = vrot.lane.b32.xlu0 %v872, 8
      %v1098 = vpop.permute.xlu0 %1097
      %1099 = vrot.lane.b32.xlu0 %v871, 8
      %v1100 = vpop.permute.xlu0 %1099
      %1101 = vrot.lane.b32.xlu0 %v870, 8
      %v1102 = vpop.permute.xlu0 %1101
      %1103 = vrot.lane.b32.xlu0 %v869, 8
      %v1104 = vpop.permute.xlu0 %1103
      %1105 = vrot.lane.b32.xlu0 %v868, 8
      %v1106 = vpop.permute.xlu0 %1105
      %1107 = vrot.lane.b32.xlu0 %v867, 8
      %v1108 = vpop.permute.xlu0 %1107
      %1109 = vrot.lane.b32.xlu0 %v866, 8
      %v1110 = vpop.permute.xlu0 %1109
      %1111 = vrot.lane.b32.xlu0 %v865, 8
      %v1112 = vpop.permute.xlu0 %1111
      %1113 = vrot.lane.b32.xlu0 %v864, 8
      %v1114 = vpop.permute.xlu0 %1113
      %1115 = vrot.lane.b32.xlu0 %v863, 8
      %v1116 = vpop.permute.xlu0 %1115
      %1117 = vrot.lane.b32.xlu0 %v894, 8
      %v1118 = vpop.permute.xlu0 %1117
      %vm1151 = vcmask 31744
      %v1152 = vsel %vm1151, %v701, %v928
      %v1153 = vsel %vm1151, %v700, %v930
      %v1154 = vsel %vm1151, %v699, %v932
      %v1155 = vsel %vm1151, %v698, %v934
      %v1156 = vsel %vm1151, %v697, %v936
      %v1157 = vsel %vm1151, %v696, %v938
      %v1158 = vsel %vm1151, %v695, %v940
      %v1159 = vsel %vm1151, %v694, %v942
      %v1160 = vsel %vm1151, %v693, %v944
      %v1161 = vsel %vm1151, %v692, %v946
      %v1162 = vsel %vm1151, %v691, %v948
      %v1163 = vsel %vm1151, %v690, %v950
      %v1164 = vsel %vm1151, %v689, %v952
      %v1165 = vsel %vm1151, %v688, %v954
      %v1166 = vsel %vm1151, %v687, %v956
      %v1167 = vsel %vm1151, %v686, %v958
      %v1168 = vsel %vm1151, %v685, %v960
      %v1169 = vsel %vm1151, %v684, %v962
      %v1170 = vsel %vm1151, %v683, %v964
      %v1171 = vsel %vm1151, %v682, %v966
      %v1172 = vsel %vm1151, %v681, %v968
      %v1173 = vsel %vm1151, %v680, %v970
      %v1174 = vsel %vm1151, %v679, %v972
      %v1175 = vsel %vm1151, %v678, %v974
      %v1176 = vsel %vm1151, %v677, %v976
      %v1177 = vsel %vm1151, %v676, %v978
      %v1178 = vsel %vm1151, %v675, %v980
      %v1179 = vsel %vm1151, %v674, %v982
      %v1180 = vsel %vm1151, %v673, %v984
      %v1181 = vsel %vm1151, %v672, %v986
      %v1182 = vsel %vm1151, %v671, %v988
      %v1183 = vsel %vm1151, %v670, %v990
      %vm1184 = vcmask 64512
      %v1185 = vsel %vm1184, %v1152, %v1056
      %v1186 = vsel %vm1184, %v1153, %v1058
      %v1187 = vsel %vm1184, %v1154, %v1060
      %v1188 = vsel %vm1184, %v1155, %v1062
      %v1189 = vsel %vm1184, %v1156, %v1064
      %v1190 = vsel %vm1184, %v1157, %v1066
      %v1191 = vsel %vm1184, %v1158, %v1068
      %v1192 = vsel %vm1184, %v1159, %v1070
      %v1193 = vsel %vm1184, %v1160, %v1072
      %v1194 = vsel %vm1184, %v1161, %v1074
      %v1195 = vsel %vm1184, %v1162, %v1076
      %v1196 = vsel %vm1184, %v1163, %v1078
      %v1197 = vsel %vm1184, %v1164, %v1080
      %v1198 = vsel %vm1184, %v1165, %v1082
      %v1199 = vsel %vm1184, %v1166, %v1084
      %v1200 = vsel %vm1184, %v1167, %v1086
      %v1201 = vsel %vm1184, %v1168, %v1088
      %v1202 = vsel %vm1184, %v1169, %v1090
      %v1203 = vsel %vm1184, %v1170, %v1092
      %v1204 = vsel %vm1184, %v1171, %v1094
      %v1205 = vsel %vm1184, %v1172, %v1096
      %v1206 = vsel %vm1184, %v1173, %v1098
      %v1207 = vsel %vm1184, %v1174, %v1100
      %v1208 = vsel %vm1184, %v1175, %v1102
      %v1209 = vsel %vm1184, %v1176, %v1104
      %v1210 = vsel %vm1184, %v1177, %v1106
      %v1211 = vsel %vm1184, %v1178, %v1108
      %v1212 = vsel %vm1184, %v1179, %v1110
      %v1213 = vsel %vm1184, %v1180, %v1112
      %v1214 = vsel %vm1184, %v1181, %v1114
      %v1215 = vsel %vm1184, %v1182, %v1116
      %v1216 = vsel %vm1184, %v1183, %v1118
      %v1217 = vand.u32 %v445, 255
      %v1218 = vand.u32 %v446, 255
      %v1219 = vand.u32 %v447, 255
      %v1220 = vand.u32 %v448, 255
      %v1221 = vand.u32 %v449, 255
      %v1222 = vand.u32 %v450, 255
      %v1223 = vand.u32 %v451, 255
      %v1224 = vand.u32 %v452, 255
      %v1225 = vand.u32 %v453, 255
      %v1226 = vand.u32 %v454, 255
      %v1227 = vand.u32 %v455, 255
      %v1228 = vand.u32 %v456, 255
      %v1229 = vand.u32 %v457, 255
      %v1230 = vand.u32 %v458, 255
      %v1231 = vand.u32 %v459, 255
      %v1232 = vand.u32 %v460, 255
      %v1233 = vand.u32 %v461, 255
      %v1234 = vand.u32 %v462, 255
      %v1235 = vand.u32 %v463, 255
      %v1236 = vand.u32 %v464, 255
      %v1237 = vand.u32 %v465, 255
      %v1238 = vand.u32 %v466, 255
      %v1239 = vand.u32 %v467, 255
      %v1240 = vand.u32 %v468, 255
      %v1241 = vand.u32 %v469, 255
      %v1242 = vand.u32 %v470, 255
      %v1243 = vand.u32 %v471, 255
      %v1244 = vand.u32 %v472, 255
      %v1245 = vand.u32 %v473, 255
      %v1246 = vand.u32 %v474, 255
      %v1247 = vand.u32 %v475, 255
      %v1248 = vand.u32 %v476, 255
      %vm1249 = vcmp.ge.s32.totalorder %v1217, 16
      %vm1250 = vcmp.ge.s32.totalorder %v1218, 16
      %vm1251 = vcmp.ge.s32.totalorder %v1219, 16
      %vm1252 = vcmp.ge.s32.totalorder %v1220, 16
      %vm1253 = vcmp.ge.s32.totalorder %v1221, 16
      %vm1254 = vcmp.ge.s32.totalorder %v1222, 16
      %vm1255 = vcmp.ge.s32.totalorder %v1223, 16
      %vm1256 = vcmp.ge.s32.totalorder %v1224, 16
      %vm1257 = vcmp.ge.s32.totalorder %v1225, 16
      %vm1258 = vcmp.ge.s32.totalorder %v1226, 16
      %vm1259 = vcmp.ge.s32.totalorder %v1227, 16
      %vm1260 = vcmp.ge.s32.totalorder %v1228, 16
      %vm1261 = vcmp.ge.s32.totalorder %v1229, 16
      %vm1262 = vcmp.ge.s32.totalorder %v1230, 16
      %vm1263 = vcmp.ge.s32.totalorder %v1231, 16
      %vm1264 = vcmp.ge.s32.totalorder %v1232, 16
      %vm1265 = vcmp.ge.s32.totalorder %v1233, 16
      %vm1266 = vcmp.ge.s32.totalorder %v1234, 16
      %vm1267 = vcmp.ge.s32.totalorder %v1235, 16
      %vm1268 = vcmp.ge.s32.totalorder %v1236, 16
      %vm1269 = vcmp.ge.s32.totalorder %v1237, 16
      %vm1270 = vcmp.ge.s32.totalorder %v1238, 16
      %vm1271 = vcmp.ge.s32.totalorder %v1239, 16
      %vm1272 = vcmp.ge.s32.totalorder %v1240, 16
      %vm1273 = vcmp.ge.s32.totalorder %v1241, 16
      %vm1274 = vcmp.ge.s32.totalorder %v1242, 16
      %vm1275 = vcmp.ge.s32.totalorder %v1243, 16
      %vm1276 = vcmp.ge.s32.totalorder %v1244, 16
      %vm1277 = vcmp.ge.s32.totalorder %v1245, 16
      %vm1278 = vcmp.ge.s32.totalorder %v1246, 16
      %vm1279 = vcmp.ge.s32.totalorder %v1247, 16
      %vm1280 = vcmp.ge.s32.totalorder %v1248, 16
      %v1281 = vsel %vm1249, 1, 0
      %v1282 = vsel %vm1250, 1, 0
      %v1283 = vsel %vm1251, 1, 0
      %v1284 = vsel %vm1252, 1, 0
      %v1285 = vsel %vm1253, 1, 0
      %v1286 = vsel %vm1254, 1, 0
      %v1287 = vsel %vm1255, 1, 0
      %v1288 = vsel %vm1256, 1, 0
      %v1289 = vsel %vm1257, 1, 0
      %v1290 = vsel %vm1258, 1, 0
      %v1291 = vsel %vm1259, 1, 0
      %v1292 = vsel %vm1260, 1, 0
      %v1293 = vsel %vm1261, 1, 0
      %v1294 = vsel %vm1262, 1, 0
      %v1295 = vsel %vm1263, 1, 0
      %v1296 = vsel %vm1264, 1, 0
      %v1297 = vsel %vm1265, 1, 0
      %v1298 = vsel %vm1266, 1, 0
      %v1299 = vsel %vm1267, 1, 0
      %v1300 = vsel %vm1268, 1, 0
      %v1301 = vsel %vm1269, 1, 0
      %v1302 = vsel %vm1270, 1, 0
      %v1303 = vsel %vm1271, 1, 0
      %v1304 = vsel %vm1272, 1, 0
      %v1305 = vsel %vm1273, 1, 0
      %v1306 = vsel %vm1274, 1, 0
      %v1307 = vsel %vm1275, 1, 0
      %v1308 = vsel %vm1276, 1, 0
      %v1309 = vsel %vm1277, 1, 0
      %v1310 = vsel %vm1278, 1, 0
      %v1311 = vsel %vm1279, 1, 0
      %v1312 = vsel %vm1280, 1, 0
      %vm1313 = vcmp.eq.s32.totalorder %v1281, 1
      %vm1314 = vcmp.eq.s32.totalorder %v1282, 1
      %vm1315 = vcmp.eq.s32.totalorder %v1283, 1
      %vm1316 = vcmp.eq.s32.totalorder %v1284, 1
      %vm1317 = vcmp.eq.s32.totalorder %v1285, 1
      %vm1318 = vcmp.eq.s32.totalorder %v1286, 1
      %vm1319 = vcmp.eq.s32.totalorder %v1287, 1
      %vm1320 = vcmp.eq.s32.totalorder %v1288, 1
      %vm1321 = vcmp.eq.s32.totalorder %v1289, 1
      %vm1322 = vcmp.eq.s32.totalorder %v1290, 1
      %vm1323 = vcmp.eq.s32.totalorder %v1291, 1
      %vm1324 = vcmp.eq.s32.totalorder %v1292, 1
      %vm1325 = vcmp.eq.s32.totalorder %v1293, 1
      %vm1326 = vcmp.eq.s32.totalorder %v1294, 1
      %vm1327 = vcmp.eq.s32.totalorder %v1295, 1
      %vm1328 = vcmp.eq.s32.totalorder %v1296, 1
      %vm1329 = vcmp.eq.s32.totalorder %v1297, 1
      %vm1330 = vcmp.eq.s32.totalorder %v1298, 1
      %vm1331 = vcmp.eq.s32.totalorder %v1299, 1
      %vm1332 = vcmp.eq.s32.totalorder %v1300, 1
      %vm1333 = vcmp.eq.s32.totalorder %v1301, 1
      %vm1334 = vcmp.eq.s32.totalorder %v1302, 1
      %vm1335 = vcmp.eq.s32.totalorder %v1303, 1
      %vm1336 = vcmp.eq.s32.totalorder %v1304, 1
      %vm1337 = vcmp.eq.s32.totalorder %v1305, 1
      %vm1338 = vcmp.eq.s32.totalorder %v1306, 1
      %vm1339 = vcmp.eq.s32.totalorder %v1307, 1
      %vm1340 = vcmp.eq.s32.totalorder %v1308, 1
      %vm1341 = vcmp.eq.s32.totalorder %v1309, 1
      %vm1342 = vcmp.eq.s32.totalorder %v1310, 1
      %vm1343 = vcmp.eq.s32.totalorder %v1311, 1
      %vm1344 = vcmp.eq.s32.totalorder %v1312, 1
      %v1345 = vsel %vm1313, %v1215, 0.0
      %v1346 = vsel %vm1314, %v1216, 0.0
      %v1347 = vsel %vm1315, %v1185, 0.0
      %v1348 = vsel %vm1316, %v1186, 0.0
      %v1349 = vsel %vm1317, %v1187, 0.0
      %v1350 = vsel %vm1318, %v1188, 0.0
      %v1351 = vsel %vm1319, %v1189, 0.0
      %v1352 = vsel %vm1320, %v1190, 0.0
      %v1353 = vsel %vm1321, %v1191, 0.0
      %v1354 = vsel %vm1322, %v1192, 0.0
      %v1355 = vsel %vm1323, %v1193, 0.0
      %v1356 = vsel %vm1324, %v1194, 0.0
      %v1357 = vsel %vm1325, %v1195, 0.0
      %v1358 = vsel %vm1326, %v1196, 0.0
      %v1359 = vsel %vm1327, %v1197, 0.0
      %v1360 = vsel %vm1328, %v1198, 0.0
      %v1361 = vsel %vm1329, %v1199, 0.0
      %v1362 = vsel %vm1330, %v1200, 0.0
      %v1363 = vsel %vm1331, %v1201, 0.0
      %v1364 = vsel %vm1332, %v1202, 0.0
      %v1365 = vsel %vm1333, %v1203, 0.0
      %v1366 = vsel %vm1334, %v1204, 0.0
      %v1367 = vsel %vm1335, %v1205, 0.0
      %v1368 = vsel %vm1336, %v1206, 0.0
      %v1369 = vsel %vm1337, %v1207, 0.0
      %v1370 = vsel %vm1338, %v1208, 0.0
      %v1371 = vsel %vm1339, %v1209, 0.0
      %v1372 = vsel %vm1340, %v1210, 0.0
      %v1373 = vsel %vm1341, %v1211, 0.0
      %v1374 = vsel %vm1342, %v1212, 0.0
      %v1375 = vsel %vm1343, %v1213, 0.0
      %v1376 = vsel %vm1344, %v1214, 0.0
      %v1377 = vpack.c.bf16 %v1346, %v1345
      %v1378 = vpack.c.bf16 %v1348, %v1347
      %v1379 = vpack.c.bf16 %v1350, %v1349
      %v1380 = vpack.c.bf16 %v1352, %v1351
      %v1381 = vpack.c.bf16 %v1354, %v1353
      %v1382 = vpack.c.bf16 %v1356, %v1355
      %v1383 = vpack.c.bf16 %v1358, %v1357
      %v1384 = vpack.c.bf16 %v1360, %v1359
      %v1385 = vpack.c.bf16 %v1362, %v1361
      %v1386 = vpack.c.bf16 %v1364, %v1363
      %v1387 = vpack.c.bf16 %v1366, %v1365
      %v1388 = vpack.c.bf16 %v1368, %v1367
      %v1389 = vpack.c.bf16 %v1370, %v1369
      %v1390 = vpack.c.bf16 %v1372, %v1371
      %v1391 = vpack.c.bf16 %v1374, %v1373
      %v1392 = vpack.c.bf16 %v1376, %v1375
      %v1393 = vld [vmem:[%s1] sm:$0xf]
      %v1394 = vld [vmem:[%s1 + $0x4] sm:$0x3]
      %v1395 = vpack.c.bf16 %v1186, %v1185
      %v1396 = vpack.c.bf16 %v1188, %v1187
      %v1397 = vpack.c.bf16 %v1190, %v1189
      %v1398 = vpack.c.bf16 %v1192, %v1191
      %v1399 = vpack.c.bf16 %v1194, %v1193
      %v1400 = vpack.c.bf16 %v1196, %v1195
      %v1401 = vpack.c.bf16 %v1198, %v1197
      %v1402 = vpack.c.bf16 %v1200, %v1199
      %v1403 = vpack.c.bf16 %v1202, %v1201
      %v1404 = vpack.c.bf16 %v1204, %v1203
      %v1405 = vpack.c.bf16 %v1206, %v1205
      %v1406 = vpack.c.bf16 %v1208, %v1207
      %v1407 = vpack.c.bf16 %v1210, %v1209
      %v1408 = vpack.c.bf16 %v1212, %v1211
      %v1409 = vpack.c.bf16 %v1214, %v1213
      %v1410 = vpack.c.bf16 %v1216, %v1215
      %s1411 = scalar_lea.vmem %s1, 8
      %v1412 = vld [vmem:[%s1411] sm:$0xf]
      %v1413 = vld [vmem:[%s1411 + $0x4] sm:$0x3]
      %v1416 = vunpack.c.l.b16 %v1412
      %v1417 = vunpack.c.l.b16 %v1413
      %v1418 = vpack.c.b16 %v1417, %v1416
      %vm1419 = vcmask 97280
      %v1421 = vsel %vm1419, %v1395, 0
      %v1424 = vsel %vm1419, %v1396, 0
      %v1427 = vsel %vm1419, %v1397, 0
      %v1430 = vsel %vm1419, %v1398, 0
      %v1433 = vsel %vm1419, %v1399, 0
      %v1436 = vsel %vm1419, %v1400, 0
      %v1439 = vsel %vm1419, %v1401, 0
      %v1442 = vsel %vm1419, %v1402, 0
      %v1445 = vsel %vm1419, %v1403, 0
      %v1448 = vsel %vm1419, %v1404, 0
      %v1451 = vsel %vm1419, %v1405, 0
      %v1454 = vsel %vm1419, %v1406, 0
      %v1457 = vsel %vm1419, %v1407, 0
      %v1460 = vsel %vm1419, %v1408, 0
      %v1463 = vsel %vm1419, %v1409, 0
      %v1466 = vsel %vm1419, %v1410, 0
      %vm1468 = vcmask 1045504
      %v1470 = vsel %vm1468, %v1418, 0
      %1472 = vmatprep.subr.bf16.mxu0 0
      %1473 = vmatpush1.bf16.msra.mxu0 %v1470
      %1474 = vmatprep.subr.bf16.mxu0 0
      %1475 = vmatpush1.bf16.msra.mxu0 0
      %1476 = vmatprep.subr.bf16.mxu0 0
      %1477 = vmatpush1.bf16.msra.mxu0 0
      %1478 = vmatprep.subr.bf16.mxu0 0
      %1479 = vmatpush1.bf16.msra.mxu0 0
      %1480 = vmatprep.subr.bf16.mxu0 0
      %1481 = vmatpush1.bf16.msra.mxu0 0
      %1482 = vmatprep.subr.bf16.mxu0 0
      %1483 = vmatpush1.bf16.msra.mxu0 0
      %1484 = vmatprep.subr.bf16.mxu0 0
      %1485 = vmatpush1.bf16.msra.mxu0 0
      %1486 = vmatprep.subr.bf16.mxu0 0
      %1487 = vmatpush1.bf16.msra.mxu0 0
      %1488 = vmatprep.subr.bf16.mxu0 0
      %1489 = vmatpush1.bf16.msra.mxu0 0
      %1490 = vmatprep.subr.bf16.mxu0 0
      %1491 = vmatpush1.bf16.msra.mxu0 0
      %1492 = vmatprep.subr.bf16.mxu0 0
      %1493 = vmatpush1.bf16.msra.mxu0 0
      %1494 = vmatprep.subr.bf16.mxu0 0
      %1495 = vmatpush1.bf16.msra.mxu0 0
      %1496 = vmatprep.subr.bf16.mxu0 0
      %1497 = vmatpush1.bf16.msra.mxu0 0
      %1498 = vmatprep.subr.bf16.mxu0 0
      %1499 = vmatpush1.bf16.msra.mxu0 0
      %1500 = vmatprep.subr.bf16.mxu0 0
      %1501 = vmatpush1.bf16.msra.mxu0 0
      %1502 = vmatprep.subr.bf16.mxu0 0
      %1503 = vmatpush1.bf16.msra.mxu0 0
      %1504 = vmatprep.mubr.bf16.mxu0 0
      %1505 = vmatmul.mubr.bf16.gmra.mrb[0].mxu0 %v1421
      %v1506 = vpop.f32.mrb[0].mxu0
      %v1507 = vadd.f32 0.0, %v1506
      %v1508 = vpop.f32.mrb[0].mxu0
      %v1509 = vpop.f32.mrb[0].mxu0
      %v1510 = vadd.f32 0.0, %v1509
      %v1511 = vpop.f32.mrb[0].mxu0
      %1512 = vmatprep.mubr.bf16.mxu0 0
      %1513 = vmatmul.mubr.bf16.gmra.mrb[0].mxu0 %v1424
      %v1514 = vpop.f32.mrb[0].mxu0
      %v1515 = vadd.f32 0.0, %v1514
      %v1516 = vpop.f32.mrb[0].mxu0
      %v1517 = vpop.f32.mrb[0].mxu0
      %v1518 = vadd.f32 0.0, %v1517
      %v1519 = vpop.f32.mrb[0].mxu0
      %1520 = vmatprep.mubr.bf16.mxu0 0
      %1521 = vmatmul.mubr.bf16.gmra.mrb[0].mxu0 %v1427
      %v1522 = vpop.f32.mrb[0].mxu0
      %v1523 = vadd.f32 0.0, %v1522
      %v1524 = vpop.f32.mrb[0].mxu0
      %v1525 = vpop.f32.mrb[0].mxu0
      %v1526 = vadd.f32 0.0, %v1525
      %v1527 = vpop.f32.mrb[0].mxu0
      %1528 = vmatprep.mubr.bf16.mxu0 0
      %1529 = vmatmul.mubr.bf16.gmra.mrb[0].mxu0 %v1430
      %v1530 = vpop.f32.mrb[0].mxu0
      %v1531 = vadd.f32 0.0, %v1530
      %v1532 = vpop.f32.mrb[0].mxu0
      %v1533 = vpop.f32.mrb[0].mxu0
      %v1534 = vadd.f32 0.0, %v1533
      %v1535 = vpop.f32.mrb[0].mxu0
      %1536 = vmatprep.mubr.bf16.mxu0 0
      %1537 = vmatmul.mubr.bf16.gmra.mrb[0].mxu0 %v1433
      %v1538 = vpop.f32.mrb[0].mxu0
      %v1539 = vadd.f32 0.0, %v1538
      %v1540 = vpop.f32.mrb[0].mxu0
      %v1541 = vpop.f32.mrb[0].mxu0
      %v1542 = vadd.f32 0.0, %v1541
      %v1543 = vpop.f32.mrb[0].mxu0
      %1544 = vmatprep.mubr.bf16.mxu0 0
      %1545 = vmatmul.mubr.bf16.gmra.mrb[0].mxu0 %v1436
      %v1546 = vpop.f32.mrb[0].mxu0
      %v1547 = vadd.f32 0.0, %v1546
      %v1548 = vpop.f32.mrb[0].mxu0
      %v1549 = vpop.f32.mrb[0].mxu0
      %v1550 = vadd.f32 0.0, %v1549
      %v1551 = vpop.f32.mrb[0].mxu0
      %1552 = vmatprep.mubr.bf16.mxu0 0
      %1553 = vmatmul.mubr.bf16.gmra.mrb[0].mxu0 %v1439
      %v1554 = vpop.f32.mrb[0].mxu0
      %v1555 = vadd.f32 0.0, %v1554
      %v1556 = vpop.f32.mrb[0].mxu0
      %v1557 = vpop.f32.mrb[0].mxu0
      %v1558 = vadd.f32 0.0, %v1557
      %v1559 = vpop.f32.mrb[0].mxu0
      %1560 = vmatprep.mubr.bf16.mxu0 0
      %1561 = vmatmul.mubr.bf16.gmra.mrb[0].mxu0 %v1442
      %v1562 = vpop.f32.mrb[0].mxu0
      %v1563 = vadd.f32 0.0, %v1562
      %v1564 = vpop.f32.mrb[0].mxu0
      %v1565 = vpop.f32.mrb[0].mxu0
      %v1566 = vadd.f32 0.0, %v1565
      %v1567 = vpop.f32.mrb[0].mxu0
      %1568 = vmatprep.mubr.bf16.mxu0 0
      %1569 = vmatmul.mubr.bf16.gmra.mrb[0].mxu0 %v1445
      %v1570 = vpop.f32.mrb[0].mxu0
      %v1571 = vadd.f32 0.0, %v1570
      %v1572 = vpop.f32.mrb[0].mxu0
      %v1573 = vpop.f32.mrb[0].mxu0
      %v1574 = vadd.f32 0.0, %v1573
      %v1575 = vpop.f32.mrb[0].mxu0
      %1576 = vmatprep.mubr.bf16.mxu0 0
      %1577 = vmatmul.mubr.bf16.gmra.mrb[0].mxu0 %v1448
      %v1578 = vpop.f32.mrb[0].mxu0
      %v1579 = vadd.f32 0.0, %v1578
      %v1580 = vpop.f32.mrb[0].mxu0
      %v1581 = vpop.f32.mrb[0].mxu0
      %v1582 = vadd.f32 0.0, %v1581
      %v1583 = vpop.f32.mrb[0].mxu0
      %1584 = vmatprep.mubr.bf16.mxu0 0
      %1585 = vmatmul.mubr.bf16.gmra.mrb[0].mxu0 %v1451
      %v1586 = vpop.f32.mrb[0].mxu0
      %v1587 = vadd.f32 0.0, %v1586
      %v1588 = vpop.f32.mrb[0].mxu0
      %v1589 = vpop.f32.mrb[0].mxu0
      %v1590 = vadd.f32 0.0, %v1589
      %v1591 = vpop.f32.mrb[0].mxu0
      %1592 = vmatprep.mubr.bf16.mxu0 0
      %1593 = vmatmul.mubr.bf16.gmra.mrb[0].mxu0 %v1454
      %v1594 = vpop.f32.mrb[0].mxu0
      %v1595 = vadd.f32 0.0, %v1594
      %v1596 = vpop.f32.mrb[0].mxu0
      %v1597 = vpop.f32.mrb[0].mxu0
      %v1598 = vadd.f32 0.0, %v1597
      %v1599 = vpop.f32.mrb[0].mxu0
      %1600 = vmatprep.mubr.bf16.mxu0 0
      %1601 = vmatmul.mubr.bf16.gmra.mrb[0].mxu0 %v1457
      %v1602 = vpop.f32.mrb[0].mxu0
      %v1603 = vadd.f32 0.0, %v1602
      %v1604 = vpop.f32.mrb[0].mxu0
      %v1605 = vpop.f32.mrb[0].mxu0
      %v1606 = vadd.f32 0.0, %v1605
      %v1607 = vpop.f32.mrb[0].mxu0
      %1608 = vmatprep.mubr.bf16.mxu0 0
      %1609 = vmatmul.mubr.bf16.gmra.mrb[0].mxu0 %v1460
      %v1610 = vpop.f32.mrb[0].mxu0
      %v1611 = vadd.f32 0.0, %v1610
      %v1612 = vpop.f32.mrb[0].mxu0
      %v1613 = vpop.f32.mrb[0].mxu0
      %v1614 = vadd.f32 0.0, %v1613
      %v1615 = vpop.f32.mrb[0].mxu0
      %1616 = vmatprep.mubr.bf16.mxu0 0
      %1617 = vmatmul.mubr.bf16.gmra.mrb[0].mxu0 %v1463
      %v1618 = vpop.f32.mrb[0].mxu0
      %v1619 = vadd.f32 0.0, %v1618
      %v1620 = vpop.f32.mrb[0].mxu0
      %v1621 = vpop.f32.mrb[0].mxu0
      %v1622 = vadd.f32 0.0, %v1621
      %v1623 = vpop.f32.mrb[0].mxu0
      %1624 = vmatprep.mubr.bf16.mxu0 0
      %1625 = vmatmul.mubr.bf16.gmra.mrb[0].mxu0 %v1466
      %v1626 = vpop.f32.mrb[0].mxu0
      %v1627 = vadd.f32 0.0, %v1626
      %v1628 = vpop.f32.mrb[0].mxu0
      %v1629 = vpop.f32.mrb[0].mxu0
      %v1630 = vadd.f32 0.0, %v1629
      %v1631 = vpop.f32.mrb[0].mxu0
      %1632 = vdwg.mxu0
      %v1635 = vunpack.c.l.b16 %v1393
      %v1636 = vunpack.c.l.b16 %v1394
      %v1637 = vpack.c.b16 %v1636, %v1635
      %v1639 = vsel %vm1419, %v1377, 0
      %v1642 = vsel %vm1419, %v1378, 0
      %v1645 = vsel %vm1419, %v1379, 0
      %v1648 = vsel %vm1419, %v1380, 0
      %v1651 = vsel %vm1419, %v1381, 0
      %v1654 = vsel %vm1419, %v1382, 0
      %v1657 = vsel %vm1419, %v1383, 0
      %v1660 = vsel %vm1419, %v1384, 0
      %v1663 = vsel %vm1419, %v1385, 0
      %v1666 = vsel %vm1419, %v1386, 0
      %v1669 = vsel %vm1419, %v1387, 0
      %v1672 = vsel %vm1419, %v1388, 0
      %v1675 = vsel %vm1419, %v1389, 0
      %v1678 = vsel %vm1419, %v1390, 0
      %v1681 = vsel %vm1419, %v1391, 0
      %v1684 = vsel %vm1419, %v1392, 0
      %v1687 = vsel %vm1468, %v1637, 0
      %1689 = vmatprep.subr.bf16.mxu0 0
      %1690 = vmatpush1.bf16.msra.mxu0 %v1687
      %1691 = vmatprep.subr.bf16.mxu0 0
      %1692 = vmatpush1.bf16.msra.mxu0 0
      %1693 = vmatprep.subr.bf16.mxu0 0
      %1694 = vmatpush1.bf16.msra.mxu0 0
      %1695 = vmatprep.subr.bf16.mxu0 0
      %1696 = vmatpush1.bf16.msra.mxu0 0
      %1697 = vmatprep.subr.bf16.mxu0 0
      %1698 = vmatpush1.bf16.msra.mxu0 0
      %1699 = vmatprep.subr.bf16.mxu0 0
      %1700 = vmatpush1.bf16.msra.mxu0 0
      %1701 = vmatprep.subr.bf16.mxu0 0
      %1702 = vmatpush1.bf16.msra.mxu0 0
      %1703 = vmatprep.subr.bf16.mxu0 0
      %1704 = vmatpush1.bf16.msra.mxu0 0
      %1705 = vmatprep.subr.bf16.mxu0 0
      %1706 = vmatpush1.bf16.msra.mxu0 0
      %1707 = vmatprep.subr.bf16.mxu0 0
      %1708 = vmatpush1.bf16.msra.mxu0 0
      %1709 = vmatprep.subr.bf16.mxu0 0
      %1710 = vmatpush1.bf16.msra.mxu0 0
      %1711 = vmatprep.subr.bf16.mxu0 0
      %1712 = vmatpush1.bf16.msra.mxu0 0
      %1713 = vmatprep.subr.bf16.mxu0 0
      %1714 = vmatpush1.bf16.msra.mxu0 0
      %1715 = vmatprep.subr.bf16.mxu0 0
      %1716 = vmatpush1.bf16.msra.mxu0 0
      %1717 = vmatprep.subr.bf16.mxu0 0
      %1718 = vmatpush1.bf16.msra.mxu0 0
      %1719 = vmatprep.subr.bf16.mxu0 0
      %1720 = vmatpush1.bf16.msra.mxu0 0
      %1721 = vmatprep.mubr.bf16.mxu0 0
      %1722 = vmatmul.mubr.bf16.gmra.mrb[0].mxu0 %v1639
      %v1723 = vpop.f32.mrb[0].mxu0
      %v1724 = vadd.f32 %v1507, %v1723
      %v1725 = vpop.f32.mrb[0].mxu0
      %v1726 = vpop.f32.mrb[0].mxu0
      %v1727 = vadd.f32 %v1510, %v1726
      %v1728 = vpop.f32.mrb[0].mxu0
      %1729 = vmatprep.mubr.bf16.mxu0 0
      %1730 = vmatmul.mubr.bf16.gmra.mrb[0].mxu0 %v1642
      %v1731 = vpop.f32.mrb[0].mxu0
      %v1732 = vadd.f32 %v1515, %v1731
      %v1733 = vpop.f32.mrb[0].mxu0
      %v1734 = vpop.f32.mrb[0].mxu0
      %v1735 = vadd.f32 %v1518, %v1734
      %v1736 = vpop.f32.mrb[0].mxu0
      %1737 = vmatprep.mubr.bf16.mxu0 0
      %1738 = vmatmul.mubr.bf16.gmra.mrb[0].mxu0 %v1645
      %v1739 = vpop.f32.mrb[0].mxu0
      %v1740 = vadd.f32 %v1523, %v1739
      %v1741 = vpop.f32.mrb[0].mxu0
      %v1742 = vpop.f32.mrb[0].mxu0
      %v1743 = vadd.f32 %v1526, %v1742
      %v1744 = vpop.f32.mrb[0].mxu0
      %1745 = vmatprep.mubr.bf16.mxu0 0
      %1746 = vmatmul.mubr.bf16.gmra.mrb[0].mxu0 %v1648
      %v1747 = vpop.f32.mrb[0].mxu0
      %v1748 = vadd.f32 %v1531, %v1747
      %v1749 = vpop.f32.mrb[0].mxu0
      %v1750 = vpop.f32.mrb[0].mxu0
      %v1751 = vadd.f32 %v1534, %v1750
      %v1752 = vpop.f32.mrb[0].mxu0
      %1753 = vmatprep.mubr.bf16.mxu0 0
      %1754 = vmatmul.mubr.bf16.gmra.mrb[0].mxu0 %v1651
      %v1755 = vpop.f32.mrb[0].mxu0
      %v1756 = vadd.f32 %v1539, %v1755
      %v1757 = vpop.f32.mrb[0].mxu0
      %v1758 = vpop.f32.mrb[0].mxu0
      %v1759 = vadd.f32 %v1542, %v1758
      %v1760 = vpop.f32.mrb[0].mxu0
      %1761 = vmatprep.mubr.bf16.mxu0 0
      %1762 = vmatmul.mubr.bf16.gmra.mrb[0].mxu0 %v1654
      %v1763 = vpop.f32.mrb[0].mxu0
      %v1764 = vadd.f32 %v1547, %v1763
      %v1765 = vpop.f32.mrb[0].mxu0
      %v1766 = vpop.f32.mrb[0].mxu0
      %v1767 = vadd.f32 %v1550, %v1766
      %v1768 = vpop.f32.mrb[0].mxu0
      %1769 = vmatprep.mubr.bf16.mxu0 0
      %1770 = vmatmul.mubr.bf16.gmra.mrb[0].mxu0 %v1657
      %v1771 = vpop.f32.mrb[0].mxu0
      %v1772 = vadd.f32 %v1555, %v1771
      %v1773 = vpop.f32.mrb[0].mxu0
      %v1774 = vpop.f32.mrb[0].mxu0
      %v1775 = vadd.f32 %v1558, %v1774
      %v1776 = vpop.f32.mrb[0].mxu0
      %1777 = vmatprep.mubr.bf16.mxu0 0
      %1778 = vmatmul.mubr.bf16.gmra.mrb[0].mxu0 %v1660
      %v1779 = vpop.f32.mrb[0].mxu0
      %v1780 = vadd.f32 %v1563, %v1779
      %v1781 = vpop.f32.mrb[0].mxu0
      %v1782 = vpop.f32.mrb[0].mxu0
      %v1783 = vadd.f32 %v1566, %v1782
      %v1784 = vpop.f32.mrb[0].mxu0
      %1785 = vmatprep.mubr.bf16.mxu0 0
      %1786 = vmatmul.mubr.bf16.gmra.mrb[0].mxu0 %v1663
      %v1787 = vpop.f32.mrb[0].mxu0
      %v1788 = vadd.f32 %v1571, %v1787
      %v1789 = vpop.f32.mrb[0].mxu0
      %v1790 = vpop.f32.mrb[0].mxu0
      %v1791 = vadd.f32 %v1574, %v1790
      %v1792 = vpop.f32.mrb[0].mxu0
      %1793 = vmatprep.mubr.bf16.mxu0 0
      %1794 = vmatmul.mubr.bf16.gmra.mrb[0].mxu0 %v1666
      %v1795 = vpop.f32.mrb[0].mxu0
      %v1796 = vadd.f32 %v1579, %v1795
      %v1797 = vpop.f32.mrb[0].mxu0
      %v1798 = vpop.f32.mrb[0].mxu0
      %v1799 = vadd.f32 %v1582, %v1798
      %v1800 = vpop.f32.mrb[0].mxu0
      %1801 = vmatprep.mubr.bf16.mxu0 0
      %1802 = vmatmul.mubr.bf16.gmra.mrb[0].mxu0 %v1669
      %v1803 = vpop.f32.mrb[0].mxu0
      %v1804 = vadd.f32 %v1587, %v1803
      %v1805 = vpop.f32.mrb[0].mxu0
      %v1806 = vpop.f32.mrb[0].mxu0
      %v1807 = vadd.f32 %v1590, %v1806
      %v1808 = vpop.f32.mrb[0].mxu0
      %1809 = vmatprep.mubr.bf16.mxu0 0
      %1810 = vmatmul.mubr.bf16.gmra.mrb[0].mxu0 %v1672
      %v1811 = vpop.f32.mrb[0].mxu0
      %v1812 = vadd.f32 %v1595, %v1811
      %v1813 = vpop.f32.mrb[0].mxu0
      %v1814 = vpop.f32.mrb[0].mxu0
      %v1815 = vadd.f32 %v1598, %v1814
      %v1816 = vpop.f32.mrb[0].mxu0
      %1817 = vmatprep.mubr.bf16.mxu0 0
      %1818 = vmatmul.mubr.bf16.gmra.mrb[0].mxu0 %v1675
      %v1819 = vpop.f32.mrb[0].mxu0
      %v1820 = vadd.f32 %v1603, %v1819
      %v1821 = vpop.f32.mrb[0].mxu0
      %v1822 = vpop.f32.mrb[0].mxu0
      %v1823 = vadd.f32 %v1606, %v1822
      %v1824 = vpop.f32.mrb[0].mxu0
      %1825 = vmatprep.mubr.bf16.mxu0 0
      %1826 = vmatmul.mubr.bf16.gmra.mrb[0].mxu0 %v1678
      %v1827 = vpop.f32.mrb[0].mxu0
      %v1828 = vadd.f32 %v1611, %v1827
      %v1829 = vpop.f32.mrb[0].mxu0
      %v1830 = vpop.f32.mrb[0].mxu0
      %v1831 = vadd.f32 %v1614, %v1830
      %v1832 = vpop.f32.mrb[0].mxu0
      %1833 = vmatprep.mubr.bf16.mxu0 0
      %1834 = vmatmul.mubr.bf16.gmra.mrb[0].mxu0 %v1681
      %v1835 = vpop.f32.mrb[0].mxu0
      %v1836 = vadd.f32 %v1619, %v1835
      %v1837 = vpop.f32.mrb[0].mxu0
      %v1838 = vpop.f32.mrb[0].mxu0
      %v1839 = vadd.f32 %v1622, %v1838
      %v1840 = vpop.f32.mrb[0].mxu0
      %1841 = vmatprep.mubr.bf16.mxu0 0
      %1842 = vmatmul.mubr.bf16.gmra.mrb[0].mxu0 %v1684
      %v1843 = vpop.f32.mrb[0].mxu0
      %v1844 = vadd.f32 %v1627, %v1843
      %v1845 = vpop.f32.mrb[0].mxu0
      %v1846 = vpop.f32.mrb[0].mxu0
      %v1847 = vadd.f32 %v1630, %v1846
      %v1848 = vpop.f32.mrb[0].mxu0
      %1849 = vdwg.mxu0
      %vm1850 = vcmp.lt.s32.totalorder %v1217, 240
      %vm1851 = vcmp.lt.s32.totalorder %v1218, 240
      %vm1852 = vcmp.lt.s32.totalorder %v1219, 240
      %vm1853 = vcmp.lt.s32.totalorder %v1220, 240
      %vm1854 = vcmp.lt.s32.totalorder %v1221, 240
      %vm1855 = vcmp.lt.s32.totalorder %v1222, 240
      %vm1856 = vcmp.lt.s32.totalorder %v1223, 240
      %vm1857 = vcmp.lt.s32.totalorder %v1224, 240
      %vm1858 = vcmp.lt.s32.totalorder %v1225, 240
      %vm1859 = vcmp.lt.s32.totalorder %v1226, 240
      %vm1860 = vcmp.lt.s32.totalorder %v1227, 240
      %vm1861 = vcmp.lt.s32.totalorder %v1228, 240
      %vm1862 = vcmp.lt.s32.totalorder %v1229, 240
      %vm1863 = vcmp.lt.s32.totalorder %v1230, 240
      %vm1864 = vcmp.lt.s32.totalorder %v1231, 240
      %vm1865 = vcmp.lt.s32.totalorder %v1232, 240
      %vm1866 = vcmp.lt.s32.totalorder %v1233, 240
      %vm1867 = vcmp.lt.s32.totalorder %v1234, 240
      %vm1868 = vcmp.lt.s32.totalorder %v1235, 240
      %vm1869 = vcmp.lt.s32.totalorder %v1236, 240
      %vm1870 = vcmp.lt.s32.totalorder %v1237, 240
      %vm1871 = vcmp.lt.s32.totalorder %v1238, 240
      %vm1872 = vcmp.lt.s32.totalorder %v1239, 240
      %vm1873 = vcmp.lt.s32.totalorder %v1240, 240
      %vm1874 = vcmp.lt.s32.totalorder %v1241, 240
      %vm1875 = vcmp.lt.s32.totalorder %v1242, 240
      %vm1876 = vcmp.lt.s32.totalorder %v1243, 240
      %vm1877 = vcmp.lt.s32.totalorder %v1244, 240
      %vm1878 = vcmp.lt.s32.totalorder %v1245, 240
      %vm1879 = vcmp.lt.s32.totalorder %v1246, 240
      %vm1880 = vcmp.lt.s32.totalorder %v1247, 240
      %vm1881 = vcmp.lt.s32.totalorder %v1248, 240
      %v1882 = vsel %vm1850, 1, 0
      %v1883 = vsel %vm1851, 1, 0
      %v1884 = vsel %vm1852, 1, 0
      %v1885 = vsel %vm1853, 1, 0
      %v1886 = vsel %vm1854, 1, 0
      %v1887 = vsel %vm1855, 1, 0
      %v1888 = vsel %vm1856, 1, 0
      %v1889 = vsel %vm1857, 1, 0
      %v1890 = vsel %vm1858, 1, 0
      %v1891 = vsel %vm1859, 1, 0
      %v1892 = vsel %vm1860, 1, 0
      %v1893 = vsel %vm1861, 1, 0
      %v1894 = vsel %vm1862, 1, 0
      %v1895 = vsel %vm1863, 1, 0
      %v1896 = vsel %vm1864, 1, 0
      %v1897 = vsel %vm1865, 1, 0
      %v1898 = vsel %vm1866, 1, 0
      %v1899 = vsel %vm1867, 1, 0
      %v1900 = vsel %vm1868, 1, 0
      %v1901 = vsel %vm1869, 1, 0
      %v1902 = vsel %vm1870, 1, 0
      %v1903 = vsel %vm1871, 1, 0
      %v1904 = vsel %vm1872, 1, 0
      %v1905 = vsel %vm1873, 1, 0
      %v1906 = vsel %vm1874, 1, 0
      %v1907 = vsel %vm1875, 1, 0
      %v1908 = vsel %vm1876, 1, 0
      %v1909 = vsel %vm1877, 1, 0
      %v1910 = vsel %vm1878, 1, 0
      %v1911 = vsel %vm1879, 1, 0
      %v1912 = vsel %vm1880, 1, 0
      %v1913 = vsel %vm1881, 1, 0
      %vm1914 = vcmp.eq.s32.totalorder %v1882, 1
      %vm1915 = vcmp.eq.s32.totalorder %v1883, 1
      %vm1916 = vcmp.eq.s32.totalorder %v1884, 1
      %vm1917 = vcmp.eq.s32.totalorder %v1885, 1
      %vm1918 = vcmp.eq.s32.totalorder %v1886, 1
      %vm1919 = vcmp.eq.s32.totalorder %v1887, 1
      %vm1920 = vcmp.eq.s32.totalorder %v1888, 1
      %vm1921 = vcmp.eq.s32.totalorder %v1889, 1
      %vm1922 = vcmp.eq.s32.totalorder %v1890, 1
      %vm1923 = vcmp.eq.s32.totalorder %v1891, 1
      %vm1924 = vcmp.eq.s32.totalorder %v1892, 1
      %vm1925 = vcmp.eq.s32.totalorder %v1893, 1
      %vm1926 = vcmp.eq.s32.totalorder %v1894, 1
      %vm1927 = vcmp.eq.s32.totalorder %v1895, 1
      %vm1928 = vcmp.eq.s32.totalorder %v1896, 1
      %vm1929 = vcmp.eq.s32.totalorder %v1897, 1
      %vm1930 = vcmp.eq.s32.totalorder %v1898, 1
      %vm1931 = vcmp.eq.s32.totalorder %v1899, 1
      %vm1932 = vcmp.eq.s32.totalorder %v1900, 1
      %vm1933 = vcmp.eq.s32.totalorder %v1901, 1
      %vm1934 = vcmp.eq.s32.totalorder %v1902, 1
      %vm1935 = vcmp.eq.s32.totalorder %v1903, 1
      %vm1936 = vcmp.eq.s32.totalorder %v1904, 1
      %vm1937 = vcmp.eq.s32.totalorder %v1905, 1
      %vm1938 = vcmp.eq.s32.totalorder %v1906, 1
      %vm1939 = vcmp.eq.s32.totalorder %v1907, 1
      %vm1940 = vcmp.eq.s32.totalorder %v1908, 1
      %vm1941 = vcmp.eq.s32.totalorder %v1909, 1
      %vm1942 = vcmp.eq.s32.totalorder %v1910, 1
      %vm1943 = vcmp.eq.s32.totalorder %v1911, 1
      %vm1944 = vcmp.eq.s32.totalorder %v1912, 1
      %vm1945 = vcmp.eq.s32.totalorder %v1913, 1
      %v1946 = vsel %vm1914, %v1187, 0.0
      %v1947 = vsel %vm1915, %v1188, 0.0
      %v1948 = vsel %vm1916, %v1189, 0.0
      %v1949 = vsel %vm1917, %v1190, 0.0
      %v1950 = vsel %vm1918, %v1191, 0.0
      %v1951 = vsel %vm1919, %v1192, 0.0
      %v1952 = vsel %vm1920, %v1193, 0.0
      %v1953 = vsel %vm1921, %v1194, 0.0
      %v1954 = vsel %vm1922, %v1195, 0.0
      %v1955 = vsel %vm1923, %v1196, 0.0
      %v1956 = vsel %vm1924, %v1197, 0.0
      %v1957 = vsel %vm1925, %v1198, 0.0
      %v1958 = vsel %vm1926, %v1199, 0.0
      %v1959 = vsel %vm1927, %v1200, 0.0
      %v1960 = vsel %vm1928, %v1201, 0.0
      %v1961 = vsel %vm1929, %v1202, 0.0
      %v1962 = vsel %vm1930, %v1203, 0.0
      %v1963 = vsel %vm1931, %v1204, 0.0
      %v1964 = vsel %vm1932, %v1205, 0.0
      %v1965 = vsel %vm1933, %v1206, 0.0
      %v1966 = vsel %vm1934, %v1207, 0.0
      %v1967 = vsel %vm1935, %v1208, 0.0
      %v1968 = vsel %vm1936, %v1209, 0.0
      %v1969 = vsel %vm1937, %v1210, 0.0
      %v1970 = vsel %vm1938, %v1211, 0.0
      %v1971 = vsel %vm1939, %v1212, 0.0
      %v1972 = vsel %vm1940, %v1213, 0.0
      %v1973 = vsel %vm1941, %v1214, 0.0
      %v1974 = vsel %vm1942, %v1215, 0.0
      %v1975 = vsel %vm1943, %v1216, 0.0
      %v1976 = vsel %vm1944, %v1185, 0.0
      %v1977 = vsel %vm1945, %v1186, 0.0
      %v1978 = vpack.c.bf16 %v1947, %v1946
      %v1979 = vpack.c.bf16 %v1949, %v1948
      %v1980 = vpack.c.bf16 %v1951, %v1950
      %v1981 = vpack.c.bf16 %v1953, %v1952
      %v1982 = vpack.c.bf16 %v1955, %v1954
      %v1983 = vpack.c.bf16 %v1957, %v1956
      %v1984 = vpack.c.bf16 %v1959, %v1958
      %v1985 = vpack.c.bf16 %v1961, %v1960
      %v1986 = vpack.c.bf16 %v1963, %v1962
      %v1987 = vpack.c.bf16 %v1965, %v1964
      %v1988 = vpack.c.bf16 %v1967, %v1966
      %v1989 = vpack.c.bf16 %v1969, %v1968
      %v1990 = vpack.c.bf16 %v1971, %v1970
      %v1991 = vpack.c.bf16 %v1973, %v1972
      %v1992 = vpack.c.bf16 %v1975, %v1974
      %v1993 = vpack.c.bf16 %v1977, %v1976
      %s1994 = scalar_lea.vmem %s1, 16
      %v1995 = vld [vmem:[%s1994] sm:$0xf]
      %v1996 = vld [vmem:[%s1994 + $0x4] sm:$0x3]
      %v1999 = vunpack.c.l.b16 %v1995
      %v2000 = vunpack.c.l.b16 %v1996
      %v2001 = vpack.c.b16 %v2000, %v1999
      %v2003 = vsel %vm1419, %v1978, 0
      %v2006 = vsel %vm1419, %v1979, 0
      %v2009 = vsel %vm1419, %v1980, 0
      %v2012 = vsel %vm1419, %v1981, 0
      %v2015 = vsel %vm1419, %v1982, 0
      %v2018 = vsel %vm1419, %v1983, 0
      %v2021 = vsel %vm1419, %v1984, 0
      %v2024 = vsel %vm1419, %v1985, 0
      %v2027 = vsel %vm1419, %v1986, 0
      %v2030 = vsel %vm1419, %v1987, 0
      %v2033 = vsel %vm1419, %v1988, 0
      %v2036 = vsel %vm1419, %v1989, 0
      %v2039 = vsel %vm1419, %v1990, 0
      %v2042 = vsel %vm1419, %v1991, 0
      %v2045 = vsel %vm1419, %v1992, 0
      %v2048 = vsel %vm1419, %v1993, 0
      %v2051 = vsel %vm1468, %v2001, 0
      %2053 = vmatprep.subr.bf16.mxu0 0
      %2054 = vmatpush1.bf16.msra.mxu0 %v2051
      %2055 = vmatprep.subr.bf16.mxu0 0
      %2056 = vmatpush1.bf16.msra.mxu0 0
      %2057 = vmatprep.subr.bf16.mxu0 0
      %2058 = vmatpush1.bf16.msra.mxu0 0
      %2059 = vmatprep.subr.bf16.mxu0 0
      %2060 = vmatpush1.bf16.msra.mxu0 0
      %2061 = vmatprep.subr.bf16.mxu0 0
      %2062 = vmatpush1.bf16.msra.mxu0 0
      %2063 = vmatprep.subr.bf16.mxu0 0
      %2064 = vmatpush1.bf16.msra.mxu0 0
      %2065 = vmatprep.subr.bf16.mxu0 0
      %2066 = vmatpush1.bf16.msra.mxu0 0
      %2067 = vmatprep.subr.bf16.mxu0 0
      %2068 = vmatpush1.bf16.msra.mxu0 0
      %2069 = vmatprep.subr.bf16.mxu0 0
      %2070 = vmatpush1.bf16.msra.mxu0 0
      %2071 = vmatprep.subr.bf16.mxu0 0
      %2072 = vmatpush1.bf16.msra.mxu0 0
      %2073 = vmatprep.subr.bf16.mxu0 0
      %2074 = vmatpush1.bf16.msra.mxu0 0
      %2075 = vmatprep.subr.bf16.mxu0 0
      %2076 = vmatpush1.bf16.msra.mxu0 0
      %2077 = vmatprep.subr.bf16.mxu0 0
      %2078 = vmatpush1.bf16.msra.mxu0 0
      %2079 = vmatprep.subr.bf16.mxu0 0
      %2080 = vmatpush1.bf16.msra.mxu0 0
      %2081 = vmatprep.subr.bf16.mxu0 0
      %2082 = vmatpush1.bf16.msra.mxu0 0
      %2083 = vmatprep.subr.bf16.mxu0 0
      %2084 = vmatpush1.bf16.msra.mxu0 0
      %2085 = vmatprep.mubr.bf16.mxu0 0
      %2086 = vmatmul.mubr.bf16.gmra.mrb[0].mxu0 %v2003
      %v2087 = vpop.f32.mrb[0].mxu0
      %v2088 = vadd.f32 0.0, %v2087
      %v2089 = vpop.f32.mrb[0].mxu0
      %v2090 = vpop.f32.mrb[0].mxu0
      %v2091 = vadd.f32 0.0, %v2090
      %v2092 = vpop.f32.mrb[0].mxu0
      %2093 = vmatprep.mubr.bf16.mxu0 0
      %2094 = vmatmul.mubr.bf16.gmra.mrb[0].mxu0 %v2006
      %v2095 = vpop.f32.mrb[0].mxu0
      %v2096 = vadd.f32 0.0, %v2095
      %v2097 = vpop.f32.mrb[0].mxu0
      %v2098 = vpop.f32.mrb[0].mxu0
      %v2099 = vadd.f32 0.0, %v2098
      %v2100 = vpop.f32.mrb[0].mxu0
      %2101 = vmatprep.mubr.bf16.mxu0 0
      %2102 = vmatmul.mubr.bf16.gmra.mrb[0].mxu0 %v2009
      %v2103 = vpop.f32.mrb[0].mxu0
      %v2104 = vadd.f32 0.0, %v2103
      %v2105 = vpop.f32.mrb[0].mxu0
      %v2106 = vpop.f32.mrb[0].mxu0
      %v2107 = vadd.f32 0.0, %v2106
      %v2108 = vpop.f32.mrb[0].mxu0
      %2109 = vmatprep.mubr.bf16.mxu0 0
      %2110 = vmatmul.mubr.bf16.gmra.mrb[0].mxu0 %v2012
      %v2111 = vpop.f32.mrb[0].mxu0
      %v2112 = vadd.f32 0.0, %v2111
      %v2113 = vpop.f32.mrb[0].mxu0
      %v2114 = vpop.f32.mrb[0].mxu0
      %v2115 = vadd.f32 0.0, %v2114
      %v2116 = vpop.f32.mrb[0].mxu0
      %2117 = vmatprep.mubr.bf16.mxu0 0
      %2118 = vmatmul.mubr.bf16.gmra.mrb[0].mxu0 %v2015
      %v2119 = vpop.f32.mrb[0].mxu0
      %v2120 = vadd.f32 0.0, %v2119
      %v2121 = vpop.f32.mrb[0].mxu0
      %v2122 = vpop.f32.mrb[0].mxu0
      %v2123 = vadd.f32 0.0, %v2122
      %v2124 = vpop.f32.mrb[0].mxu0
      %2125 = vmatprep.mubr.bf16.mxu0 0
      %2126 = vmatmul.mubr.bf16.gmra.mrb[0].mxu0 %v2018
      %v2127 = vpop.f32.mrb[0].mxu0
      %v2128 = vadd.f32 0.0, %v2127
      %v2129 = vpop.f32.mrb[0].mxu0
      %v2130 = vpop.f32.mrb[0].mxu0
      %v2131 = vadd.f32 0.0, %v2130
      %v2132 = vpop.f32.mrb[0].mxu0
      %2133 = vmatprep.mubr.bf16.mxu0 0
      %2134 = vmatmul.mubr.bf16.gmra.mrb[0].mxu0 %v2021
      %v2135 = vpop.f32.mrb[0].mxu0
      %v2136 = vadd.f32 0.0, %v2135
      %v2137 = vpop.f32.mrb[0].mxu0
      %v2138 = vpop.f32.mrb[0].mxu0
      %v2139 = vadd.f32 0.0, %v2138
      %v2140 = vpop.f32.mrb[0].mxu0
      %2141 = vmatprep.mubr.bf16.mxu0 0
      %2142 = vmatmul.mubr.bf16.gmra.mrb[0].mxu0 %v2024
      %v2143 = vpop.f32.mrb[0].mxu0
      %v2144 = vadd.f32 0.0, %v2143
      %v2145 = vpop.f32.mrb[0].mxu0
      %v2146 = vpop.f32.mrb[0].mxu0
      %v2147 = vadd.f32 0.0, %v2146
      %v2148 = vpop.f32.mrb[0].mxu0
      %2149 = vmatprep.mubr.bf16.mxu0 0
      %2150 = vmatmul.mubr.bf16.gmra.mrb[0].mxu0 %v2027
      %v2151 = vpop.f32.mrb[0].mxu0
      %v2152 = vadd.f32 0.0, %v2151
      %v2153 = vpop.f32.mrb[0].mxu0
      %v2154 = vpop.f32.mrb[0].mxu0
      %v2155 = vadd.f32 0.0, %v2154
      %v2156 = vpop.f32.mrb[0].mxu0
      %2157 = vmatprep.mubr.bf16.mxu0 0
      %2158 = vmatmul.mubr.bf16.gmra.mrb[0].mxu0 %v2030
      %v2159 = vpop.f32.mrb[0].mxu0
      %v2160 = vadd.f32 0.0, %v2159
      %v2161 = vpop.f32.mrb[0].mxu0
      %v2162 = vpop.f32.mrb[0].mxu0
      %v2163 = vadd.f32 0.0, %v2162
      %v2164 = vpop.f32.mrb[0].mxu0
      %2165 = vmatprep.mubr.bf16.mxu0 0
      %2166 = vmatmul.mubr.bf16.gmra.mrb[0].mxu0 %v2033
      %v2167 = vpop.f32.mrb[0].mxu0
      %v2168 = vadd.f32 0.0, %v2167
      %v2169 = vpop.f32.mrb[0].mxu0
      %v2170 = vpop.f32.mrb[0].mxu0
      %v2171 = vadd.f32 0.0, %v2170
      %v2172 = vpop.f32.mrb[0].mxu0
      %2173 = vmatprep.mubr.bf16.mxu0 0
      %2174 = vmatmul.mubr.bf16.gmra.mrb[0].mxu0 %v2036
      %v2175 = vpop.f32.mrb[0].mxu0
      %v2176 = vadd.f32 0.0, %v2175
      %v2177 = vpop.f32.mrb[0].mxu0
      %v2178 = vpop.f32.mrb[0].mxu0
      %v2179 = vadd.f32 0.0, %v2178
      %v2180 = vpop.f32.mrb[0].mxu0
      %2181 = vmatprep.mubr.bf16.mxu0 0
      %2182 = vmatmul.mubr.bf16.gmra.mrb[0].mxu0 %v2039
      %v2183 = vpop.f32.mrb[0].mxu0
      %v2184 = vadd.f32 0.0, %v2183
      %v2185 = vpop.f32.mrb[0].mxu0
      %v2186 = vpop.f32.mrb[0].mxu0
      %v2187 = vadd.f32 0.0, %v2186
      %v2188 = vpop.f32.mrb[0].mxu0
      %2189 = vmatprep.mubr.bf16.mxu0 0
      %2190 = vmatmul.mubr.bf16.gmra.mrb[0].mxu0 %v2042
      %v2191 = vpop.f32.mrb[0].mxu0
      %v2192 = vadd.f32 0.0, %v2191
      %v2193 = vpop.f32.mrb[0].mxu0
      %v2194 = vpop.f32.mrb[0].mxu0
      %v2195 = vadd.f32 0.0, %v2194
      %v2196 = vpop.f32.mrb[0].mxu0
      %2197 = vmatprep.mubr.bf16.mxu0 0
      %2198 = vmatmul.mubr.bf16.gmra.mrb[0].mxu0 %v2045
      %v2199 = vpop.f32.mrb[0].mxu0
      %v2200 = vadd.f32 0.0, %v2199
      %v2201 = vpop.f32.mrb[0].mxu0
      %v2202 = vpop.f32.mrb[0].mxu0
      %v2203 = vadd.f32 0.0, %v2202
      %v2204 = vpop.f32.mrb[0].mxu0
      %2205 = vmatprep.mubr.bf16.mxu0 0
      %2206 = vmatmul.mubr.bf16.gmra.mrb[0].mxu0 %v2048
      %v2207 = vpop.f32.mrb[0].mxu0
      %v2208 = vadd.f32 0.0, %v2207
      %v2209 = vpop.f32.mrb[0].mxu0
      %v2210 = vpop.f32.mrb[0].mxu0
      %v2211 = vadd.f32 0.0, %v2210
      %v2212 = vpop.f32.mrb[0].mxu0
      %2213 = vdwg.mxu0
      %v2214 = vadd.f32 %v1724, %v2088
      %v2215 = vadd.f32 %v1727, %v2091
      %v2216 = vadd.f32 %v1732, %v2096
      %v2217 = vadd.f32 %v1735, %v2099
      %v2218 = vadd.f32 %v1740, %v2104
      %v2219 = vadd.f32 %v1743, %v2107
      %v2220 = vadd.f32 %v1748, %v2112
      %v2221 = vadd.f32 %v1751, %v2115
      %v2222 = vadd.f32 %v1756, %v2120
      %v2223 = vadd.f32 %v1759, %v2123
      %v2224 = vadd.f32 %v1764, %v2128
      %v2225 = vadd.f32 %v1767, %v2131
      %v2226 = vadd.f32 %v1772, %v2136
      %v2227 = vadd.f32 %v1775, %v2139
      %v2228 = vadd.f32 %v1780, %v2144
      %v2229 = vadd.f32 %v1783, %v2147
      %v2230 = vadd.f32 %v1788, %v2152
      %v2231 = vadd.f32 %v1791, %v2155
      %v2232 = vadd.f32 %v1796, %v2160
      %v2233 = vadd.f32 %v1799, %v2163
      %v2234 = vadd.f32 %v1804, %v2168
      %v2235 = vadd.f32 %v1807, %v2171
      %v2236 = vadd.f32 %v1812, %v2176
      %v2237 = vadd.f32 %v1815, %v2179
      %v2238 = vadd.f32 %v1820, %v2184
      %v2239 = vadd.f32 %v1823, %v2187
      %v2240 = vadd.f32 %v1828, %v2192
      %v2241 = vadd.f32 %v1831, %v2195
      %v2242 = vadd.f32 %v1836, %v2200
      %v2243 = vadd.f32 %v1839, %v2203
      %v2244 = vadd.f32 %v1844, %v2208
      %v2245 = vadd.f32 %v1847, %v2211
      %v2246 = vpack.c.bf16 %v2215, %v2214
      %v2247 = vpack.c.bf16 %v2217, %v2216
      %v2248 = vpack.c.bf16 %v2219, %v2218
      %v2249 = vpack.c.bf16 %v2221, %v2220
      %v2250 = vpack.c.bf16 %v2223, %v2222
      %v2251 = vpack.c.bf16 %v2225, %v2224
      %v2252 = vpack.c.bf16 %v2227, %v2226
      %v2253 = vpack.c.bf16 %v2229, %v2228
      %v2254 = vpack.c.bf16 %v2231, %v2230
      %v2255 = vpack.c.bf16 %v2233, %v2232
      %v2256 = vpack.c.bf16 %v2235, %v2234
      %v2257 = vpack.c.bf16 %v2237, %v2236
      %v2258 = vpack.c.bf16 %v2239, %v2238
      %v2259 = vpack.c.bf16 %v2241, %v2240
      %v2260 = vpack.c.bf16 %v2243, %v2242
      %v2261 = vpack.c.bf16 %v2245, %v2244
      %v2278 = vunpack.c.l.b16 %v2246
      %v2279 = vunpack.c.h.b16 %v2246
      %v2280 = vunpack.c.l.b16 %v2247
      %v2281 = vunpack.c.h.b16 %v2247
      %v2282 = vunpack.c.l.b16 %v2248
      %v2283 = vunpack.c.h.b16 %v2248
      %v2284 = vunpack.c.l.b16 %v2249
      %v2285 = vunpack.c.h.b16 %v2249
      %v2286 = vunpack.c.l.b16 %v2250
      %v2287 = vunpack.c.h.b16 %v2250
      %v2288 = vunpack.c.l.b16 %v2251
      %v2289 = vunpack.c.h.b16 %v2251
      %v2290 = vunpack.c.l.b16 %v2252
      %v2291 = vunpack.c.h.b16 %v2252
      %v2292 = vunpack.c.l.b16 %v2253
      %v2293 = vunpack.c.h.b16 %v2253
      %v2294 = vunpack.c.l.b16 %v2254
      %v2295 = vunpack.c.h.b16 %v2254
      %v2296 = vunpack.c.l.b16 %v2255
      %v2297 = vunpack.c.h.b16 %v2255
      %v2298 = vunpack.c.l.b16 %v2256
      %v2299 = vunpack.c.h.b16 %v2256
      %v2300 = vunpack.c.l.b16 %v2257
      %v2301 = vunpack.c.h.b16 %v2257
      %v2302 = vunpack.c.l.b16 %v2258
      %v2303 = vunpack.c.h.b16 %v2258
      %v2304 = vunpack.c.l.b16 %v2259
      %v2305 = vunpack.c.h.b16 %v2259
      %v2306 = vunpack.c.l.b16 %v2260
      %v2307 = vunpack.c.h.b16 %v2260
      %v2308 = vunpack.c.l.b16 %v2261
      %v2309 = vunpack.c.h.b16 %v2261
      %v2310 = vpack.c.b16 %v2278, %v2278
      %v2311 = vpack.c.b16 %v2279, %v2279
      %v2312 = vpack.c.b16 %v2280, %v2280
      %v2313 = vpack.c.b16 %v2281, %v2281
      %v2314 = vpack.c.b16 %v2282, %v2282
      %v2315 = vpack.c.b16 %v2283, %v2283
      %v2316 = vpack.c.b16 %v2284, %v2284
      %v2317 = vpack.c.b16 %v2285, %v2285
      %v2318 = vpack.c.b16 %v2286, %v2286
      %v2319 = vpack.c.b16 %v2287, %v2287
      %v2320 = vpack.c.b16 %v2288, %v2288
      %v2321 = vpack.c.b16 %v2289, %v2289
      %v2322 = vpack.c.b16 %v2290, %v2290
      %v2323 = vpack.c.b16 %v2291, %v2291
      %v2324 = vpack.c.b16 %v2292, %v2292
      %v2325 = vpack.c.b16 %v2293, %v2293
      %v2326 = vpack.c.b16 %v2294, %v2294
      %v2327 = vpack.c.b16 %v2295, %v2295
      %v2328 = vpack.c.b16 %v2296, %v2296
      %v2329 = vpack.c.b16 %v2297, %v2297
      %v2330 = vpack.c.b16 %v2298, %v2298
      %v2331 = vpack.c.b16 %v2299, %v2299
      %v2332 = vpack.c.b16 %v2300, %v2300
      %v2333 = vpack.c.b16 %v2301, %v2301
      %v2334 = vpack.c.b16 %v2302, %v2302
      %v2335 = vpack.c.b16 %v2303, %v2303
      %v2336 = vpack.c.b16 %v2304, %v2304
      %v2337 = vpack.c.b16 %v2305, %v2305
      %v2338 = vpack.c.b16 %v2306, %v2306
      %v2339 = vpack.c.b16 %v2307, %v2307
      %v2340 = vpack.c.b16 %v2308, %v2308
      %v2341 = vpack.c.b16 %v2309, %v2309
      %vm2374 = vcmask 27648
      %2375 = vst.msk [vmem:[%s262] sm:$0xf] %vm2374, %v2310
      %2376 = vst.msk [vmem:[%s262 + $0x4] sm:$0xf] %vm2374, %v2311
      %2377 = vst.msk [vmem:[%s262 + $0x8] sm:$0xf] %vm2374, %v2312
      %2378 = vst.msk [vmem:[%s262 + $0xc] sm:$0xf] %vm2374, %v2313
      %2379 = vst.msk [vmem:[%s262 + $0x10] sm:$0xf] %vm2374, %v2314
      %2380 = vst.msk [vmem:[%s262 + $0x14] sm:$0xf] %vm2374, %v2315
      %2381 = vst.msk [vmem:[%s262 + $0x18] sm:$0xf] %vm2374, %v2316
      %2382 = vst.msk [vmem:[%s262 + $0x1c] sm:$0xf] %vm2374, %v2317
      %2383 = vst.msk [vmem:[%s262 + $0x20] sm:$0xf] %vm2374, %v2318
      %2384 = vst.msk [vmem:[%s262 + $0x24] sm:$0xf] %vm2374, %v2319
      %2385 = vst.msk [vmem:[%s262 + $0x28] sm:$0xf] %vm2374, %v2320
      %2386 = vst.msk [vmem:[%s262 + $0x2c] sm:$0xf] %vm2374, %v2321
      %2387 = vst.msk [vmem:[%s262 + $0x30] sm:$0xf] %vm2374, %v2322
      %2388 = vst.msk [vmem:[%s262 + $0x34] sm:$0xf] %vm2374, %v2323
      %2389 = vst.msk [vmem:[%s262 + $0x38] sm:$0xf] %vm2374, %v2324
      %2390 = vst.msk [vmem:[%s262 + $0x3c] sm:$0xf] %vm2374, %v2325
      %2391 = vst.msk [vmem:[%s262 + $0x40] sm:$0xf] %vm2374, %v2326
      %2392 = vst.msk [vmem:[%s262 + $0x44] sm:$0xf] %vm2374, %v2327
      %2393 = vst.msk [vmem:[%s262 + $0x48] sm:$0xf] %vm2374, %v2328
      %2394 = vst.msk [vmem:[%s262 + $0x4c] sm:$0xf] %vm2374, %v2329
      %2395 = vst.msk [vmem:[%s262 + $0x50] sm:$0xf] %vm2374, %v2330
      %2396 = vst.msk [vmem:[%s262 + $0x54] sm:$0xf] %vm2374, %v2331
      %2397 = vst.msk [vmem:[%s262 + $0x58] sm:$0xf] %vm2374, %v2332
      %2398 = vst.msk [vmem:[%s262 + $0x5c] sm:$0xf] %vm2374, %v2333
      %2399 = vst.msk [vmem:[%s262 + $0x60] sm:$0xf] %vm2374, %v2334
      %2400 = vst.msk [vmem:[%s262 + $0x64] sm:$0xf] %vm2374, %v2335
      %2401 = vst.msk [vmem:[%s262 + $0x68] sm:$0xf] %vm2374, %v2336
      %2402 = vst.msk [vmem:[%s262 + $0x6c] sm:$0xf] %vm2374, %v2337
      %2403 = vst.msk [vmem:[%s262 + $0x70] sm:$0xf] %vm2374, %v2338
      %2404 = vst.msk [vmem:[%s262 + $0x74] sm:$0xf] %vm2374, %v2339
      %2405 = vst.msk [vmem:[%s262 + $0x78] sm:$0xf] %vm2374, %v2340
      %2406 = vst.msk [vmem:[%s262 + $0x7c] sm:$0xf] %vm2374, %v2341
      %v2407 = vsel %vm1151, %v2214, 0.0
      %v2408 = vsel %vm1151, %v2215, 0.0
      %v2409 = vadd.f32 %v2407, %v2408
      %v2410 = vsel %vm1151, %v2216, 0.0
      %v2411 = vadd.f32 %v2409, %v2410
      %v2412 = vsel %vm1151, %v2217, 0.0
      %v2413 = vadd.f32 %v2411, %v2412
      %v2414 = vsel %vm1151, %v2218, 0.0
      %v2415 = vadd.f32 %v2413, %v2414
      %v2416 = vsel %vm1151, %v2219, 0.0
      %v2417 = vadd.f32 %v2415, %v2416
      %v2418 = vsel %vm1151, %v2220, 0.0
      %v2419 = vadd.f32 %v2417, %v2418
      %v2420 = vsel %vm1151, %v2221, 0.0
      %v2421 = vadd.f32 %v2419, %v2420
      %v2422 = vsel %vm1151, %v2222, 0.0
      %v2423 = vadd.f32 %v2421, %v2422
      %v2424 = vsel %vm1151, %v2223, 0.0
      %v2425 = vadd.f32 %v2423, %v2424
      %v2426 = vsel %vm1151, %v2224, 0.0
      %v2427 = vadd.f32 %v2425, %v2426
      %v2428 = vsel %vm1151, %v2225, 0.0
      %v2429 = vadd.f32 %v2427, %v2428
      %v2430 = vsel %vm1151, %v2226, 0.0
      %v2431 = vadd.f32 %v2429, %v2430
      %v2432 = vsel %vm1151, %v2227, 0.0
      %v2433 = vadd.f32 %v2431, %v2432
      %v2434 = vsel %vm1151, %v2228, 0.0
      %v2435 = vadd.f32 %v2433, %v2434
      %v2436 = vsel %vm1151, %v2229, 0.0
      %v2437 = vadd.f32 %v2435, %v2436
      %v2438 = vsel %vm1151, %v2230, 0.0
      %v2439 = vadd.f32 %v2437, %v2438
      %v2440 = vsel %vm1151, %v2231, 0.0
      %v2441 = vadd.f32 %v2439, %v2440
      %v2442 = vsel %vm1151, %v2232, 0.0
      %v2443 = vadd.f32 %v2441, %v2442
      %v2444 = vsel %vm1151, %v2233, 0.0
      %v2445 = vadd.f32 %v2443, %v2444
      %v2446 = vsel %vm1151, %v2234, 0.0
      %v2447 = vadd.f32 %v2445, %v2446
      %v2448 = vsel %vm1151, %v2235, 0.0
      %v2449 = vadd.f32 %v2447, %v2448
      %v2450 = vsel %vm1151, %v2236, 0.0
      %v2451 = vadd.f32 %v2449, %v2450
      %v2452 = vsel %vm1151, %v2237, 0.0
      %v2453 = vadd.f32 %v2451, %v2452
      %v2454 = vsel %vm1151, %v2238, 0.0
      %v2455 = vadd.f32 %v2453, %v2454
      %v2456 = vsel %vm1151, %v2239, 0.0
      %v2457 = vadd.f32 %v2455, %v2456
      %v2458 = vsel %vm1151, %v2240, 0.0
      %v2459 = vadd.f32 %v2457, %v2458
      %v2460 = vsel %vm1151, %v2241, 0.0
      %v2461 = vadd.f32 %v2459, %v2460
      %v2462 = vsel %vm1151, %v2242, 0.0
      %v2463 = vadd.f32 %v2461, %v2462
      %v2464 = vsel %vm1151, %v2243, 0.0
      %v2465 = vadd.f32 %v2463, %v2464
      %v2466 = vsel %vm1151, %v2244, 0.0
      %v2467 = vadd.f32 %v2465, %v2466
      %v2468 = vsel %vm1151, %v2245, 0.0
      %v2469 = vadd.f32 %v2467, %v2468
      %v2470 = vrot.slane %v2469, 4
      %v2471 = vadd.f32 %v2469, %v2470
      %v2472 = vrot.slane %v2471, 2
      %v2473 = vadd.f32 %v2471, %v2472
      %v2474 = vrot.slane %v2473, 1
      %v2475 = vadd.f32 %v2473, %v2474
      %vm2476 = vcmask 24576
      %2477 = vst.msk [vmem:[%s265] sm:$0x1] %vm2476, %v2475
      %v2478 = vmul.f32 %v2214, %v2214
      %v2479 = vmul.f32 %v2215, %v2215
      %v2480 = vmul.f32 %v2216, %v2216
      %v2481 = vmul.f32 %v2217, %v2217
      %v2482 = vmul.f32 %v2218, %v2218
      %v2483 = vmul.f32 %v2219, %v2219
      %v2484 = vmul.f32 %v2220, %v2220
      %v2485 = vmul.f32 %v2221, %v2221
      %v2486 = vmul.f32 %v2222, %v2222
      %v2487 = vmul.f32 %v2223, %v2223
      %v2488 = vmul.f32 %v2224, %v2224
      %v2489 = vmul.f32 %v2225, %v2225
      %v2490 = vmul.f32 %v2226, %v2226
      %v2491 = vmul.f32 %v2227, %v2227
      %v2492 = vmul.f32 %v2228, %v2228
      %v2493 = vmul.f32 %v2229, %v2229
      %v2494 = vmul.f32 %v2230, %v2230
      %v2495 = vmul.f32 %v2231, %v2231
      %v2496 = vmul.f32 %v2232, %v2232
      %v2497 = vmul.f32 %v2233, %v2233
      %v2498 = vmul.f32 %v2234, %v2234
      %v2499 = vmul.f32 %v2235, %v2235
      %v2500 = vmul.f32 %v2236, %v2236
      %v2501 = vmul.f32 %v2237, %v2237
      %v2502 = vmul.f32 %v2238, %v2238
      %v2503 = vmul.f32 %v2239, %v2239
      %v2504 = vmul.f32 %v2240, %v2240
      %v2505 = vmul.f32 %v2241, %v2241
      %v2506 = vmul.f32 %v2242, %v2242
      %v2507 = vmul.f32 %v2243, %v2243
      %v2508 = vmul.f32 %v2244, %v2244
      %v2509 = vmul.f32 %v2245, %v2245
      %v2510 = vsel %vm1151, %v2478, 0.0
      %v2511 = vsel %vm1151, %v2479, 0.0
      %v2512 = vadd.f32 %v2510, %v2511
      %v2513 = vsel %vm1151, %v2480, 0.0
      %v2514 = vadd.f32 %v2512, %v2513
      %v2515 = vsel %vm1151, %v2481, 0.0
      %v2516 = vadd.f32 %v2514, %v2515
      %v2517 = vsel %vm1151, %v2482, 0.0
      %v2518 = vadd.f32 %v2516, %v2517
      %v2519 = vsel %vm1151, %v2483, 0.0
      %v2520 = vadd.f32 %v2518, %v2519
      %v2521 = vsel %vm1151, %v2484, 0.0
      %v2522 = vadd.f32 %v2520, %v2521
      %v2523 = vsel %vm1151, %v2485, 0.0
      %v2524 = vadd.f32 %v2522, %v2523
      %v2525 = vsel %vm1151, %v2486, 0.0
      %v2526 = vadd.f32 %v2524, %v2525
      %v2527 = vsel %vm1151, %v2487, 0.0
      %v2528 = vadd.f32 %v2526, %v2527
      %v2529 = vsel %vm1151, %v2488, 0.0
      %v2530 = vadd.f32 %v2528, %v2529
      %v2531 = vsel %vm1151, %v2489, 0.0
      %v2532 = vadd.f32 %v2530, %v2531
      %v2533 = vsel %vm1151, %v2490, 0.0
      %v2534 = vadd.f32 %v2532, %v2533
      %v2535 = vsel %vm1151, %v2491, 0.0
      %v2536 = vadd.f32 %v2534, %v2535
      %v2537 = vsel %vm1151, %v2492, 0.0
      %v2538 = vadd.f32 %v2536, %v2537
      %v2539 = vsel %vm1151, %v2493, 0.0
      %v2540 = vadd.f32 %v2538, %v2539
      %v2541 = vsel %vm1151, %v2494, 0.0
      %v2542 = vadd.f32 %v2540, %v2541
      %v2543 = vsel %vm1151, %v2495, 0.0
      %v2544 = vadd.f32 %v2542, %v2543
      %v2545 = vsel %vm1151, %v2496, 0.0
      %v2546 = vadd.f32 %v2544, %v2545
      %v2547 = vsel %vm1151, %v2497, 0.0
      %v2548 = vadd.f32 %v2546, %v2547
      %v2549 = vsel %vm1151, %v2498, 0.0
      %v2550 = vadd.f32 %v2548, %v2549
      %v2551 = vsel %vm1151, %v2499, 0.0
      %v2552 = vadd.f32 %v2550, %v2551
      %v2553 = vsel %vm1151, %v2500, 0.0
      %v2554 = vadd.f32 %v2552, %v2553
      %v2555 = vsel %vm1151, %v2501, 0.0
      %v2556 = vadd.f32 %v2554, %v2555
      %v2557 = vsel %vm1151, %v2502, 0.0
      %v2558 = vadd.f32 %v2556, %v2557
      %v2559 = vsel %vm1151, %v2503, 0.0
      %v2560 = vadd.f32 %v2558, %v2559
      %v2561 = vsel %vm1151, %v2504, 0.0
      %v2562 = vadd.f32 %v2560, %v2561
      %v2563 = vsel %vm1151, %v2505, 0.0
      %v2564 = vadd.f32 %v2562, %v2563
      %v2565 = vsel %vm1151, %v2506, 0.0
      %v2566 = vadd.f32 %v2564, %v2565
      %v2567 = vsel %vm1151, %v2507, 0.0
      %v2568 = vadd.f32 %v2566, %v2567
      %v2569 = vsel %vm1151, %v2508, 0.0
      %v2570 = vadd.f32 %v2568, %v2569
      %v2571 = vsel %vm1151, %v2509, 0.0
      %v2572 = vadd.f32 %v2570, %v2571
      %v2573 = vrot.slane %v2572, 4
      %v2574 = vadd.f32 %v2572, %v2573
      %v2575 = vrot.slane %v2574, 2
      %v2576 = vadd.f32 %v2574, %v2575
      %v2577 = vrot.slane %v2576, 1
      %v2578 = vadd.f32 %v2576, %v2577
      %2579 = vst.msk [vmem:[%s268] sm:$0x1] %vm2476, %v2578
      %p2580 = scmp.lt.s32.totalorder %s18, 1
      %s2581 = scalar_select %p2580, %s18, 1
      %s2582 = smul.addr %s2581, 32
      %s2583 = smul.addr %s2582, 4
      %s2584 = scalar_lea.vmem %s4, %s2583
      %p2585 = scmp.lt.s32.totalorder %s18, 1
      %s2586 = scalar_select %p2585, %s18, 1
      %s2587 = scalar_lea.vmem %s5, %s2586
      %p2588 = scmp.lt.s32.totalorder %s18, 1
      %s2589 = scalar_select %p2588, %s18, 1
      %s2590 = scalar_lea.vmem %s6, %s2589
      // Predicated region
      $region37: #{residual_block.4} parent=35 // pred_check
        %p2591 = pneg %p125
      $region38: #{residual_block.4} parent=35 // pred_check_branch
        %2593 = sbr.rel (%p2591) target = $region40
      $region39: #{residual_block.4} parent=35 // pred_region
        _
      $region40: #{residual_block.4} parent=35 // pred_fallthru
        _
      // Predicated region
      $region41: #{residual_block.4} parent=35 // pred_check
        %p2594 = pneg %p151
      $region42: #{residual_block.4} parent=35 // pred_check_branch
        %2596 = sbr.rel (%p2594) target = $region44
      $region43: #{residual_block.4} parent=35 // pred_region
        _
      $region44: #{residual_block.4} parent=35 // pred_fallthru
        _
      // Predicated region
      $region45: #{residual_block.4} parent=35 // pred_check
        %p2597 = pneg %p177
      $region46: #{residual_block.4} parent=35 // pred_check_branch
        %2599 = sbr.rel (%p2597) target = $region48
      $region47: #{residual_block.4} parent=35 // pred_region
        _
      $region48: #{residual_block.4} parent=35 // pred_fallthru
        _
    $region36: #{residual_block.4} parent=5 // pred_fallthru
      _
    %p2600 = scmp.le.s32.totalorder 2, %s13
    // Predicated region
    $region49: #{residual_block.4} parent=5 // pred_check
      %p2601 = pneg %p2600
    $region50: #{residual_block.4} parent=5 // pred_check_branch
      %2603 = sbr.rel (%p2601) target = $region52
    $region51: #{residual_block.4} parent=5 // pred_region
      %s2604 = ssub.s32 %s13, 2
      // Predicated region
      $region53: #{residual_block.4} parent=51 // pred_check
        %p2605 = pneg %p131
      $region54: #{residual_block.4} parent=51 // pred_check_branch
        %2607 = sbr.rel (%p2605) target = $region56
      $region55: #{residual_block.4} parent=51 // pred_region
        %p2608 = scmp.lt.s32.totalorder %s19, 1
        %s2609 = scalar_select %p2608, %s19, 1
        %s2610 = smul.addr %s2609, 32
        %s2611 = smul.addr %s2610, 4
        %s2612 = scalar_lea.vmem %s4, %s2611
      $region56: #{residual_block.4} parent=51 // pred_fallthru
        _
      // Predicated region
      $region57: #{residual_block.4} parent=51 // pred_check
        %p2613 = pneg %p157
      $region58: #{residual_block.4} parent=51 // pred_check_branch
        %2615 = sbr.rel (%p2613) target = $region60
      $region59: #{residual_block.4} parent=51 // pred_region
        %p2616 = scmp.lt.s32.totalorder %s19, 1
        %s2617 = scalar_select %p2616, %s19, 1
        %s2618 = scalar_lea.vmem %s5, %s2617
      $region60: #{residual_block.4} parent=51 // pred_fallthru
        _
      // Predicated region
      $region61: #{residual_block.4} parent=51 // pred_check
        %p2619 = pneg %p183
      $region62: #{residual_block.4} parent=51 // pred_check_branch
        %2621 = sbr.rel (%p2619) target = $region64
      $region63: #{residual_block.4} parent=51 // pred_region
        %p2622 = scmp.lt.s32.totalorder %s19, 1
        %s2623 = scalar_select %p2622, %s19, 1
        %s2624 = scalar_lea.vmem %s6, %s2623
      $region64: #{residual_block.4} parent=51 // pred_fallthru
        _
    $region52: #{residual_block.4} parent=5 // pred_fallthru
      _
  $region6: #{residual_block.4} parent=0 // loop_footer
    %s17 = sadd.s32 1, %s13
  $region7: #{residual_block.4} parent=0 // loop_footer_branch
    %12 = sbr.rel target = $region3
  $region8: #{residual_block.4} parent=0 // loop_exit
    _

// kernel: residual_block.3
$region0: #{residual_block.3}
  #allocation0 [shape = 'u32[]', space=smem, size = 0x4, offset = 0x4, fixed_abs, tag = 'smem constant byte address 0x4 - core index']
  #allocation1 [shape = 'u32[144,128]{1,0:T(1,128)}', space=vmem, size = 0x12000, scoped, tag = 'internal scratch']
  %s0 = inlined_call_operand.vmem [shape: f32[2,256,4], index: 0, kind: input, shape index: {}]
  %s1 = inlined_call_operand.vmem [shape: bf16[3,12,4], index: 1, kind: input, shape index: {}]
  %s2 = inlined_call_operand.vmem [shape: bf16[2,256,4], index: 2, kind: output, shape index: {0}]
  %s3 = inlined_call_operand.vmem [shape: f32[2,1,4], index: 3, kind: output, shape index: {1}]
  %s4 = inlined_call_operand.vmem [shape: f32[2,1,4], index: 4, kind: output, shape index: {2}]
  %5 = xla_tuple %s2, %s3, %s4
  %s6 = sld [smem:[#allocation0]]
  $region57: #{residual_block.3} parent=0
    _
  %s8 = ssub.s32 1, %s6
  %s9 = scalar_select 0, %s8, %s6
  loop: start=0, step=1, limit=4
  $region2: #{residual_block.3} parent=0 // loop_pre_header
    _
  $region3: #{residual_block.3} parent=0 // loop_header
    %s11 = sphi 0, %s15
    %p12 = scmp.ge.s32.totalorder %s11, 4
    %s21 = sphi 0, %s23
    %s24 = sphi 0, %s21
    %s25 = sphi 0, %s24
    %s41 = sphi 0, %s25
    %s45 = sphi 0, %s45
    %s47 = sphi 0, %s45
    %s48 = sphi 0, %s47
    %s62 = sphi 0, %s48
    %s68 = sphi 0, %s70
    %s71 = sphi 0, %s68
    %s72 = sphi 0, %s71
    %s88 = sphi 0, %s72
    %s94 = sphi 0, %s96
    %s97 = sphi 0, %s94
    %s98 = sphi 0, %s97
    %s114 = sphi 0, %s98
    %s120 = sphi 0, %s122
    %s123 = sphi 0, %s120
    %s124 = sphi 0, %s123
    %s140 = sphi 0, %s124
  $region4: #{residual_block.3} parent=0 // loop_header_branch
    %14 = sbr.rel (%p12) target = $region8
  $region5: #{residual_block.3} parent=0 // loop_body
    %s16 = ssub.s32 %s11, 1
    %s17 = ssub.s32 %s11, 2
    %s18 = sadd.s32 %s11, 1
    %s19 = ssub.s32 %s11, %s18
    %p20 = scmp.eq.s32.totalorder %s19, 0
    %s22 = sadd.s32 %s21, 1
    %s23 = scalar_select %p20, %s21, %s22
    %p26 = pneg %p20
    %p27 = scmp.eq.s32.totalorder %s11, 1
    %p28 = por %p26, %p27
    %p29 = scmp.ne.s32.totalorder %s21, %s24
    %p30 = scmp.eq.s32.totalorder %s11, 0
    %p31 = por %p29, %p30
    %p32 = scmp.ne.s32.totalorder %s21, %s24
    %p33 = scmp.eq.s32.totalorder %s16, 1
    %p34 = por %p32, %p33
    %p35 = scmp.ne.s32.totalorder %s24, %s25
    %p36 = scmp.eq.s32.totalorder %s16, 0
    %p37 = por %p35, %p36
    %p38 = scmp.ne.s32.totalorder %s24, %s25
    %p39 = scmp.eq.s32.totalorder %s17, 1
    %p40 = por %p38, %p39
    %p42 = scmp.ne.s32.totalorder %s25, %s41
    %p43 = scmp.eq.s32.totalorder %s17, 0
    %p44 = por %p42, %p43
    %s46 = sadd.s32 %s45, 1
    %p49 = scmp.eq.s32.totalorder %s11, 1
    %p50 = scmp.ne.s32.totalorder %s45, %s47
    %p51 = scmp.eq.s32.totalorder %s11, 0
    %p52 = por %p50, %p51
    %p53 = scmp.ne.s32.totalorder %s45, %s47
    %p54 = scmp.eq.s32.totalorder %s16, 1
    %p55 = por %p53, %p54
    %p56 = scmp.ne.s32.totalorder %s47, %s48
    %p57 = scmp.eq.s32.totalorder %s16, 0
    %p58 = por %p56, %p57
    %p59 = scmp.ne.s32.totalorder %s47, %s48
    %p60 = scmp.eq.s32.totalorder %s17, 1
    %p61 = por %p59, %p60
    %p63 = scmp.ne.s32.totalorder %s48, %s62
    %p64 = scmp.eq.s32.totalorder %s17, 0
    %p65 = por %p63, %p64
    %s66 = ssub.s32 %s11, %s18
    %p67 = scmp.eq.s32.totalorder %s66, 0
    %s69 = sadd.s32 %s68, 1
    %s70 = scalar_select %p67, %s68, %s69
    %p73 = pneg %p67
    %p74 = scmp.eq.s32.totalorder %s11, 1
    %p75 = por %p73, %p74
    %p76 = scmp.ne.s32.totalorder %s68, %s71
    %p77 = scmp.eq.s32.totalorder %s11, 0
    %p78 = por %p76, %p77
    %p79 = scmp.ne.s32.totalorder %s68, %s71
    %p80 = scmp.eq.s32.totalorder %s16, 1
    %p81 = por %p79, %p80
    %p82 = scmp.ne.s32.totalorder %s71, %s72
    %p83 = scmp.eq.s32.totalorder %s16, 0
    %p84 = por %p82, %p83
    %p85 = scmp.ne.s32.totalorder %s71, %s72
    %p86 = scmp.eq.s32.totalorder %s17, 1
    %p87 = por %p85, %p86
    %p89 = scmp.ne.s32.totalorder %s72, %s88
    %p90 = scmp.eq.s32.totalorder %s17, 0
    %p91 = por %p89, %p90
    %s92 = ssub.s32 %s11, %s18
    %p93 = scmp.eq.s32.totalorder %s92, 0
    %s95 = sadd.s32 %s94, 1
    %s96 = scalar_select %p93, %s94, %s95
    %p99 = pneg %p93
    %p100 = scmp.eq.s32.totalorder %s11, 1
    %p101 = por %p99, %p100
    %p102 = scmp.ne.s32.totalorder %s94, %s97
    %p103 = scmp.eq.s32.totalorder %s11, 0
    %p104 = por %p102, %p103
    %p105 = scmp.ne.s32.totalorder %s94, %s97
    %p106 = scmp.eq.s32.totalorder %s16, 1
    %p107 = por %p105, %p106
    %p108 = scmp.ne.s32.totalorder %s97, %s98
    %p109 = scmp.eq.s32.totalorder %s16, 0
    %p110 = por %p108, %p109
    %p111 = scmp.ne.s32.totalorder %s97, %s98
    %p112 = scmp.eq.s32.totalorder %s17, 1
    %p113 = por %p111, %p112
    %p115 = scmp.ne.s32.totalorder %s98, %s114
    %p116 = scmp.eq.s32.totalorder %s17, 0
    %p117 = por %p115, %p116
    %s118 = ssub.s32 %s11, %s18
    %p119 = scmp.eq.s32.totalorder %s118, 0
    %s121 = sadd.s32 %s120, 1
    %s122 = scalar_select %p119, %s120, %s121
    %p125 = pneg %p119
    %p126 = scmp.eq.s32.totalorder %s11, 1
    %p127 = por %p125, %p126
    %p128 = scmp.ne.s32.totalorder %s120, %s123
    %p129 = scmp.eq.s32.totalorder %s11, 0
    %p130 = por %p128, %p129
    %p131 = scmp.ne.s32.totalorder %s120, %s123
    %p132 = scmp.eq.s32.totalorder %s16, 1
    %p133 = por %p131, %p132
    %p134 = scmp.ne.s32.totalorder %s123, %s124
    %p135 = scmp.eq.s32.totalorder %s16, 0
    %p136 = por %p134, %p135
    %p137 = scmp.ne.s32.totalorder %s123, %s124
    %p138 = scmp.eq.s32.totalorder %s17, 1
    %p139 = por %p137, %p138
    %p141 = scmp.ne.s32.totalorder %s124, %s140
    %p142 = scmp.eq.s32.totalorder %s17, 0
    %p143 = por %p141, %p142
    %p144 = scmp.le.s32.totalorder 1, %s11
    %p145 = scmp.lt.s32.totalorder %s11, 3
    %p146 = pnand %p144, %p145
    %p147 = pneg %p146
    // Predicated region
    $region9: #{residual_block.3} parent=5 // pred_check
      _
    $region10: #{residual_block.3} parent=5 // pred_check_branch
      %149 = sbr.rel (%p146) target = $region12
    $region11: #{residual_block.3} parent=5 // pred_region
      %s150 = ssub.s32 %s11, 1
      // Predicated region
      $region13: #{residual_block.3} parent=11 // pred_check
        %p151 = pneg %p58
      $region14: #{residual_block.3} parent=11 // pred_check_branch
        %153 = sbr.rel (%p151) target = $region16
      $region15: #{residual_block.3} parent=11 // pred_region
        _
      $region16: #{residual_block.3} parent=11 // pred_fallthru
        _
    $region12: #{residual_block.3} parent=5 // pred_fallthru
      _
    %p154 = scmp.lt.s32.totalorder %s11, 2
    // Predicated region
    $region17: #{residual_block.3} parent=5 // pred_check
      %p155 = pneg %p154
    $region18: #{residual_block.3} parent=5 // pred_check_branch
      %157 = sbr.rel (%p155) target = $region20
    $region19: #{residual_block.3} parent=5 // pred_region
      // Predicated region
      $region21: #{residual_block.3} parent=19 // pred_check
        %p158 = pneg %p31
      $region22: #{residual_block.3} parent=19 // pred_check_branch
        %160 = sbr.rel (%p158) target = $region24
      $region23: #{residual_block.3} parent=19 // pred_region
        %p161 = scmp.lt.s32.totalorder %s11, 1
        %s162 = scalar_select %p161, %s11, 1
        %s163 = smul.addr %s162, 32
        %s164 = smul.addr %s163, 8
        %s165 = scalar_lea.vmem %s0, %s164
      $region24: #{residual_block.3} parent=19 // pred_fallthru
        _
    $region20: #{residual_block.3} parent=5 // pred_fallthru
      _
    %p166 = scmp.le.s32.totalorder 1, %s11
    %p167 = scmp.lt.s32.totalorder %s11, 3
    %p168 = pnand %p166, %p167
    %p169 = pneg %p168
    // Predicated region
    $region25: #{residual_block.3} parent=5 // pred_check
      _
    $region26: #{residual_block.3} parent=5 // pred_check_branch
      %171 = sbr.rel (%p168) target = $region28
    $region27: #{residual_block.3} parent=5 // pred_region
      %s172 = ssub.s32 %s11, 1
      %p173 = scmp.lt.s32.totalorder %s16, 1
      %s174 = scalar_select %p173, %s16, 1
      %s175 = smul.addr %s174, 32
      %s176 = smul.addr %s175, 8
      %s177 = scalar_lea.vmem %s0, %s176
      %p178 = pneg %p37
      %p179 = pneg %p34
      %p180 = pneg %p58
      %p181 = pneg %p55
      %p182 = pneg %p84
      %p183 = pneg %p81
      %p184 = scmp.lt.s32.totalorder %s16, 1
      %s185 = scalar_select %p184, %s16, 1
      %s186 = smul.addr %s185, 32
      %s187 = smul.addr %s186, 4
      %s188 = scalar_lea.vmem %s2, %s187
      %p189 = pneg %p110
      %p190 = pneg %p107
      %p191 = scmp.lt.s32.totalorder %s16, 1
      %s192 = scalar_select %p191, %s16, 1
      %s193 = scalar_lea.vmem %s3, %s192
      %p194 = pneg %p136
      %p195 = pneg %p133
      %p196 = scmp.lt.s32.totalorder %s16, 1
      %s197 = scalar_select %p196, %s16, 1
      %s198 = scalar_lea.vmem %s4, %s197
      %p199 = scmp.lt.s32.totalorder %s16, 1
      %s200 = scalar_select %p199, %s16, 1
      %s201 = smul.addr %s200, 32
      %s202 = smul.addr %s201, 8
      %s203 = scalar_lea.vmem %s0, %s202
      %p204 = scmp.lt.s32.totalorder %s16, 1
      %s205 = scalar_select %p204, %s16, 1
      %s206 = smul.addr %s205, 32
      %s207 = smul.addr %s206, 4
      %s208 = scalar_lea.vmem %s2, %s207
      %p209 = scmp.lt.s32.totalorder %s16, 1
      %s210 = scalar_select %p209, %s16, 1
      %s211 = scalar_lea.vmem %s3, %s210
      %p212 = scmp.lt.s32.totalorder %s16, 1
      %s213 = scalar_select %p212, %s16, 1
      %s214 = scalar_lea.vmem %s4, %s213
      %v216 = vld [vmem:[%s203] sm:$0xff]
      %v217 = vld [vmem:[%s203 + $0x8] sm:$0xff]
      %v218 = vld [vmem:[%s203 + $0x10] sm:$0xff]
      %v219 = vld [vmem:[%s203 + $0x18] sm:$0xff]
      %v220 = vld [vmem:[%s203 + $0x20] sm:$0xff]
      %v221 = vld [vmem:[%s203 + $0x28] sm:$0xff]
      %v222 = vld [vmem:[%s203 + $0x30] sm:$0xff]
      %v223 = vld [vmem:[%s203 + $0x38] sm:$0xff]
      %v224 = vld [vmem:[%s203 + $0x40] sm:$0xff]
      %v225 = vld [vmem:[%s203 + $0x48] sm:$0xff]
      %v226 = vld [vmem:[%s203 + $0x50] sm:$0xff]
      %v227 = vld [vmem:[%s203 + $0x58] sm:$0xff]
      %v228 = vld [vmem:[%s203 + $0x60] sm:$0xff]
      %v229 = vld [vmem:[%s203 + $0x68] sm:$0xff]
      %v230 = vld [vmem:[%s203 + $0x70] sm:$0xff]
      %v231 = vld [vmem:[%s203 + $0x78] sm:$0xff]
      %v232 = vld [vmem:[%s203 + $0x80] sm:$0xff]
      %v233 = vld [vmem:[%s203 + $0x88] sm:$0xff]
      %v234 = vld [vmem:[%s203 + $0x90] sm:$0xff]
      %v235 = vld [vmem:[%s203 + $0x98] sm:$0xff]
      %v236 = vld [vmem:[%s203 + $0xa0] sm:$0xff]
      %v237 = vld [vmem:[%s203 + $0xa8] sm:$0xff]
      %v238 = vld [vmem:[%s203 + $0xb0] sm:$0xff]
      %v239 = vld [vmem:[%s203 + $0xb8] sm:$0xff]
      %v240 = vld [vmem:[%s203 + $0xc0] sm:$0xff]
      %v241 = vld [vmem:[%s203 + $0xc8] sm:$0xff]
      %v242 = vld [vmem:[%s203 + $0xd0] sm:$0xff]
      %v243 = vld [vmem:[%s203 + $0xd8] sm:$0xff]
      %v244 = vld [vmem:[%s203 + $0xe0] sm:$0xff]
      %v245 = vld [vmem:[%s203 + $0xe8] sm:$0xff]
      %v246 = vld [vmem:[%s203 + $0xf0] sm:$0xff]
      %v247 = vld [vmem:[%s203 + $0xf8] sm:$0xff]
      %v248 = vlaneseq
      %v249 = vshrl.u32 %v248, 7
      %v250 = vadd.s32 %v249, 8
      %v251 = vadd.s32 %v249, 16
      %v252 = vadd.s32 %v249, 24
      %v253 = vadd.s32 %v249, 32
      %v254 = vadd.s32 %v249, 40
      %v255 = vadd.s32 %v249, 48
      %v256 = vadd.s32 %v249, 56
      %v257 = vadd.s32 %v249, 64
      %v258 = vadd.s32 %v249, 72
      %v259 = vadd.s32 %v249, 80
      %v260 = vadd.s32 %v249, 88
      %v261 = vadd.s32 %v249, 96
      %v262 = vadd.s32 %v249, 104
      %v263 = vadd.s32 %v249, 112
      %v264 = vadd.s32 %v249, 120
      %v265 = vadd.s32 %v249, 128
      %v266 = vadd.s32 %v249, 136
      %v267 = vadd.s32 %v249, 144
      %v268 = vadd.s32 %v249, 152
      %v269 = vadd.s32 %v249, 160
      %v270 = vadd.s32 %v249, 168
      %v271 = vadd.s32 %v249, 176
      %v272 = vadd.s32 %v249, 184
      %v273 = vadd.s32 %v249, 192
      %v274 = vadd.s32 %v249, 200
      %v275 = vadd.s32 %v249, 208
      %v276 = vadd.s32 %v249, 216
      %v277 = vadd.s32 %v249, 224
      %v278 = vadd.s32 %v249, 232
      %v279 = vadd.s32 %v249, 240
      %v280 = vadd.s32 %v249, 248
      %v281 = vand.u32 %v249, 15
      %v282 = vand.u32 %v250, 15
      %v283 = vand.u32 %v251, 15
      %v284 = vand.u32 %v252, 15
      %v285 = vand.u32 %v253, 15
      %v286 = vand.u32 %v254, 15
      %v287 = vand.u32 %v255, 15
      %v288 = vand.u32 %v256, 15
      %v289 = vand.u32 %v257, 15
      %v290 = vand.u32 %v258, 15
      %v291 = vand.u32 %v259, 15
      %v292 = vand.u32 %v260, 15
      %v293 = vand.u32 %v261, 15
      %v294 = vand.u32 %v262, 15
      %v295 = vand.u32 %v263, 15
      %v296 = vand.u32 %v264, 15
      %v297 = vand.u32 %v265, 15
      %v298 = vand.u32 %v266, 15
      %v299 = vand.u32 %v267, 15
      %v300 = vand.u32 %v268, 15
      %v301 = vand.u32 %v269, 15
      %v302 = vand.u32 %v270, 15
      %v303 = vand.u32 %v271, 15
      %v304 = vand.u32 %v272, 15
      %v305 = vand.u32 %v273, 15
      %v306 = vand.u32 %v274, 15
      %v307 = vand.u32 %v275, 15
      %v308 = vand.u32 %v276, 15
      %v309 = vand.u32 %v277, 15
      %v310 = vand.u32 %v278, 15
      %v311 = vand.u32 %v279, 15
      %v312 = vand.u32 %v280, 15
      %vm313 = vcmp.lt.s32.totalorder %v281, 15
      %vm314 = vcmp.lt.s32.totalorder %v282, 15
      %vm315 = vcmp.lt.s32.totalorder %v283, 15
      %vm316 = vcmp.lt.s32.totalorder %v284, 15
      %vm317 = vcmp.lt.s32.totalorder %v285, 15
      %vm318 = vcmp.lt.s32.totalorder %v286, 15
      %vm319 = vcmp.lt.s32.totalorder %v287, 15
      %vm320 = vcmp.lt.s32.totalorder %v288, 15
      %vm321 = vcmp.lt.s32.totalorder %v289, 15
      %vm322 = vcmp.lt.s32.totalorder %v290, 15
      %vm323 = vcmp.lt.s32.totalorder %v291, 15
      %vm324 = vcmp.lt.s32.totalorder %v292, 15
      %vm325 = vcmp.lt.s32.totalorder %v293, 15
      %vm326 = vcmp.lt.s32.totalorder %v294, 15
      %vm327 = vcmp.lt.s32.totalorder %v295, 15
      %vm328 = vcmp.lt.s32.totalorder %v296, 15
      %vm329 = vcmp.lt.s32.totalorder %v297, 15
      %vm330 = vcmp.lt.s32.totalorder %v298, 15
      %vm331 = vcmp.lt.s32.totalorder %v299, 15
      %vm332 = vcmp.lt.s32.totalorder %v300, 15
      %vm333 = vcmp.lt.s32.totalorder %v301, 15
      %vm334 = vcmp.lt.s32.totalorder %v302, 15
      %vm335 = vcmp.lt.s32.totalorder %v303, 15
      %vm336 = vcmp.lt.s32.totalorder %v304, 15
      %vm337 = vcmp.lt.s32.totalorder %v305, 15
      %vm338 = vcmp.lt.s32.totalorder %v306, 15
      %vm339 = vcmp.lt.s32.totalorder %v307, 15
      %vm340 = vcmp.lt.s32.totalorder %v308, 15
      %vm341 = vcmp.lt.s32.totalorder %v309, 15
      %vm342 = vcmp.lt.s32.totalorder %v310, 15
      %vm343 = vcmp.lt.s32.totalorder %v311, 15
      %vm344 = vcmp.lt.s32.totalorder %v312, 15
      %v345 = vsel %vm313, 1, 0
      %v346 = vsel %vm314, 1, 0
      %v347 = vsel %vm315, 1, 0
      %v348 = vsel %vm316, 1, 0
      %v349 = vsel %vm317, 1, 0
      %v350 = vsel %vm318, 1, 0
      %v351 = vsel %vm319, 1, 0
      %v352 = vsel %vm320, 1, 0
      %v353 = vsel %vm321, 1, 0
      %v354 = vsel %vm322, 1, 0
      %v355 = vsel %vm323, 1, 0
      %v356 = vsel %vm324, 1, 0
      %v357 = vsel %vm325, 1, 0
      %v358 = vsel %vm326, 1, 0
      %v359 = vsel %vm327, 1, 0
      %v360 = vsel %vm328, 1, 0
      %v361 = vsel %vm329, 1, 0
      %v362 = vsel %vm330, 1, 0
      %v363 = vsel %vm331, 1, 0
      %v364 = vsel %vm332, 1, 0
      %v365 = vsel %vm333, 1, 0
      %v366 = vsel %vm334, 1, 0
      %v367 = vsel %vm335, 1, 0
      %v368 = vsel %vm336, 1, 0
      %v369 = vsel %vm337, 1, 0
      %v370 = vsel %vm338, 1, 0
      %v371 = vsel %vm339, 1, 0
      %v372 = vsel %vm340, 1, 0
      %v373 = vsel %vm341, 1, 0
      %v374 = vsel %vm342, 1, 0
      %v375 = vsel %vm343, 1, 0
      %v376 = vsel %vm344, 1, 0
      %vm377 = vcmp.eq.s32.totalorder %v345, 1
      %vm378 = vcmp.eq.s32.totalorder %v346, 1
      %vm379 = vcmp.eq.s32.totalorder %v347, 1
      %vm380 = vcmp.eq.s32.totalorder %v348, 1
      %vm381 = vcmp.eq.s32.totalorder %v349, 1
      %vm382 = vcmp.eq.s32.totalorder %v350, 1
      %vm383 = vcmp.eq.s32.totalorder %v351, 1
      %vm384 = vcmp.eq.s32.totalorder %v352, 1
      %vm385 = vcmp.eq.s32.totalorder %v353, 1
      %vm386 = vcmp.eq.s32.totalorder %v354, 1
      %vm387 = vcmp.eq.s32.totalorder %v355, 1
      %vm388 = vcmp.eq.s32.totalorder %v356, 1
      %vm389 = vcmp.eq.s32.totalorder %v357, 1
      %vm390 = vcmp.eq.s32.totalorder %v358, 1
      %vm391 = vcmp.eq.s32.totalorder %v359, 1
      %vm392 = vcmp.eq.s32.totalorder %v360, 1
      %vm393 = vcmp.eq.s32.totalorder %v361, 1
      %vm394 = vcmp.eq.s32.totalorder %v362, 1
      %vm395 = vcmp.eq.s32.totalorder %v363, 1
      %vm396 = vcmp.eq.s32.totalorder %v364, 1
      %vm397 = vcmp.eq.s32.totalorder %v365, 1
      %vm398 = vcmp.eq.s32.totalorder %v366, 1
      %vm399 = vcmp.eq.s32.totalorder %v367, 1
      %vm400 = vcmp.eq.s32.totalorder %v368, 1
      %vm401 = vcmp.eq.s32.totalorder %v369, 1
      %vm402 = vcmp.eq.s32.totalorder %v370, 1
      %vm403 = vcmp.eq.s32.totalorder %v371, 1
      %vm404 = vcmp.eq.s32.totalorder %v372, 1
      %vm405 = vcmp.eq.s32.totalorder %v373, 1
      %vm406 = vcmp.eq.s32.totalorder %v374, 1
      %vm407 = vcmp.eq.s32.totalorder %v375, 1
      %vm408 = vcmp.eq.s32.totalorder %v376, 1
      %v409 = vsel %vm377, %v216, 0.0
      %v410 = vsel %vm378, %v217, 0.0
      %v411 = vsel %vm379, %v218, 0.0
      %v412 = vsel %vm380, %v219, 0.0
      %v413 = vsel %vm381, %v220, 0.0
      %v414 = vsel %vm382, %v221, 0.0
      %v415 = vsel %vm383, %v222, 0.0
      %v416 = vsel %vm384, %v223, 0.0
      %v417 = vsel %vm385, %v224, 0.0
      %v418 = vsel %vm386, %v225, 0.0
      %v419 = vsel %vm387, %v226, 0.0
      %v420 = vsel %vm388, %v227, 0.0
      %v421 = vsel %vm389, %v228, 0.0
      %v422 = vsel %vm390, %v229, 0.0
      %v423 = vsel %vm391, %v230, 0.0
      %v424 = vsel %vm392, %v231, 0.0
      %v425 = vsel %vm393, %v232, 0.0
      %v426 = vsel %vm394, %v233, 0.0
      %v427 = vsel %vm395, %v234, 0.0
      %v428 = vsel %vm396, %v235, 0.0
      %v429 = vsel %vm397, %v236, 0.0
      %v430 = vsel %vm398, %v237, 0.0
      %v431 = vsel %vm399, %v238, 0.0
      %v432 = vsel %vm400, %v239, 0.0
      %v433 = vsel %vm401, %v240, 0.0
      %v434 = vsel %vm402, %v241, 0.0
      %v435 = vsel %vm403, %v242, 0.0
      %v436 = vsel %vm404, %v243, 0.0
      %v437 = vsel %vm405, %v244, 0.0
      %v438 = vsel %vm406, %v245, 0.0
      %v439 = vsel %vm407, %v246, 0.0
      %v440 = vsel %vm408, %v247, 0.0
      %v441 = vrot.slane %v409, 7
      %v442 = vrot.slane %v410, 7
      %v443 = vrot.slane %v411, 7
      %v444 = vrot.slane %v412, 7
      %v445 = vrot.slane %v413, 7
      %v446 = vrot.slane %v414, 7
      %v447 = vrot.slane %v415, 7
      %v448 = vrot.slane %v416, 7
      %v449 = vrot.slane %v417, 7
      %v450 = vrot.slane %v418, 7
      %v451 = vrot.slane %v419, 7
      %v452 = vrot.slane %v420, 7
      %v453 = vrot.slane %v421, 7
      %v454 = vrot.slane %v422, 7
      %v455 = vrot.slane %v423, 7
      %v456 = vrot.slane %v424, 7
      %v457 = vrot.slane %v425, 7
      %v458 = vrot.slane %v426, 7
      %v459 = vrot.slane %v427, 7
      %v460 = vrot.slane %v428, 7
      %v461 = vrot.slane %v429, 7
      %v462 = vrot.slane %v430, 7
      %v463 = vrot.slane %v431, 7
      %v464 = vrot.slane %v432, 7
      %v465 = vrot.slane %v433, 7
      %v466 = vrot.slane %v434, 7
      %v467 = vrot.slane %v435, 7
      %v468 = vrot.slane %v436, 7
      %v469 = vrot.slane %v437, 7
      %v470 = vrot.slane %v438, 7
      %v471 = vrot.slane %v439, 7
      %v472 = vrot.slane %v440, 7
      %vm473 = vcmp.lt.s32.totalorder %v249, 1
      %v474 = vsel %vm473, %v471, %v472
      %v475 = vsel %vm473, %v470, %v471
      %v476 = vsel %vm473, %v469, %v470
      %v477 = vsel %vm473, %v468, %v469
      %v478 = vsel %vm473, %v467, %v468
      %v479 = vsel %vm473, %v466, %v467
      %v480 = vsel %vm473, %v465, %v466
      %v481 = vsel %vm473, %v464, %v465
      %v482 = vsel %vm473, %v463, %v464
      %v483 = vsel %vm473, %v462, %v463
      %v484 = vsel %vm473, %v461, %v462
      %v485 = vsel %vm473, %v460, %v461
      %v486 = vsel %vm473, %v459, %v460
      %v487 = vsel %vm473, %v458, %v459
      %v488 = vsel %vm473, %v457, %v458
      %v489 = vsel %vm473, %v456, %v457
      %v490 = vsel %vm473, %v455, %v456
      %v491 = vsel %vm473, %v454, %v455
      %v492 = vsel %vm473, %v453, %v454
      %v493 = vsel %vm473, %v452, %v453
      %v494 = vsel %vm473, %v451, %v452
      %v495 = vsel %vm473, %v450, %v451
      %v496 = vsel %vm473, %v449, %v450
      %v497 = vsel %vm473, %v448, %v449
      %v498 = vsel %vm473, %v447, %v448
      %v499 = vsel %vm473, %v446, %v447
      %v500 = vsel %vm473, %v445, %v446
      %v501 = vsel %vm473, %v444, %v445
      %v502 = vsel %vm473, %v443, %v444
      %v503 = vsel %vm473, %v442, %v443
      %v504 = vsel %vm473, %v441, %v442
      %v505 = vsel %vm473, %v472, %v441
      %vm506 = vcmp.gt.s32.totalorder %v281, 0
      %vm507 = vcmp.gt.s32.totalorder %v282, 0
      %vm508 = vcmp.gt.s32.totalorder %v283, 0
      %vm509 = vcmp.gt.s32.totalorder %v284, 0
      %vm510 = vcmp.gt.s32.totalorder %v285, 0
      %vm511 = vcmp.gt.s32.totalorder %v286, 0
      %vm512 = vcmp.gt.s32.totalorder %v287, 0
      %vm513 = vcmp.gt.s32.totalorder %v288, 0
      %vm514 = vcmp.gt.s32.totalorder %v289, 0
      %vm515 = vcmp.gt.s32.totalorder %v290, 0
      %vm516 = vcmp.gt.s32.totalorder %v291, 0
      %vm517 = vcmp.gt.s32.totalorder %v292, 0
      %vm518 = vcmp.gt.s32.totalorder %v293, 0
      %vm519 = vcmp.gt.s32.totalorder %v294, 0
      %vm520 = vcmp.gt.s32.totalorder %v295, 0
      %vm521 = vcmp.gt.s32.totalorder %v296, 0
      %vm522 = vcmp.gt.s32.totalorder %v297, 0
      %vm523 = vcmp.gt.s32.totalorder %v298, 0
      %vm524 = vcmp.gt.s32.totalorder %v299, 0
      %vm525 = vcmp.gt.s32.totalorder %v300, 0
      %vm526 = vcmp.gt.s32.totalorder %v301, 0
      %vm527 = vcmp.gt.s32.totalorder %v302, 0
      %vm528 = vcmp.gt.s32.totalorder %v303, 0
      %vm529 = vcmp.gt.s32.totalorder %v304, 0
      %vm530 = vcmp.gt.s32.totalorder %v305, 0
      %vm531 = vcmp.gt.s32.totalorder %v306, 0
      %vm532 = vcmp.gt.s32.totalorder %v307, 0
      %vm533 = vcmp.gt.s32.totalorder %v308, 0
      %vm534 = vcmp.gt.s32.totalorder %v309, 0
      %vm535 = vcmp.gt.s32.totalorder %v310, 0
      %vm536 = vcmp.gt.s32.totalorder %v311, 0
      %vm537 = vcmp.gt.s32.totalorder %v312, 0
      %v538 = vsel %vm506, 1, 0
      %v539 = vsel %vm507, 1, 0
      %v540 = vsel %vm508, 1, 0
      %v541 = vsel %vm509, 1, 0
      %v542 = vsel %vm510, 1, 0
      %v543 = vsel %vm511, 1, 0
      %v544 = vsel %vm512, 1, 0
      %v545 = vsel %vm513, 1, 0
      %v546 = vsel %vm514, 1, 0
      %v547 = vsel %vm515, 1, 0
      %v548 = vsel %vm516, 1, 0
      %v549 = vsel %vm517, 1, 0
      %v550 = vsel %vm518, 1, 0
      %v551 = vsel %vm519, 1, 0
      %v552 = vsel %vm520, 1, 0
      %v553 = vsel %vm521, 1, 0
      %v554 = vsel %vm522, 1, 0
      %v555 = vsel %vm523, 1, 0
      %v556 = vsel %vm524, 1, 0
      %v557 = vsel %vm525, 1, 0
      %v558 = vsel %vm526, 1, 0
      %v559 = vsel %vm527, 1, 0
      %v560 = vsel %vm528, 1, 0
      %v561 = vsel %vm529, 1, 0
      %v562 = vsel %vm530, 1, 0
      %v563 = vsel %vm531, 1, 0
      %v564 = vsel %vm532, 1, 0
      %v565 = vsel %vm533, 1, 0
      %v566 = vsel %vm534, 1, 0
      %v567 = vsel %vm535, 1, 0
      %v568 = vsel %vm536, 1, 0
      %v569 = vsel %vm537, 1, 0
      %vm570 = vcmp.eq.s32.totalorder %v538, 1
      %vm571 = vcmp.eq.s32.totalorder %v539, 1
      %vm572 = vcmp.eq.s32.totalorder %v540, 1
      %vm573 = vcmp.eq.s32.totalorder %v541, 1
      %vm574 = vcmp.eq.s32.totalorder %v542, 1
      %vm575 = vcmp.eq.s32.totalorder %v543, 1
      %vm576 = vcmp.eq.s32.totalorder %v544, 1
      %vm577 = vcmp.eq.s32.totalorder %v545, 1
      %vm578 = vcmp.eq.s32.totalorder %v546, 1
      %vm579 = vcmp.eq.s32.totalorder %v547, 1
      %vm580 = vcmp.eq.s32.totalorder %v548, 1
      %vm581 = vcmp.eq.s32.totalorder %v549, 1
      %vm582 = vcmp.eq.s32.totalorder %v550, 1
      %vm583 = vcmp.eq.s32.totalorder %v551, 1
      %vm584 = vcmp.eq.s32.totalorder %v552, 1
      %vm585 = vcmp.eq.s32.totalorder %v553, 1
      %vm586 = vcmp.eq.s32.totalorder %v554, 1
      %vm587 = vcmp.eq.s32.totalorder %v555, 1
      %vm588 = vcmp.eq.s32.totalorder %v556, 1
      %vm589 = vcmp.eq.s32.totalorder %v557, 1
      %vm590 = vcmp.eq.s32.totalorder %v558, 1
      %vm591 = vcmp.eq.s32.totalorder %v559, 1
      %vm592 = vcmp.eq.s32.totalorder %v560, 1
      %vm593 = vcmp.eq.s32.totalorder %v561, 1
      %vm594 = vcmp.eq.s32.totalorder %v562, 1
      %vm595 = vcmp.eq.s32.totalorder %v563, 1
      %vm596 = vcmp.eq.s32.totalorder %v564, 1
      %vm597 = vcmp.eq.s32.totalorder %v565, 1
      %vm598 = vcmp.eq.s32.totalorder %v566, 1
      %vm599 = vcmp.eq.s32.totalorder %v567, 1
      %vm600 = vcmp.eq.s32.totalorder %v568, 1
      %vm601 = vcmp.eq.s32.totalorder %v569, 1
      %v602 = vsel %vm570, %v216, 0.0
      %v603 = vsel %vm571, %v217, 0.0
      %v604 = vsel %vm572, %v218, 0.0
      %v605 = vsel %vm573, %v219, 0.0
      %v606 = vsel %vm574, %v220, 0.0
      %v607 = vsel %vm575, %v221, 0.0
      %v608 = vsel %vm576, %v222, 0.0
      %v609 = vsel %vm577, %v223, 0.0
      %v610 = vsel %vm578, %v224, 0.0
      %v611 = vsel %vm579, %v225, 0.0
      %v612 = vsel %vm580, %v226, 0.0
      %v613 = vsel %vm581, %v227, 0.0
      %v614 = vsel %vm582, %v228, 0.0
      %v615 = vsel %vm583, %v229, 0.0
      %v616 = vsel %vm584, %v230, 0.0
      %v617 = vsel %vm585, %v231, 0.0
      %v618 = vsel %vm586, %v232, 0.0
      %v619 = vsel %vm587, %v233, 0.0
      %v620 = vsel %vm588, %v234, 0.0
      %v621 = vsel %vm589, %v235, 0.0
      %v622 = vsel %vm590, %v236, 0.0
      %v623 = vsel %vm591, %v237, 0.0
      %v624 = vsel %vm592, %v238, 0.0
      %v625 = vsel %vm593, %v239, 0.0
      %v626 = vsel %vm594, %v240, 0.0
      %v627 = vsel %vm595, %v241, 0.0
      %v628 = vsel %vm596, %v242, 0.0
      %v629 = vsel %vm597, %v243, 0.0
      %v630 = vsel %vm598, %v244, 0.0
      %v631 = vsel %vm599, %v245, 0.0
      %v632 = vsel %vm600, %v246, 0.0
      %v633 = vsel %vm601, %v247, 0.0
      %v634 = vrot.slane %v602, 1
      %v635 = vrot.slane %v603, 1
      %v636 = vrot.slane %v604, 1
      %v637 = vrot.slane %v605, 1
      %v638 = vrot.slane %v606, 1
      %v639 = vrot.slane %v607, 1
      %v640 = vrot.slane %v608, 1
      %v641 = vrot.slane %v609, 1
      %v642 = vrot.slane %v610, 1
      %v643 = vrot.slane %v611, 1
      %v644 = vrot.slane %v612, 1
      %v645 = vrot.slane %v613, 1
      %v646 = vrot.slane %v614, 1
      %v647 = vrot.slane %v615, 1
      %v648 = vrot.slane %v616, 1
      %v649 = vrot.slane %v617, 1
      %v650 = vrot.slane %v618, 1
      %v651 = vrot.slane %v619, 1
      %v652 = vrot.slane %v620, 1
      %v653 = vrot.slane %v621, 1
      %v654 = vrot.slane %v622, 1
      %v655 = vrot.slane %v623, 1
      %v656 = vrot.slane %v624, 1
      %v657 = vrot.slane %v625, 1
      %v658 = vrot.slane %v626, 1
      %v659 = vrot.slane %v627, 1
      %v660 = vrot.slane %v628, 1
      %v661 = vrot.slane %v629, 1
      %v662 = vrot.slane %v630, 1
      %v663 = vrot.slane %v631, 1
      %v664 = vrot.slane %v632, 1
      %v665 = vrot.slane %v633, 1
      %vm666 = vcmp.lt.s32.totalorder %v249, 7
      %v667 = vsel %vm666, %v664, %v665
      %v668 = vsel %vm666, %v663, %v664
      %v669 = vsel %vm666, %v662, %v663
      %v670 = vsel %vm666, %v661, %v662
      %v671 = vsel %vm666, %v660, %v661
      %v672 = vsel %vm666, %v659, %v660
      %v673 = vsel %vm666, %v658, %v659
      %v674 = vsel %vm666, %v657, %v658
      %v675 = vsel %vm666, %v656, %v657
      %v676 = vsel %vm666, %v655, %v656
      %v677 = vsel %vm666, %v654, %v655
      %v678 = vsel %vm666, %v653, %v654
      %v679 = vsel %vm666, %v652, %v653
      %v680 = vsel %vm666, %v651, %v652
      %v681 = vsel %vm666, %v650, %v651
      %v682 = vsel %vm666, %v649, %v650
      %v683 = vsel %vm666, %v648, %v649
      %v684 = vsel %vm666, %v647, %v648
      %v685 = vsel %vm666, %v646, %v647
      %v686 = vsel %vm666, %v645, %v646
      %v687 = vsel %vm666, %v644, %v645
      %v688 = vsel %vm666, %v643, %v644
      %v689 = vsel %vm666, %v642, %v643
      %v690 = vsel %vm666, %v641, %v642
      %v691 = vsel %vm666, %v640, %v641
      %v692 = vsel %vm666, %v639, %v640
      %v693 = vsel %vm666, %v638, %v639
      %v694 = vsel %vm666, %v637, %v638
      %v695 = vsel %vm666, %v636, %v637
      %v696 = vsel %vm666, %v635, %v636
      %v697 = vsel %vm666, %v634, %v635
      %v698 = vsel %vm666, %v665, %v634
      %731 = vrot.lane.b32.xlu0 %v216, 4
      %v732 = vpop.permute.xlu0 %731
      %733 = vrot.lane.b32.xlu0 %v217, 4
      %v734 = vpop.permute.xlu0 %733
      %735 = vrot.lane.b32.xlu0 %v218, 4
      %v736 = vpop.permute.xlu0 %735
      %737 = vrot.lane.b32.xlu0 %v219, 4
      %v738 = vpop.permute.xlu0 %737
      %739 = vrot.lane.b32.xlu0 %v220, 4
      %v740 = vpop.permute.xlu0 %739
      %741 = vrot.lane.b32.xlu0 %v221, 4
      %v742 = vpop.permute.xlu0 %741
      %743 = vrot.lane.b32.xlu0 %v222, 4
      %v744 = vpop.permute.xlu0 %743
      %745 = vrot.lane.b32.xlu0 %v223, 4
      %v746 = vpop.permute.xlu0 %745
      %747 = vrot.lane.b32.xlu0 %v224, 4
      %v748 = vpop.permute.xlu0 %747
      %749 = vrot.lane.b32.xlu0 %v225, 4
      %v750 = vpop.permute.xlu0 %749
      %751 = vrot.lane.b32.xlu0 %v226, 4
      %v752 = vpop.permute.xlu0 %751
      %753 = vrot.lane.b32.xlu0 %v227, 4
      %v754 = vpop.permute.xlu0 %753
      %755 = vrot.lane.b32.xlu0 %v228, 4
      %v756 = vpop.permute.xlu0 %755
      %757 = vrot.lane.b32.xlu0 %v229, 4
      %v758 = vpop.permute.xlu0 %757
      %759 = vrot.lane.b32.xlu0 %v230, 4
      %v760 = vpop.permute.xlu0 %759
      %761 = vrot.lane.b32.xlu0 %v231, 4
      %v762 = vpop.permute.xlu0 %761
      %763 = vrot.lane.b32.xlu0 %v232, 4
      %v764 = vpop.permute.xlu0 %763
      %765 = vrot.lane.b32.xlu0 %v233, 4
      %v766 = vpop.permute.xlu0 %765
      %767 = vrot.lane.b32.xlu0 %v234, 4
      %v768 = vpop.permute.xlu0 %767
      %769 = vrot.lane.b32.xlu0 %v235, 4
      %v770 = vpop.permute.xlu0 %769
      %771 = vrot.lane.b32.xlu0 %v236, 4
      %v772 = vpop.permute.xlu0 %771
      %773 = vrot.lane.b32.xlu0 %v237, 4
      %v774 = vpop.permute.xlu0 %773
      %775 = vrot.lane.b32.xlu0 %v238, 4
      %v776 = vpop.permute.xlu0 %775
      %777 = vrot.lane.b32.xlu0 %v239, 4
      %v778 = vpop.permute.xlu0 %777
      %779 = vrot.lane.b32.xlu0 %v240, 4
      %v780 = vpop.permute.xlu0 %779
      %781 = vrot.lane.b32.xlu0 %v241, 4
      %v782 = vpop.permute.xlu0 %781
      %783 = vrot.lane.b32.xlu0 %v242, 4
      %v784 = vpop.permute.xlu0 %783
      %785 = vrot.lane.b32.xlu0 %v243, 4
      %v786 = vpop.permute.xlu0 %785
      %787 = vrot.lane.b32.xlu0 %v244, 4
      %v788 = vpop.permute.xlu0 %787
      %789 = vrot.lane.b32.xlu0 %v245, 4
      %v790 = vpop.permute.xlu0 %789
      %791 = vrot.lane.b32.xlu0 %v246, 4
      %v792 = vpop.permute.xlu0 %791
      %793 = vrot.lane.b32.xlu0 %v247, 4
      %v794 = vpop.permute.xlu0 %793
      %859 = vrot.lane.b32.xlu0 %v697, 8
      %v860 = vpop.permute.xlu0 %859
      %861 = vrot.lane.b32.xlu0 %v696, 8
      %v862 = vpop.permute.xlu0 %861
      %863 = vrot.lane.b32.xlu0 %v695, 8
      %v864 = vpop.permute.xlu0 %863
      %865 = vrot.lane.b32.xlu0 %v694, 8
      %v866 = vpop.permute.xlu0 %865
      %867 = vrot.lane.b32.xlu0 %v693, 8
      %v868 = vpop.permute.xlu0 %867
      %869 = vrot.lane.b32.xlu0 %v692, 8
      %v870 = vpop.permute.xlu0 %869
      %871 = vrot.lane.b32.xlu0 %v691, 8
      %v872 = vpop.permute.xlu0 %871
      %873 = vrot.lane.b32.xlu0 %v690, 8
      %v874 = vpop.permute.xlu0 %873
      %875 = vrot.lane.b32.xlu0 %v689, 8
      %v876 = vpop.permute.xlu0 %875
      %877 = vrot.lane.b32.xlu0 %v688, 8
      %v878 = vpop.permute.xlu0 %877
      %879 = vrot.lane.b32.xlu0 %v687, 8
      %v880 = vpop.permute.xlu0 %879
      %881 = vrot.lane.b32.xlu0 %v686, 8
      %v882 = vpop.permute.xlu0 %881
      %883 = vrot.lane.b32.xlu0 %v685, 8
      %v884 = vpop.permute.xlu0 %883
      %885 = vrot.lane.b32.xlu0 %v684, 8
      %v886 = vpop.permute.xlu0 %885
      %887 = vrot.lane.b32.xlu0 %v683, 8
      %v888 = vpop.permute.xlu0 %887
      %889 = vrot.lane.b32.xlu0 %v682, 8
      %v890 = vpop.permute.xlu0 %889
      %891 = vrot.lane.b32.xlu0 %v681, 8
      %v892 = vpop.permute.xlu0 %891
      %893 = vrot.lane.b32.xlu0 %v680, 8
      %v894 = vpop.permute.xlu0 %893
      %895 = vrot.lane.b32.xlu0 %v679, 8
      %v896 = vpop.permute.xlu0 %895
      %897 = vrot.lane.b32.xlu0 %v678, 8
      %v898 = vpop.permute.xlu0 %897
      %899 = vrot.lane.b32.xlu0 %v677, 8
      %v900 = vpop.permute.xlu0 %899
      %901 = vrot.lane.b32.xlu0 %v676, 8
      %v902 = vpop.permute.xlu0 %901
      %903 = vrot.lane.b32.xlu0 %v675, 8
      %v904 = vpop.permute.xlu0 %903
      %905 = vrot.lane.b32.xlu0 %v674, 8
      %v906 = vpop.permute.xlu0 %905
      %907 = vrot.lane.b32.xlu0 %v673, 8
      %v908 = vpop.permute.xlu0 %907
      %909 = vrot.lane.b32.xlu0 %v672, 8
      %v910 = vpop.permute.xlu0 %909
      %911 = vrot.lane.b32.xlu0 %v671, 8
      %v912 = vpop.permute.xlu0 %911
      %913 = vrot.lane.b32.xlu0 %v670, 8
      %v914 = vpop.permute.xlu0 %913
      %915 = vrot.lane.b32.xlu0 %v669, 8
      %v916 = vpop.permute.xlu0 %915
      %917 = vrot.lane.b32.xlu0 %v668, 8
      %v918 = vpop.permute.xlu0 %917
      %919 = vrot.lane.b32.xlu0 %v667, 8
      %v920 = vpop.permute.xlu0 %919
      %921 = vrot.lane.b32.xlu0 %v698, 8
      %v922 = vpop.permute.xlu0 %921
      %vm955 = vcmask 31744
      %v956 = vsel %vm955, %v505, %v732
      %v957 = vsel %vm955, %v504, %v734
      %v958 = vsel %vm955, %v503, %v736
      %v959 = vsel %vm955, %v502, %v738
      %v960 = vsel %vm955, %v501, %v740
      %v961 = vsel %vm955, %v500, %v742
      %v962 = vsel %vm955, %v499, %v744
      %v963 = vsel %vm955, %v498, %v746
      %v964 = vsel %vm955, %v497, %v748
      %v965 = vsel %vm955, %v496, %v750
      %v966 = vsel %vm955, %v495, %v752
      %v967 = vsel %vm955, %v494, %v754
      %v968 = vsel %vm955, %v493, %v756
      %v969 = vsel %vm955, %v492, %v758
      %v970 = vsel %vm955, %v491, %v760
      %v971 = vsel %vm955, %v490, %v762
      %v972 = vsel %vm955, %v489, %v764
      %v973 = vsel %vm955, %v488, %v766
      %v974 = vsel %vm955, %v487, %v768
      %v975 = vsel %vm955, %v486, %v770
      %v976 = vsel %vm955, %v485, %v772
      %v977 = vsel %vm955, %v484, %v774
      %v978 = vsel %vm955, %v483, %v776
      %v979 = vsel %vm955, %v482, %v778
      %v980 = vsel %vm955, %v481, %v780
      %v981 = vsel %vm955, %v480, %v782
      %v982 = vsel %vm955, %v479, %v784
      %v983 = vsel %vm955, %v478, %v786
      %v984 = vsel %vm955, %v477, %v788
      %v985 = vsel %vm955, %v476, %v790
      %v986 = vsel %vm955, %v475, %v792
      %v987 = vsel %vm955, %v474, %v794
      %vm988 = vcmask 64512
      %v989 = vsel %vm988, %v956, %v860
      %v990 = vsel %vm988, %v957, %v862
      %v991 = vsel %vm988, %v958, %v864
      %v992 = vsel %vm988, %v959, %v866
      %v993 = vsel %vm988, %v960, %v868
      %v994 = vsel %vm988, %v961, %v870
      %v995 = vsel %vm988, %v962, %v872
      %v996 = vsel %vm988, %v963, %v874
      %v997 = vsel %vm988, %v964, %v876
      %v998 = vsel %vm988, %v965, %v878
      %v999 = vsel %vm988, %v966, %v880
      %v1000 = vsel %vm988, %v967, %v882
      %v1001 = vsel %vm988, %v968, %v884
      %v1002 = vsel %vm988, %v969, %v886
      %v1003 = vsel %vm988, %v970, %v888
      %v1004 = vsel %vm988, %v971, %v890
      %v1005 = vsel %vm988, %v972, %v892
      %v1006 = vsel %vm988, %v973, %v894
      %v1007 = vsel %vm988, %v974, %v896
      %v1008 = vsel %vm988, %v975, %v898
      %v1009 = vsel %vm988, %v976, %v900
      %v1010 = vsel %vm988, %v977, %v902
      %v1011 = vsel %vm988, %v978, %v904
      %v1012 = vsel %vm988, %v979, %v906
      %v1013 = vsel %vm988, %v980, %v908
      %v1014 = vsel %vm988, %v981, %v910
      %v1015 = vsel %vm988, %v982, %v912
      %v1016 = vsel %vm988, %v983, %v914
      %v1017 = vsel %vm988, %v984, %v916
      %v1018 = vsel %vm988, %v985, %v918
      %v1019 = vsel %vm988, %v986, %v920
      %v1020 = vsel %vm988, %v987, %v922
      %v1021 = vand.u32 %v249, 255
      %v1022 = vand.u32 %v250, 255
      %v1023 = vand.u32 %v251, 255
      %v1024 = vand.u32 %v252, 255
      %v1025 = vand.u32 %v253, 255
      %v1026 = vand.u32 %v254, 255
      %v1027 = vand.u32 %v255, 255
      %v1028 = vand.u32 %v256, 255
      %v1029 = vand.u32 %v257, 255
      %v1030 = vand.u32 %v258, 255
      %v1031 = vand.u32 %v259, 255
      %v1032 = vand.u32 %v260, 255
      %v1033 = vand.u32 %v261, 255
      %v1034 = vand.u32 %v262, 255
      %v1035 = vand.u32 %v263, 255
      %v1036 = vand.u32 %v264, 255
      %v1037 = vand.u32 %v265, 255
      %v1038 = vand.u32 %v266, 255
      %v1039 = vand.u32 %v267, 255
      %v1040 = vand.u32 %v268, 255
      %v1041 = vand.u32 %v269, 255
      %v1042 = vand.u32 %v270, 255
      %v1043 = vand.u32 %v271, 255
      %v1044 = vand.u32 %v272, 255
      %v1045 = vand.u32 %v273, 255
      %v1046 = vand.u32 %v274, 255
      %v1047 = vand.u32 %v275, 255
      %v1048 = vand.u32 %v276, 255
      %v1049 = vand.u32 %v277, 255
      %v1050 = vand.u32 %v278, 255
      %v1051 = vand.u32 %v279, 255
      %v1052 = vand.u32 %v280, 255
      %vm1053 = vcmp.ge.s32.totalorder %v1021, 16
      %vm1054 = vcmp.ge.s32.totalorder %v1022, 16
      %vm1055 = vcmp.ge.s32.totalorder %v1023, 16
      %vm1056 = vcmp.ge.s32.totalorder %v1024, 16
      %vm1057 = vcmp.ge.s32.totalorder %v1025, 16
      %vm1058 = vcmp.ge.s32.totalorder %v1026, 16
      %vm1059 = vcmp.ge.s32.totalorder %v1027, 16
      %vm1060 = vcmp.ge.s32.totalorder %v1028, 16
      %vm1061 = vcmp.ge.s32.totalorder %v1029, 16
      %vm1062 = vcmp.ge.s32.totalorder %v1030, 16
      %vm1063 = vcmp.ge.s32.totalorder %v1031, 16
      %vm1064 = vcmp.ge.s32.totalorder %v1032, 16
      %vm1065 = vcmp.ge.s32.totalorder %v1033, 16
      %vm1066 = vcmp.ge.s32.totalorder %v1034, 16
      %vm1067 = vcmp.ge.s32.totalorder %v1035, 16
      %vm1068 = vcmp.ge.s32.totalorder %v1036, 16
      %vm1069 = vcmp.ge.s32.totalorder %v1037, 16
      %vm1070 = vcmp.ge.s32.totalorder %v1038, 16
      %vm1071 = vcmp.ge.s32.totalorder %v1039, 16
      %vm1072 = vcmp.ge.s32.totalorder %v1040, 16
      %vm1073 = vcmp.ge.s32.totalorder %v1041, 16
      %vm1074 = vcmp.ge.s32.totalorder %v1042, 16
      %vm1075 = vcmp.ge.s32.totalorder %v1043, 16
      %vm1076 = vcmp.ge.s32.totalorder %v1044, 16
      %vm1077 = vcmp.ge.s32.totalorder %v1045, 16
      %vm1078 = vcmp.ge.s32.totalorder %v1046, 16
      %vm1079 = vcmp.ge.s32.totalorder %v1047, 16
      %vm1080 = vcmp.ge.s32.totalorder %v1048, 16
      %vm1081 = vcmp.ge.s32.totalorder %v1049, 16
      %vm1082 = vcmp.ge.s32.totalorder %v1050, 16
      %vm1083 = vcmp.ge.s32.totalorder %v1051, 16
      %vm1084 = vcmp.ge.s32.totalorder %v1052, 16
      %v1085 = vsel %vm1053, 1, 0
      %v1086 = vsel %vm1054, 1, 0
      %v1087 = vsel %vm1055, 1, 0
      %v1088 = vsel %vm1056, 1, 0
      %v1089 = vsel %vm1057, 1, 0
      %v1090 = vsel %vm1058, 1, 0
      %v1091 = vsel %vm1059, 1, 0
      %v1092 = vsel %vm1060, 1, 0
      %v1093 = vsel %vm1061, 1, 0
      %v1094 = vsel %vm1062, 1, 0
      %v1095 = vsel %vm1063, 1, 0
      %v1096 = vsel %vm1064, 1, 0
      %v1097 = vsel %vm1065, 1, 0
      %v1098 = vsel %vm1066, 1, 0
      %v1099 = vsel %vm1067, 1, 0
      %v1100 = vsel %vm1068, 1, 0
      %v1101 = vsel %vm1069, 1, 0
      %v1102 = vsel %vm1070, 1, 0
      %v1103 = vsel %vm1071, 1, 0
      %v1104 = vsel %vm1072, 1, 0
      %v1105 = vsel %vm1073, 1, 0
      %v1106 = vsel %vm1074, 1, 0
      %v1107 = vsel %vm1075, 1, 0
      %v1108 = vsel %vm1076, 1, 0
      %v1109 = vsel %vm1077, 1, 0
      %v1110 = vsel %vm1078, 1, 0
      %v1111 = vsel %vm1079, 1, 0
      %v1112 = vsel %vm1080, 1, 0
      %v1113 = vsel %vm1081, 1, 0
      %v1114 = vsel %vm1082, 1, 0
      %v1115 = vsel %vm1083, 1, 0
      %v1116 = vsel %vm1084, 1, 0
      %vm1117 = vcmp.eq.s32.totalorder %v1085, 1
      %vm1118 = vcmp.eq.s32.totalorder %v1086, 1
      %vm1119 = vcmp.eq.s32.totalorder %v1087, 1
      %vm1120 = vcmp.eq.s32.totalorder %v1088, 1
      %vm1121 = vcmp.eq.s32.totalorder %v1089, 1
      %vm1122 = vcmp.eq.s32.totalorder %v1090, 1
      %vm1123 = vcmp.eq.s32.totalorder %v1091, 1
      %vm1124 = vcmp.eq.s32.totalorder %v1092, 1
      %vm1125 = vcmp.eq.s32.totalorder %v1093, 1
      %vm1126 = vcmp.eq.s32.totalorder %v1094, 1
      %vm1127 = vcmp.eq.s32.totalorder %v1095, 1
      %vm1128 = vcmp.eq.s32.totalorder %v1096, 1
      %vm1129 = vcmp.eq.s32.totalorder %v1097, 1
      %vm1130 = vcmp.eq.s32.totalorder %v1098, 1
      %vm1131 = vcmp.eq.s32.totalorder %v1099, 1
      %vm1132 = vcmp.eq.s32.totalorder %v1100, 1
      %vm1133 = vcmp.eq.s32.totalorder %v1101, 1
      %vm1134 = vcmp.eq.s32.totalorder %v1102, 1
      %vm1135 = vcmp.eq.s32.totalorder %v1103, 1
      %vm1136 = vcmp.eq.s32.totalorder %v1104, 1
      %vm1137 = vcmp.eq.s32.totalorder %v1105, 1
      %vm1138 = vcmp.eq.s32.totalorder %v1106, 1
      %vm1139 = vcmp.eq.s32.totalorder %v1107, 1
      %vm1140 = vcmp.eq.s32.totalorder %v1108, 1
      %vm1141 = vcmp.eq.s32.totalorder %v1109, 1
      %vm1142 = vcmp.eq.s32.totalorder %v1110, 1
      %vm1143 = vcmp.eq.s32.totalorder %v1111, 1
      %vm1144 = vcmp.eq.s32.totalorder %v1112, 1
      %vm1145 = vcmp.eq.s32.totalorder %v1113, 1
      %vm1146 = vcmp.eq.s32.totalorder %v1114, 1
      %vm1147 = vcmp.eq.s32.totalorder %v1115, 1
      %vm1148 = vcmp.eq.s32.totalorder %v1116, 1
      %v1149 = vsel %vm1117, %v1019, 0.0
      %v1150 = vsel %vm1118, %v1020, 0.0
      %v1151 = vsel %vm1119, %v989, 0.0
      %v1152 = vsel %vm1120, %v990, 0.0
      %v1153 = vsel %vm1121, %v991, 0.0
      %v1154 = vsel %vm1122, %v992, 0.0
      %v1155 = vsel %vm1123, %v993, 0.0
      %v1156 = vsel %vm1124, %v994, 0.0
      %v1157 = vsel %vm1125, %v995, 0.0
      %v1158 = vsel %vm1126, %v996, 0.0
      %v1159 = vsel %vm1127, %v997, 0.0
      %v1160 = vsel %vm1128, %v998, 0.0
      %v1161 = vsel %vm1129, %v999, 0.0
      %v1162 = vsel %vm1130, %v1000, 0.0
      %v1163 = vsel %vm1131, %v1001, 0.0
      %v1164 = vsel %vm1132, %v1002, 0.0
      %v1165 = vsel %vm1133, %v1003, 0.0
      %v1166 = vsel %vm1134, %v1004, 0.0
      %v1167 = vsel %vm1135, %v1005, 0.0
      %v1168 = vsel %vm1136, %v1006, 0.0
      %v1169 = vsel %vm1137, %v1007, 0.0
      %v1170 = vsel %vm1138, %v1008, 0.0
      %v1171 = vsel %vm1139, %v1009, 0.0
      %v1172 = vsel %vm1140, %v1010, 0.0
      %v1173 = vsel %vm1141, %v1011, 0.0
      %v1174 = vsel %vm1142, %v1012, 0.0
      %v1175 = vsel %vm1143, %v1013, 0.0
      %v1176 = vsel %vm1144, %v1014, 0.0
      %v1177 = vsel %vm1145, %v1015, 0.0
      %v1178 = vsel %vm1146, %v1016, 0.0
      %v1179 = vsel %vm1147, %v1017, 0.0
      %v1180 = vsel %vm1148, %v1018, 0.0
      %v1181 = vpack.c.bf16 %v1150, %v1149
      %v1182 = vpack.c.bf16 %v1152, %v1151
      %v1183 = vpack.c.bf16 %v1154, %v1153
      %v1184 = vpack.c.bf16 %v1156, %v1155
      %v1185 = vpack.c.bf16 %v1158, %v1157
      %v1186 = vpack.c.bf16 %v1160, %v1159
      %v1187 = vpack.c.bf16 %v1162, %v1161
      %v1188 = vpack.c.bf16 %v1164, %v1163
      %v1189 = vpack.c.bf16 %v1166, %v1165
      %v1190 = vpack.c.bf16 %v1168, %v1167
      %v1191 = vpack.c.bf16 %v1170, %v1169
      %v1192 = vpack.c.bf16 %v1172, %v1171
      %v1193 = vpack.c.bf16 %v1174, %v1173
      %v1194 = vpack.c.bf16 %v1176, %v1175
      %v1195 = vpack.c.bf16 %v1178, %v1177
      %v1196 = vpack.c.bf16 %v1180, %v1179
      %v1197 = vld [vmem:[%s1] sm:$0xf]
      %v1198 = vld [vmem:[%s1 + $0x4] sm:$0x3]
      %v1199 = vpack.c.bf16 %v990, %v989
      %v1200 = vpack.c.bf16 %v992, %v991
      %v1201 = vpack.c.bf16 %v994, %v993
      %v1202 = vpack.c.bf16 %v996, %v995
      %v1203 = vpack.c.bf16 %v998, %v997
      %v1204 = vpack.c.bf16 %v1000, %v999
      %v1205 = vpack.c.bf16 %v1002, %v1001
      %v1206 = vpack.c.bf16 %v1004, %v1003
      %v1207 = vpack.c.bf16 %v1006, %v1005
      %v1208 = vpack.c.bf16 %v1008, %v1007
      %v1209 = vpack.c.bf16 %v1010, %v1009
      %v1210 = vpack.c.bf16 %v1012, %v1011
      %v1211 = vpack.c.bf16 %v1014, %v1013
      %v1212 = vpack.c.bf16 %v1016, %v1015
      %v1213 = vpack.c.bf16 %v1018, %v1017
      %v1214 = vpack.c.bf16 %v1020, %v1019
      %s1215 = scalar_lea.vmem %s1, 8
      %v1216 = vld [vmem:[%s1215] sm:$0xf]
      %v1217 = vld [vmem:[%s1215 + $0x4] sm:$0x3]
      %v1220 = vunpack.c.l.b16 %v1216
      %v1221 = vunpack.c.l.b16 %v1217
      %v1222 = vpack.c.b16 %v1221, %v1220
      %vm1223 = vcmask 97280
      %v1225 = vsel %vm1223, %v1199, 0
      %v1228 = vsel %vm1223, %v1200, 0
      %v1231 = vsel %vm1223, %v1201, 0
      %v1234 = vsel %vm1223, %v1202, 0
      %v1237 = vsel %vm1223, %v1203, 0
      %v1240 = vsel %vm1223, %v1204, 0
      %v1243 = vsel %vm1223, %v1205, 0
      %v1246 = vsel %vm1223, %v1206, 0
      %v1249 = vsel %vm1223, %v1207, 0
      %v1252 = vsel %vm1223, %v1208, 0
      %v1255 = vsel %vm1223, %v1209, 0
      %v1258 = vsel %vm1223, %v1210, 0
      %v1261 = vsel %vm1223, %v1211, 0
      %v1264 = vsel %vm1223, %v1212, 0
      %v1267 = vsel %vm1223, %v1213, 0
      %v1270 = vsel %vm1223, %v1214, 0
      %vm1272 = vcmask 1045504
      %v1274 = vsel %vm1272, %v1222, 0
      %1276 = vmatprep.subr.bf16.mxu0 0
      %1277 = vmatpush1.bf16.msra.mxu0 %v1274
      %1278 = vmatprep.subr.bf16.mxu0 0
      %1279 = vmatpush1.bf16.msra.mxu0 0
      %1280 = vmatprep.subr.bf16.mxu0 0
      %1281 = vmatpush1.bf16.msra.mxu0 0
      %1282 = vmatprep.subr.bf16.mxu0 0
      %1283 = vmatpush1.bf16.msra.mxu0 0
      %1284 = vmatprep.subr.bf16.mxu0 0
      %1285 = vmatpush1.bf16.msra.mxu0 0
      %1286 = vmatprep.subr.bf16.mxu0 0
      %1287 = vmatpush1.bf16.msra.mxu0 0
      %1288 = vmatprep.subr.bf16.mxu0 0
      %1289 = vmatpush1.bf16.msra.mxu0 0
      %1290 = vmatprep.subr.bf16.mxu0 0
      %1291 = vmatpush1.bf16.msra.mxu0 0
      %1292 = vmatprep.subr.bf16.mxu0 0
      %1293 = vmatpush1.bf16.msra.mxu0 0
      %1294 = vmatprep.subr.bf16.mxu0 0
      %1295 = vmatpush1.bf16.msra.mxu0 0
      %1296 = vmatprep.subr.bf16.mxu0 0
      %1297 = vmatpush1.bf16.msra.mxu0 0
      %1298 = vmatprep.subr.bf16.mxu0 0
      %1299 = vmatpush1.bf16.msra.mxu0 0
      %1300 = vmatprep.subr.bf16.mxu0 0
      %1301 = vmatpush1.bf16.msra.mxu0 0
      %1302 = vmatprep.subr.bf16.mxu0 0
      %1303 = vmatpush1.bf16.msra.mxu0 0
      %1304 = vmatprep.subr.bf16.mxu0 0
      %1305 = vmatpush1.bf16.msra.mxu0 0
      %1306 = vmatprep.subr.bf16.mxu0 0
      %1307 = vmatpush1.bf16.msra.mxu0 0
      %1308 = vmatprep.mubr.bf16.mxu0 0
      %1309 = vmatmul.mubr.bf16.gmra.mrb[0].mxu0 %v1225
      %v1310 = vpop.f32.mrb[0].mxu0
      %v1311 = vadd.f32 0.0, %v1310
      %v1312 = vpop.f32.mrb[0].mxu0
      %v1313 = vpop.f32.mrb[0].mxu0
      %v1314 = vadd.f32 0.0, %v1313
      %v1315 = vpop.f32.mrb[0].mxu0
      %1316 = vmatprep.mubr.bf16.mxu0 0
      %1317 = vmatmul.mubr.bf16.gmra.mrb[0].mxu0 %v1228
      %v1318 = vpop.f32.mrb[0].mxu0
      %v1319 = vadd.f32 0.0, %v1318
      %v1320 = vpop.f32.mrb[0].mxu0
      %v1321 = vpop.f32.mrb[0].mxu0
      %v1322 = vadd.f32 0.0, %v1321
      %v1323 = vpop.f32.mrb[0].mxu0
      %1324 = vmatprep.mubr.bf16.mxu0 0
      %1325 = vmatmul.mubr.bf16.gmra.mrb[0].mxu0 %v1231
      %v1326 = vpop.f32.mrb[0].mxu0
      %v1327 = vadd.f32 0.0, %v1326
      %v1328 = vpop.f32.mrb[0].mxu0
      %v1329 = vpop.f32.mrb[0].mxu0
      %v1330 = vadd.f32 0.0, %v1329
      %v1331 = vpop.f32.mrb[0].mxu0
      %1332 = vmatprep.mubr.bf16.mxu0 0
      %1333 = vmatmul.mubr.bf16.gmra.mrb[0].mxu0 %v1234
      %v1334 = vpop.f32.mrb[0].mxu0
      %v1335 = vadd.f32 0.0, %v1334
      %v1336 = vpop.f32.mrb[0].mxu0
      %v1337 = vpop.f32.mrb[0].mxu0
      %v1338 = vadd.f32 0.0, %v1337
      %v1339 = vpop.f32.mrb[0].mxu0
      %1340 = vmatprep.mubr.bf16.mxu0 0
      %1341 = vmatmul.mubr.bf16.gmra.mrb[0].mxu0 %v1237
      %v1342 = vpop.f32.mrb[0].mxu0
      %v1343 = vadd.f32 0.0, %v1342
      %v1344 = vpop.f32.mrb[0].mxu0
      %v1345 = vpop.f32.mrb[0].mxu0
      %v1346 = vadd.f32 0.0, %v1345
      %v1347 = vpop.f32.mrb[0].mxu0
      %1348 = vmatprep.mubr.bf16.mxu0 0
      %1349 = vmatmul.mubr.bf16.gmra.mrb[0].mxu0 %v1240
      %v1350 = vpop.f32.mrb[0].mxu0
      %v1351 = vadd.f32 0.0, %v1350
      %v1352 = vpop.f32.mrb[0].mxu0
      %v1353 = vpop.f32.mrb[0].mxu0
      %v1354 = vadd.f32 0.0, %v1353
      %v1355 = vpop.f32.mrb[0].mxu0
      %1356 = vmatprep.mubr.bf16.mxu0 0
      %1357 = vmatmul.mubr.bf16.gmra.mrb[0].mxu0 %v1243
      %v1358 = vpop.f32.mrb[0].mxu0
      %v1359 = vadd.f32 0.0, %v1358
      %v1360 = vpop.f32.mrb[0].mxu0
      %v1361 = vpop.f32.mrb[0].mxu0
      %v1362 = vadd.f32 0.0, %v1361
      %v1363 = vpop.f32.mrb[0].mxu0
      %1364 = vmatprep.mubr.bf16.mxu0 0
      %1365 = vmatmul.mubr.bf16.gmra.mrb[0].mxu0 %v1246
      %v1366 = vpop.f32.mrb[0].mxu0
      %v1367 = vadd.f32 0.0, %v1366
      %v1368 = vpop.f32.mrb[0].mxu0
      %v1369 = vpop.f32.mrb[0].mxu0
      %v1370 = vadd.f32 0.0, %v1369
      %v1371 = vpop.f32.mrb[0].mxu0
      %1372 = vmatprep.mubr.bf16.mxu0 0
      %1373 = vmatmul.mubr.bf16.gmra.mrb[0].mxu0 %v1249
      %v1374 = vpop.f32.mrb[0].mxu0
      %v1375 = vadd.f32 0.0, %v1374
      %v1376 = vpop.f32.mrb[0].mxu0
      %v1377 = vpop.f32.mrb[0].mxu0
      %v1378 = vadd.f32 0.0, %v1377
      %v1379 = vpop.f32.mrb[0].mxu0
      %1380 = vmatprep.mubr.bf16.mxu0 0
      %1381 = vmatmul.mubr.bf16.gmra.mrb[0].mxu0 %v1252
      %v1382 = vpop.f32.mrb[0].mxu0
      %v1383 = vadd.f32 0.0, %v1382
      %v1384 = vpop.f32.mrb[0].mxu0
      %v1385 = vpop.f32.mrb[0].mxu0
      %v1386 = vadd.f32 0.0, %v1385
      %v1387 = vpop.f32.mrb[0].mxu0
      %1388 = vmatprep.mubr.bf16.mxu0 0
      %1389 = vmatmul.mubr.bf16.gmra.mrb[0].mxu0 %v1255
      %v1390 = vpop.f32.mrb[0].mxu0
      %v1391 = vadd.f32 0.0, %v1390
      %v1392 = vpop.f32.mrb[0].mxu0
      %v1393 = vpop.f32.mrb[0].mxu0
      %v1394 = vadd.f32 0.0, %v1393
      %v1395 = vpop.f32.mrb[0].mxu0
      %1396 = vmatprep.mubr.bf16.mxu0 0
      %1397 = vmatmul.mubr.bf16.gmra.mrb[0].mxu0 %v1258
      %v1398 = vpop.f32.mrb[0].mxu0
      %v1399 = vadd.f32 0.0, %v1398
      %v1400 = vpop.f32.mrb[0].mxu0
      %v1401 = vpop.f32.mrb[0].mxu0
      %v1402 = vadd.f32 0.0, %v1401
      %v1403 = vpop.f32.mrb[0].mxu0
      %1404 = vmatprep.mubr.bf16.mxu0 0
      %1405 = vmatmul.mubr.bf16.gmra.mrb[0].mxu0 %v1261
      %v1406 = vpop.f32.mrb[0].mxu0
      %v1407 = vadd.f32 0.0, %v1406
      %v1408 = vpop.f32.mrb[0].mxu0
      %v1409 = vpop.f32.mrb[0].mxu0
      %v1410 = vadd.f32 0.0, %v1409
      %v1411 = vpop.f32.mrb[0].mxu0
      %1412 = vmatprep.mubr.bf16.mxu0 0
      %1413 = vmatmul.mubr.bf16.gmra.mrb[0].mxu0 %v1264
      %v1414 = vpop.f32.mrb[0].mxu0
      %v1415 = vadd.f32 0.0, %v1414
      %v1416 = vpop.f32.mrb[0].mxu0
      %v1417 = vpop.f32.mrb[0].mxu0
      %v1418 = vadd.f32 0.0, %v1417
      %v1419 = vpop.f32.mrb[0].mxu0
      %1420 = vmatprep.mubr.bf16.mxu0 0
      %1421 = vmatmul.mubr.bf16.gmra.mrb[0].mxu0 %v1267
      %v1422 = vpop.f32.mrb[0].mxu0
      %v1423 = vadd.f32 0.0, %v1422
      %v1424 = vpop.f32.mrb[0].mxu0
      %v1425 = vpop.f32.mrb[0].mxu0
      %v1426 = vadd.f32 0.0, %v1425
      %v1427 = vpop.f32.mrb[0].mxu0
      %1428 = vmatprep.mubr.bf16.mxu0 0
      %1429 = vmatmul.mubr.bf16.gmra.mrb[0].mxu0 %v1270
      %v1430 = vpop.f32.mrb[0].mxu0
      %v1431 = vadd.f32 0.0, %v1430
      %v1432 = vpop.f32.mrb[0].mxu0
      %v1433 = vpop.f32.mrb[0].mxu0
      %v1434 = vadd.f32 0.0, %v1433
      %v1435 = vpop.f32.mrb[0].mxu0
      %1436 = vdwg.mxu0
      %v1439 = vunpack.c.l.b16 %v1197
      %v1440 = vunpack.c.l.b16 %v1198
      %v1441 = vpack.c.b16 %v1440, %v1439
      %v1443 = vsel %vm1223, %v1181, 0
      %v1446 = vsel %vm1223, %v1182, 0
      %v1449 = vsel %vm1223, %v1183, 0
      %v1452 = vsel %vm1223, %v1184, 0
      %v1455 = vsel %vm1223, %v1185, 0
      %v1458 = vsel %vm1223, %v1186, 0
      %v1461 = vsel %vm1223, %v1187, 0
      %v1464 = vsel %vm1223, %v1188, 0
      %v1467 = vsel %vm1223, %v1189, 0
      %v1470 = vsel %vm1223, %v1190, 0
      %v1473 = vsel %vm1223, %v1191, 0
      %v1476 = vsel %vm1223, %v1192, 0
      %v1479 = vsel %vm1223, %v1193, 0
      %v1482 = vsel %vm1223, %v1194, 0
      %v1485 = vsel %vm1223, %v1195, 0
      %v1488 = vsel %vm1223, %v1196, 0
      %v1491 = vsel %vm1272, %v1441, 0
      %1493 = vmatprep.subr.bf16.mxu0 0
      %1494 = vmatpush1.bf16.msra.mxu0 %v1491
      %1495 = vmatprep.subr.bf16.mxu0 0
      %1496 = vmatpush1.bf16.msra.mxu0 0
      %1497 = vmatprep.subr.bf16.mxu0 0
      %1498 = vmatpush1.bf16.msra.mxu0 0
      %1499 = vmatprep.subr.bf16.mxu0 0
      %1500 = vmatpush1.bf16.msra.mxu0 0
      %1501 = vmatprep.subr.bf16.mxu0 0
      %1502 = vmatpush1.bf16.msra.mxu0 0
      %1503 = vmatprep.subr.bf16.mxu0 0
      %1504 = vmatpush1.bf16.msra.mxu0 0
      %1505 = vmatprep.subr.bf16.mxu0 0
      %1506 = vmatpush1.bf16.msra.mxu0 0
      %1507 = vmatprep.subr.bf16.mxu0 0
      %1508 = vmatpush1.bf16.msra.mxu0 0
      %1509 = vmatprep.subr.bf16.mxu0 0
      %1510 = vmatpush1.bf16.msra.mxu0 0
      %1511 = vmatprep.subr.bf16.mxu0 0
      %1512 = vmatpush1.bf16.msra.mxu0 0
      %1513 = vmatprep.subr.bf16.mxu0 0
      %1514 = vmatpush1.bf16.msra.mxu0 0
      %1515 = vmatprep.subr.bf16.mxu0 0
      %1516 = vmatpush1.bf16.msra.mxu0 0
      %1517 = vmatprep.subr.bf16.mxu0 0
      %1518 = vmatpush1.bf16.msra.mxu0 0
      %1519 = vmatprep.subr.bf16.mxu0 0
      %1520 = vmatpush1.bf16.msra.mxu0 0
      %1521 = vmatprep.subr.bf16.mxu0 0
      %1522 = vmatpush1.bf16.msra.mxu0 0
      %1523 = vmatprep.subr.bf16.mxu0 0
      %1524 = vmatpush1.bf16.msra.mxu0 0
      %1525 = vmatprep.mubr.bf16.mxu0 0
      %1526 = vmatmul.mubr.bf16.gmra.mrb[0].mxu0 %v1443
      %v1527 = vpop.f32.mrb[0].mxu0
      %v1528 = vadd.f32 %v1311, %v1527
      %v1529 = vpop.f32.mrb[0].mxu0
      %v1530 = vpop.f32.mrb[0].mxu0
      %v1531 = vadd.f32 %v1314, %v1530
      %v1532 = vpop.f32.mrb[0].mxu0
      %1533 = vmatprep.mubr.bf16.mxu0 0
      %1534 = vmatmul.mubr.bf16.gmra.mrb[0].mxu0 %v1446
      %v1535 = vpop.f32.mrb[0].mxu0
      %v1536 = vadd.f32 %v1319, %v1535
      %v1537 = vpop.f32.mrb[0].mxu0
      %v1538 = vpop.f32.mrb[0].mxu0
      %v1539 = vadd.f32 %v1322, %v1538
      %v1540 = vpop.f32.mrb[0].mxu0
      %1541 = vmatprep.mubr.bf16.mxu0 0
      %1542 = vmatmul.mubr.bf16.gmra.mrb[0].mxu0 %v1449
      %v1543 = vpop.f32.mrb[0].mxu0
      %v1544 = vadd.f32 %v1327, %v1543
      %v1545 = vpop.f32.mrb[0].mxu0
      %v1546 = vpop.f32.mrb[0].mxu0
      %v1547 = vadd.f32 %v1330, %v1546
      %v1548 = vpop.f32.mrb[0].mxu0
      %1549 = vmatprep.mubr.bf16.mxu0 0
      %1550 = vmatmul.mubr.bf16.gmra.mrb[0].mxu0 %v1452
      %v1551 = vpop.f32.mrb[0].mxu0
      %v1552 = vadd.f32 %v1335, %v1551
      %v1553 = vpop.f32.mrb[0].mxu0
      %v1554 = vpop.f32.mrb[0].mxu0
      %v1555 = vadd.f32 %v1338, %v1554
      %v1556 = vpop.f32.mrb[0].mxu0
      %1557 = vmatprep.mubr.bf16.mxu0 0
      %1558 = vmatmul.mubr.bf16.gmra.mrb[0].mxu0 %v1455
      %v1559 = vpop.f32.mrb[0].mxu0
      %v1560 = vadd.f32 %v1343, %v1559
      %v1561 = vpop.f32.mrb[0].mxu0
      %v1562 = vpop.f32.mrb[0].mxu0
      %v1563 = vadd.f32 %v1346, %v1562
      %v1564 = vpop.f32.mrb[0].mxu0
      %1565 = vmatprep.mubr.bf16.mxu0 0
      %1566 = vmatmul.mubr.bf16.gmra.mrb[0].mxu0 %v1458
      %v1567 = vpop.f32.mrb[0].mxu0
      %v1568 = vadd.f32 %v1351, %v1567
      %v1569 = vpop.f32.mrb[0].mxu0
      %v1570 = vpop.f32.mrb[0].mxu0
      %v1571 = vadd.f32 %v1354, %v1570
      %v1572 = vpop.f32.mrb[0].mxu0
      %1573 = vmatprep.mubr.bf16.mxu0 0
      %1574 = vmatmul.mubr.bf16.gmra.mrb[0].mxu0 %v1461
      %v1575 = vpop.f32.mrb[0].mxu0
      %v1576 = vadd.f32 %v1359, %v1575
      %v1577 = vpop.f32.mrb[0].mxu0
      %v1578 = vpop.f32.mrb[0].mxu0
      %v1579 = vadd.f32 %v1362, %v1578
      %v1580 = vpop.f32.mrb[0].mxu0
      %1581 = vmatprep.mubr.bf16.mxu0 0
      %1582 = vmatmul.mubr.bf16.gmra.mrb[0].mxu0 %v1464
      %v1583 = vpop.f32.mrb[0].mxu0
      %v1584 = vadd.f32 %v1367, %v1583
      %v1585 = vpop.f32.mrb[0].mxu0
      %v1586 = vpop.f32.mrb[0].mxu0
      %v1587 = vadd.f32 %v1370, %v1586
      %v1588 = vpop.f32.mrb[0].mxu0
      %1589 = vmatprep.mubr.bf16.mxu0 0
      %1590 = vmatmul.mubr.bf16.gmra.mrb[0].mxu0 %v1467
      %v1591 = vpop.f32.mrb[0].mxu0
      %v1592 = vadd.f32 %v1375, %v1591
      %v1593 = vpop.f32.mrb[0].mxu0
      %v1594 = vpop.f32.mrb[0].mxu0
      %v1595 = vadd.f32 %v1378, %v1594
      %v1596 = vpop.f32.mrb[0].mxu0
      %1597 = vmatprep.mubr.bf16.mxu0 0
      %1598 = vmatmul.mubr.bf16.gmra.mrb[0].mxu0 %v1470
      %v1599 = vpop.f32.mrb[0].mxu0
      %v1600 = vadd.f32 %v1383, %v1599
      %v1601 = vpop.f32.mrb[0].mxu0
      %v1602 = vpop.f32.mrb[0].mxu0
      %v1603 = vadd.f32 %v1386, %v1602
      %v1604 = vpop.f32.mrb[0].mxu0
      %1605 = vmatprep.mubr.bf16.mxu0 0
      %1606 = vmatmul.mubr.bf16.gmra.mrb[0].mxu0 %v1473
      %v1607 = vpop.f32.mrb[0].mxu0
      %v1608 = vadd.f32 %v1391, %v1607
      %v1609 = vpop.f32.mrb[0].mxu0
      %v1610 = vpop.f32.mrb[0].mxu0
      %v1611 = vadd.f32 %v1394, %v1610
      %v1612 = vpop.f32.mrb[0].mxu0
      %1613 = vmatprep.mubr.bf16.mxu0 0
      %1614 = vmatmul.mubr.bf16.gmra.mrb[0].mxu0 %v1476
      %v1615 = vpop.f32.mrb[0].mxu0
      %v1616 = vadd.f32 %v1399, %v1615
      %v1617 = vpop.f32.mrb[0].mxu0
      %v1618 = vpop.f32.mrb[0].mxu0
      %v1619 = vadd.f32 %v1402, %v1618
      %v1620 = vpop.f32.mrb[0].mxu0
      %1621 = vmatprep.mubr.bf16.mxu0 0
      %1622 = vmatmul.mubr.bf16.gmra.mrb[0].mxu0 %v1479
      %v1623 = vpop.f32.mrb[0].mxu0
      %v1624 = vadd.f32 %v1407, %v1623
      %v1625 = vpop.f32.mrb[0].mxu0
      %v1626 = vpop.f32.mrb[0].mxu0
      %v1627 = vadd.f32 %v1410, %v1626
      %v1628 = vpop.f32.mrb[0].mxu0
      %1629 = vmatprep.mubr.bf16.mxu0 0
      %1630 = vmatmul.mubr.bf16.gmra.mrb[0].mxu0 %v1482
      %v1631 = vpop.f32.mrb[0].mxu0
      %v1632 = vadd.f32 %v1415, %v1631
      %v1633 = vpop.f32.mrb[0].mxu0
      %v1634 = vpop.f32.mrb[0].mxu0
      %v1635 = vadd.f32 %v1418, %v1634
      %v1636 = vpop.f32.mrb[0].mxu0
      %1637 = vmatprep.mubr.bf16.mxu0 0
      %1638 = vmatmul.mubr.bf16.gmra.mrb[0].mxu0 %v1485
      %v1639 = vpop.f32.mrb[0].mxu0
      %v1640 = vadd.f32 %v1423, %v1639
      %v1641 = vpop.f32.mrb[0].mxu0
      %v1642 = vpop.f32.mrb[0].mxu0
      %v1643 = vadd.f32 %v1426, %v1642
      %v1644 = vpop.f32.mrb[0].mxu0
      %1645 = vmatprep.mubr.bf16.mxu0 0
      %1646 = vmatmul.mubr.bf16.gmra.mrb[0].mxu0 %v1488
      %v1647 = vpop.f32.mrb[0].mxu0
      %v1648 = vadd.f32 %v1431, %v1647
      %v1649 = vpop.f32.mrb[0].mxu0
      %v1650 = vpop.f32.mrb[0].mxu0
      %v1651 = vadd.f32 %v1434, %v1650
      %v1652 = vpop.f32.mrb[0].mxu0
      %1653 = vdwg.mxu0
      %vm1654 = vcmp.lt.s32.totalorder %v1021, 240
      %vm1655 = vcmp.lt.s32.totalorder %v1022, 240
      %vm1656 = vcmp.lt.s32.totalorder %v1023, 240
      %vm1657 = vcmp.lt.s32.totalorder %v1024, 240
      %vm1658 = vcmp.lt.s32.totalorder %v1025, 240
      %vm1659 = vcmp.lt.s32.totalorder %v1026, 240
      %vm1660 = vcmp.lt.s32.totalorder %v1027, 240
      %vm1661 = vcmp.lt.s32.totalorder %v1028, 240
      %vm1662 = vcmp.lt.s32.totalorder %v1029, 240
      %vm1663 = vcmp.lt.s32.totalorder %v1030, 240
      %vm1664 = vcmp.lt.s32.totalorder %v1031, 240
      %vm1665 = vcmp.lt.s32.totalorder %v1032, 240
      %vm1666 = vcmp.lt.s32.totalorder %v1033, 240
      %vm1667 = vcmp.lt.s32.totalorder %v1034, 240
      %vm1668 = vcmp.lt.s32.totalorder %v1035, 240
      %vm1669 = vcmp.lt.s32.totalorder %v1036, 240
      %vm1670 = vcmp.lt.s32.totalorder %v1037, 240
      %vm1671 = vcmp.lt.s32.totalorder %v1038, 240
      %vm1672 = vcmp.lt.s32.totalorder %v1039, 240
      %vm1673 = vcmp.lt.s32.totalorder %v1040, 240
      %vm1674 = vcmp.lt.s32.totalorder %v1041, 240
      %vm1675 = vcmp.lt.s32.totalorder %v1042, 240
      %vm1676 = vcmp.lt.s32.totalorder %v1043, 240
      %vm1677 = vcmp.lt.s32.totalorder %v1044, 240
      %vm1678 = vcmp.lt.s32.totalorder %v1045, 240
      %vm1679 = vcmp.lt.s32.totalorder %v1046, 240
      %vm1680 = vcmp.lt.s32.totalorder %v1047, 240
      %vm1681 = vcmp.lt.s32.totalorder %v1048, 240
      %vm1682 = vcmp.lt.s32.totalorder %v1049, 240
      %vm1683 = vcmp.lt.s32.totalorder %v1050, 240
      %vm1684 = vcmp.lt.s32.totalorder %v1051, 240
      %vm1685 = vcmp.lt.s32.totalorder %v1052, 240
      %v1686 = vsel %vm1654, 1, 0
      %v1687 = vsel %vm1655, 1, 0
      %v1688 = vsel %vm1656, 1, 0
      %v1689 = vsel %vm1657, 1, 0
      %v1690 = vsel %vm1658, 1, 0
      %v1691 = vsel %vm1659, 1, 0
      %v1692 = vsel %vm1660, 1, 0
      %v1693 = vsel %vm1661, 1, 0
      %v1694 = vsel %vm1662, 1, 0
      %v1695 = vsel %vm1663, 1, 0
      %v1696 = vsel %vm1664, 1, 0
      %v1697 = vsel %vm1665, 1, 0
      %v1698 = vsel %vm1666, 1, 0
      %v1699 = vsel %vm1667, 1, 0
      %v1700 = vsel %vm1668, 1, 0
      %v1701 = vsel %vm1669, 1, 0
      %v1702 = vsel %vm1670, 1, 0
      %v1703 = vsel %vm1671, 1, 0
      %v1704 = vsel %vm1672, 1, 0
      %v1705 = vsel %vm1673, 1, 0
      %v1706 = vsel %vm1674, 1, 0
      %v1707 = vsel %vm1675, 1, 0
      %v1708 = vsel %vm1676, 1, 0
      %v1709 = vsel %vm1677, 1, 0
      %v1710 = vsel %vm1678, 1, 0
      %v1711 = vsel %vm1679, 1, 0
      %v1712 = vsel %vm1680, 1, 0
      %v1713 = vsel %vm1681, 1, 0
      %v1714 = vsel %vm1682, 1, 0
      %v1715 = vsel %vm1683, 1, 0
      %v1716 = vsel %vm1684, 1, 0
      %v1717 = vsel %vm1685, 1, 0
      %vm1718 = vcmp.eq.s32.totalorder %v1686, 1
      %vm1719 = vcmp.eq.s32.totalorder %v1687, 1
      %vm1720 = vcmp.eq.s32.totalorder %v1688, 1
      %vm1721 = vcmp.eq.s32.totalorder %v1689, 1
      %vm1722 = vcmp.eq.s32.totalorder %v1690, 1
      %vm1723 = vcmp.eq.s32.totalorder %v1691, 1
      %vm1724 = vcmp.eq.s32.totalorder %v1692, 1
      %vm1725 = vcmp.eq.s32.totalorder %v1693, 1
      %vm1726 = vcmp.eq.s32.totalorder %v1694, 1
      %vm1727 = vcmp.eq.s32.totalorder %v1695, 1
      %vm1728 = vcmp.eq.s32.totalorder %v1696, 1
      %vm1729 = vcmp.eq.s32.totalorder %v1697, 1
      %vm1730 = vcmp.eq.s32.totalorder %v1698, 1
      %vm1731 = vcmp.eq.s32.totalorder %v1699, 1
      %vm1732 = vcmp.eq.s32.totalorder %v1700, 1
      %vm1733 = vcmp.eq.s32.totalorder %v1701, 1
      %vm1734 = vcmp.eq.s32.totalorder %v1702, 1
      %vm1735 = vcmp.eq.s32.totalorder %v1703, 1
      %vm1736 = vcmp.eq.s32.totalorder %v1704, 1
      %vm1737 = vcmp.eq.s32.totalorder %v1705, 1
      %vm1738 = vcmp.eq.s32.totalorder %v1706, 1
      %vm1739 = vcmp.eq.s32.totalorder %v1707, 1
      %vm1740 = vcmp.eq.s32.totalorder %v1708, 1
      %vm1741 = vcmp.eq.s32.totalorder %v1709, 1
      %vm1742 = vcmp.eq.s32.totalorder %v1710, 1
      %vm1743 = vcmp.eq.s32.totalorder %v1711, 1
      %vm1744 = vcmp.eq.s32.totalorder %v1712, 1
      %vm1745 = vcmp.eq.s32.totalorder %v1713, 1
      %vm1746 = vcmp.eq.s32.totalorder %v1714, 1
      %vm1747 = vcmp.eq.s32.totalorder %v1715, 1
      %vm1748 = vcmp.eq.s32.totalorder %v1716, 1
      %vm1749 = vcmp.eq.s32.totalorder %v1717, 1
      %v1750 = vsel %vm1718, %v991, 0.0
      %v1751 = vsel %vm1719, %v992, 0.0
      %v1752 = vsel %vm1720, %v993, 0.0
      %v1753 = vsel %vm1721, %v994, 0.0
      %v1754 = vsel %vm1722, %v995, 0.0
      %v1755 = vsel %vm1723, %v996, 0.0
      %v1756 = vsel %vm1724, %v997, 0.0
      %v1757 = vsel %vm1725, %v998, 0.0
      %v1758 = vsel %vm1726, %v999, 0.0
      %v1759 = vsel %vm1727, %v1000, 0.0
      %v1760 = vsel %vm1728, %v1001, 0.0
      %v1761 = vsel %vm1729, %v1002, 0.0
      %v1762 = vsel %vm1730, %v1003, 0.0
      %v1763 = vsel %vm1731, %v1004, 0.0
      %v1764 = vsel %vm1732, %v1005, 0.0
      %v1765 = vsel %vm1733, %v1006, 0.0
      %v1766 = vsel %vm1734, %v1007, 0.0
      %v1767 = vsel %vm1735, %v1008, 0.0
      %v1768 = vsel %vm1736, %v1009, 0.0
      %v1769 = vsel %vm1737, %v1010, 0.0
      %v1770 = vsel %vm1738, %v1011, 0.0
      %v1771 = vsel %vm1739, %v1012, 0.0
      %v1772 = vsel %vm1740, %v1013, 0.0
      %v1773 = vsel %vm1741, %v1014, 0.0
      %v1774 = vsel %vm1742, %v1015, 0.0
      %v1775 = vsel %vm1743, %v1016, 0.0
      %v1776 = vsel %vm1744, %v1017, 0.0
      %v1777 = vsel %vm1745, %v1018, 0.0
      %v1778 = vsel %vm1746, %v1019, 0.0
      %v1779 = vsel %vm1747, %v1020, 0.0
      %v1780 = vsel %vm1748, %v989, 0.0
      %v1781 = vsel %vm1749, %v990, 0.0
      %v1782 = vpack.c.bf16 %v1751, %v1750
      %v1783 = vpack.c.bf16 %v1753, %v1752
      %v1784 = vpack.c.bf16 %v1755, %v1754
      %v1785 = vpack.c.bf16 %v1757, %v1756
      %v1786 = vpack.c.bf16 %v1759, %v1758
      %v1787 = vpack.c.bf16 %v1761, %v1760
      %v1788 = vpack.c.bf16 %v1763, %v1762
      %v1789 = vpack.c.bf16 %v1765, %v1764
      %v1790 = vpack.c.bf16 %v1767, %v1766
      %v1791 = vpack.c.bf16 %v1769, %v1768
      %v1792 = vpack.c.bf16 %v1771, %v1770
      %v1793 = vpack.c.bf16 %v1773, %v1772
      %v1794 = vpack.c.bf16 %v1775, %v1774
      %v1795 = vpack.c.bf16 %v1777, %v1776
      %v1796 = vpack.c.bf16 %v1779, %v1778
      %v1797 = vpack.c.bf16 %v1781, %v1780
      %s1798 = scalar_lea.vmem %s1, 16
      %v1799 = vld [vmem:[%s1798] sm:$0xf]
      %v1800 = vld [vmem:[%s1798 + $0x4] sm:$0x3]
      %v1803 = vunpack.c.l.b16 %v1799
      %v1804 = vunpack.c.l.b16 %v1800
      %v1805 = vpack.c.b16 %v1804, %v1803
      %v1807 = vsel %vm1223, %v1782, 0
      %v1810 = vsel %vm1223, %v1783, 0
      %v1813 = vsel %vm1223, %v1784, 0
      %v1816 = vsel %vm1223, %v1785, 0
      %v1819 = vsel %vm1223, %v1786, 0
      %v1822 = vsel %vm1223, %v1787, 0
      %v1825 = vsel %vm1223, %v1788, 0
      %v1828 = vsel %vm1223, %v1789, 0
      %v1831 = vsel %vm1223, %v1790, 0
      %v1834 = vsel %vm1223, %v1791, 0
      %v1837 = vsel %vm1223, %v1792, 0
      %v1840 = vsel %vm1223, %v1793, 0
      %v1843 = vsel %vm1223, %v1794, 0
      %v1846 = vsel %vm1223, %v1795, 0
      %v1849 = vsel %vm1223, %v1796, 0
      %v1852 = vsel %vm1223, %v1797, 0
      %v1855 = vsel %vm1272, %v1805, 0
      %1857 = vmatprep.subr.bf16.mxu0 0
      %1858 = vmatpush1.bf16.msra.mxu0 %v1855
      %1859 = vmatprep.subr.bf16.mxu0 0
      %1860 = vmatpush1.bf16.msra.mxu0 0
      %1861 = vmatprep.subr.bf16.mxu0 0
      %1862 = vmatpush1.bf16.msra.mxu0 0
      %1863 = vmatprep.subr.bf16.mxu0 0
      %1864 = vmatpush1.bf16.msra.mxu0 0
      %1865 = vmatprep.subr.bf16.mxu0 0
      %1866 = vmatpush1.bf16.msra.mxu0 0
      %1867 = vmatprep.subr.bf16.mxu0 0
      %1868 = vmatpush1.bf16.msra.mxu0 0
      %1869 = vmatprep.subr.bf16.mxu0 0
      %1870 = vmatpush1.bf16.msra.mxu0 0
      %1871 = vmatprep.subr.bf16.mxu0 0
      %1872 = vmatpush1.bf16.msra.mxu0 0
      %1873 = vmatprep.subr.bf16.mxu0 0
      %1874 = vmatpush1.bf16.msra.mxu0 0
      %1875 = vmatprep.subr.bf16.mxu0 0
      %1876 = vmatpush1.bf16.msra.mxu0 0
      %1877 = vmatprep.subr.bf16.mxu0 0
      %1878 = vmatpush1.bf16.msra.mxu0 0
      %1879 = vmatprep.subr.bf16.mxu0 0
      %1880 = vmatpush1.bf16.msra.mxu0 0
      %1881 = vmatprep.subr.bf16.mxu0 0
      %1882 = vmatpush1.bf16.msra.mxu0 0
      %1883 = vmatprep.subr.bf16.mxu0 0
      %1884 = vmatpush1.bf16.msra.mxu0 0
      %1885 = vmatprep.subr.bf16.mxu0 0
      %1886 = vmatpush1.bf16.msra.mxu0 0
      %1887 = vmatprep.subr.bf16.mxu0 0
      %1888 = vmatpush1.bf16.msra.mxu0 0
      %1889 = vmatprep.mubr.bf16.mxu0 0
      %1890 = vmatmul.mubr.bf16.gmra.mrb[0].mxu0 %v1807
      %v1891 = vpop.f32.mrb[0].mxu0
      %v1892 = vadd.f32 0.0, %v1891
      %v1893 = vpop.f32.mrb[0].mxu0
      %v1894 = vpop.f32.mrb[0].mxu0
      %v1895 = vadd.f32 0.0, %v1894
      %v1896 = vpop.f32.mrb[0].mxu0
      %1897 = vmatprep.mubr.bf16.mxu0 0
      %1898 = vmatmul.mubr.bf16.gmra.mrb[0].mxu0 %v1810
      %v1899 = vpop.f32.mrb[0].mxu0
      %v1900 = vadd.f32 0.0, %v1899
      %v1901 = vpop.f32.mrb[0].mxu0
      %v1902 = vpop.f32.mrb[0].mxu0
      %v1903 = vadd.f32 0.0, %v1902
      %v1904 = vpop.f32.mrb[0].mxu0
      %1905 = vmatprep.mubr.bf16.mxu0 0
      %1906 = vmatmul.mubr.bf16.gmra.mrb[0].mxu0 %v1813
      %v1907 = vpop.f32.mrb[0].mxu0
      %v1908 = vadd.f32 0.0, %v1907
      %v1909 = vpop.f32.mrb[0].mxu0
      %v1910 = vpop.f32.mrb[0].mxu0
      %v1911 = vadd.f32 0.0, %v1910
      %v1912 = vpop.f32.mrb[0].mxu0
      %1913 = vmatprep.mubr.bf16.mxu0 0
      %1914 = vmatmul.mubr.bf16.gmra.mrb[0].mxu0 %v1816
      %v1915 = vpop.f32.mrb[0].mxu0
      %v1916 = vadd.f32 0.0, %v1915
      %v1917 = vpop.f32.mrb[0].mxu0
      %v1918 = vpop.f32.mrb[0].mxu0
      %v1919 = vadd.f32 0.0, %v1918
      %v1920 = vpop.f32.mrb[0].mxu0
      %1921 = vmatprep.mubr.bf16.mxu0 0
      %1922 = vmatmul.mubr.bf16.gmra.mrb[0].mxu0 %v1819
      %v1923 = vpop.f32.mrb[0].mxu0
      %v1924 = vadd.f32 0.0, %v1923
      %v1925 = vpop.f32.mrb[0].mxu0
      %v1926 = vpop.f32.mrb[0].mxu0
      %v1927 = vadd.f32 0.0, %v1926
      %v1928 = vpop.f32.mrb[0].mxu0
      %1929 = vmatprep.mubr.bf16.mxu0 0
      %1930 = vmatmul.mubr.bf16.gmra.mrb[0].mxu0 %v1822
      %v1931 = vpop.f32.mrb[0].mxu0
      %v1932 = vadd.f32 0.0, %v1931
      %v1933 = vpop.f32.mrb[0].mxu0
      %v1934 = vpop.f32.mrb[0].mxu0
      %v1935 = vadd.f32 0.0, %v1934
      %v1936 = vpop.f32.mrb[0].mxu0
      %1937 = vmatprep.mubr.bf16.mxu0 0
      %1938 = vmatmul.mubr.bf16.gmra.mrb[0].mxu0 %v1825
      %v1939 = vpop.f32.mrb[0].mxu0
      %v1940 = vadd.f32 0.0, %v1939
      %v1941 = vpop.f32.mrb[0].mxu0
      %v1942 = vpop.f32.mrb[0].mxu0
      %v1943 = vadd.f32 0.0, %v1942
      %v1944 = vpop.f32.mrb[0].mxu0
      %1945 = vmatprep.mubr.bf16.mxu0 0
      %1946 = vmatmul.mubr.bf16.gmra.mrb[0].mxu0 %v1828
      %v1947 = vpop.f32.mrb[0].mxu0
      %v1948 = vadd.f32 0.0, %v1947
      %v1949 = vpop.f32.mrb[0].mxu0
      %v1950 = vpop.f32.mrb[0].mxu0
      %v1951 = vadd.f32 0.0, %v1950
      %v1952 = vpop.f32.mrb[0].mxu0
      %1953 = vmatprep.mubr.bf16.mxu0 0
      %1954 = vmatmul.mubr.bf16.gmra.mrb[0].mxu0 %v1831
      %v1955 = vpop.f32.mrb[0].mxu0
      %v1956 = vadd.f32 0.0, %v1955
      %v1957 = vpop.f32.mrb[0].mxu0
      %v1958 = vpop.f32.mrb[0].mxu0
      %v1959 = vadd.f32 0.0, %v1958
      %v1960 = vpop.f32.mrb[0].mxu0
      %1961 = vmatprep.mubr.bf16.mxu0 0
      %1962 = vmatmul.mubr.bf16.gmra.mrb[0].mxu0 %v1834
      %v1963 = vpop.f32.mrb[0].mxu0
      %v1964 = vadd.f32 0.0, %v1963
      %v1965 = vpop.f32.mrb[0].mxu0
      %v1966 = vpop.f32.mrb[0].mxu0
      %v1967 = vadd.f32 0.0, %v1966
      %v1968 = vpop.f32.mrb[0].mxu0
      %1969 = vmatprep.mubr.bf16.mxu0 0
      %1970 = vmatmul.mubr.bf16.gmra.mrb[0].mxu0 %v1837
      %v1971 = vpop.f32.mrb[0].mxu0
      %v1972 = vadd.f32 0.0, %v1971
      %v1973 = vpop.f32.mrb[0].mxu0
      %v1974 = vpop.f32.mrb[0].mxu0
      %v1975 = vadd.f32 0.0, %v1974
      %v1976 = vpop.f32.mrb[0].mxu0
      %1977 = vmatprep.mubr.bf16.mxu0 0
      %1978 = vmatmul.mubr.bf16.gmra.mrb[0].mxu0 %v1840
      %v1979 = vpop.f32.mrb[0].mxu0
      %v1980 = vadd.f32 0.0, %v1979
      %v1981 = vpop.f32.mrb[0].mxu0
      %v1982 = vpop.f32.mrb[0].mxu0
      %v1983 = vadd.f32 0.0, %v1982
      %v1984 = vpop.f32.mrb[0].mxu0
      %1985 = vmatprep.mubr.bf16.mxu0 0
      %1986 = vmatmul.mubr.bf16.gmra.mrb[0].mxu0 %v1843
      %v1987 = vpop.f32.mrb[0].mxu0
      %v1988 = vadd.f32 0.0, %v1987
      %v1989 = vpop.f32.mrb[0].mxu0
      %v1990 = vpop.f32.mrb[0].mxu0
      %v1991 = vadd.f32 0.0, %v1990
      %v1992 = vpop.f32.mrb[0].mxu0
      %1993 = vmatprep.mubr.bf16.mxu0 0
      %1994 = vmatmul.mubr.bf16.gmra.mrb[0].mxu0 %v1846
      %v1995 = vpop.f32.mrb[0].mxu0
      %v1996 = vadd.f32 0.0, %v1995
      %v1997 = vpop.f32.mrb[0].mxu0
      %v1998 = vpop.f32.mrb[0].mxu0
      %v1999 = vadd.f32 0.0, %v1998
      %v2000 = vpop.f32.mrb[0].mxu0
      %2001 = vmatprep.mubr.bf16.mxu0 0
      %2002 = vmatmul.mubr.bf16.gmra.mrb[0].mxu0 %v1849
      %v2003 = vpop.f32.mrb[0].mxu0
      %v2004 = vadd.f32 0.0, %v2003
      %v2005 = vpop.f32.mrb[0].mxu0
      %v2006 = vpop.f32.mrb[0].mxu0
      %v2007 = vadd.f32 0.0, %v2006
      %v2008 = vpop.f32.mrb[0].mxu0
      %2009 = vmatprep.mubr.bf16.mxu0 0
      %2010 = vmatmul.mubr.bf16.gmra.mrb[0].mxu0 %v1852
      %v2011 = vpop.f32.mrb[0].mxu0
      %v2012 = vadd.f32 0.0, %v2011
      %v2013 = vpop.f32.mrb[0].mxu0
      %v2014 = vpop.f32.mrb[0].mxu0
      %v2015 = vadd.f32 0.0, %v2014
      %v2016 = vpop.f32.mrb[0].mxu0
      %2017 = vdwg.mxu0
      %v2018 = vadd.f32 %v1528, %v1892
      %v2019 = vadd.f32 %v1531, %v1895
      %v2020 = vadd.f32 %v1536, %v1900
      %v2021 = vadd.f32 %v1539, %v1903
      %v2022 = vadd.f32 %v1544, %v1908
      %v2023 = vadd.f32 %v1547, %v1911
      %v2024 = vadd.f32 %v1552, %v1916
      %v2025 = vadd.f32 %v1555, %v1919
      %v2026 = vadd.f32 %v1560, %v1924
      %v2027 = vadd.f32 %v1563, %v1927
      %v2028 = vadd.f32 %v1568, %v1932
      %v2029 = vadd.f32 %v1571, %v1935
      %v2030 = vadd.f32 %v1576, %v1940
      %v2031 = vadd.f32 %v1579, %v1943
      %v2032 = vadd.f32 %v1584, %v1948
      %v2033 = vadd.f32 %v1587, %v1951
      %v2034 = vadd.f32 %v1592, %v1956
      %v2035 = vadd.f32 %v1595, %v1959
      %v2036 = vadd.f32 %v1600, %v1964
      %v2037 = vadd.f32 %v1603, %v1967
      %v2038 = vadd.f32 %v1608, %v1972
      %v2039 = vadd.f32 %v1611, %v1975
      %v2040 = vadd.f32 %v1616, %v1980
      %v2041 = vadd.f32 %v1619, %v1983
      %v2042 = vadd.f32 %v1624, %v1988
      %v2043 = vadd.f32 %v1627, %v1991
      %v2044 = vadd.f32 %v1632, %v1996
      %v2045 = vadd.f32 %v1635, %v1999
      %v2046 = vadd.f32 %v1640, %v2004
      %v2047 = vadd.f32 %v1643, %v2007
      %v2048 = vadd.f32 %v1648, %v2012
      %v2049 = vadd.f32 %v1651, %v2015
      %v2050 = vpack.c.bf16 %v2019, %v2018
      %v2051 = vpack.c.bf16 %v2021, %v2020
      %v2052 = vpack.c.bf16 %v2023, %v2022
      %v2053 = vpack.c.bf16 %v2025, %v2024
      %v2054 = vpack.c.bf16 %v2027, %v2026
      %v2055 = vpack.c.bf16 %v2029, %v2028
      %v2056 = vpack.c.bf16 %v2031, %v2030
      %v2057 = vpack.c.bf16 %v2033, %v2032
      %v2058 = vpack.c.bf16 %v2035, %v2034
      %v2059 = vpack.c.bf16 %v2037, %v2036
      %v2060 = vpack.c.bf16 %v2039, %v2038
      %v2061 = vpack.c.bf16 %v2041, %v2040
      %v2062 = vpack.c.bf16 %v2043, %v2042
      %v2063 = vpack.c.bf16 %v2045, %v2044
      %v2064 = vpack.c.bf16 %v2047, %v2046
      %v2065 = vpack.c.bf16 %v2049, %v2048
      %v2082 = vunpack.c.l.b16 %v2050
      %v2083 = vunpack.c.h.b16 %v2050
      %v2084 = vunpack.c.l.b16 %v2051
      %v2085 = vunpack.c.h.b16 %v2051
      %v2086 = vunpack.c.l.b16 %v2052
      %v2087 = vunpack.c.h.b16 %v2052
      %v2088 = vunpack.c.l.b16 %v2053
      %v2089 = vunpack.c.h.b16 %v2053
      %v2090 = vunpack.c.l.b16 %v2054
      %v2091 = vunpack.c.h.b16 %v2054
      %v2092 = vunpack.c.l.b16 %v2055
      %v2093 = vunpack.c.h.b16 %v2055
      %v2094 = vunpack.c.l.b16 %v2056
      %v2095 = vunpack.c.h.b16 %v2056
      %v2096 = vunpack.c.l.b16 %v2057
      %v2097 = vunpack.c.h.b16 %v2057
      %v2098 = vunpack.c.l.b16 %v2058
      %v2099 = vunpack.c.h.b16 %v2058
      %v2100 = vunpack.c.l.b16 %v2059
      %v2101 = vunpack.c.h.b16 %v2059
      %v2102 = vunpack.c.l.b16 %v2060
      %v2103 = vunpack.c.h.b16 %v2060
      %v2104 = vunpack.c.l.b16 %v2061
      %v2105 = vunpack.c.h.b16 %v2061
      %v2106 = vunpack.c.l.b16 %v2062
      %v2107 = vunpack.c.h.b16 %v2062
      %v2108 = vunpack.c.l.b16 %v2063
      %v2109 = vunpack.c.h.b16 %v2063
      %v2110 = vunpack.c.l.b16 %v2064
      %v2111 = vunpack.c.h.b16 %v2064
      %v2112 = vunpack.c.l.b16 %v2065
      %v2113 = vunpack.c.h.b16 %v2065
      %v2114 = vpack.c.b16 %v2082, %v2082
      %v2115 = vpack.c.b16 %v2083, %v2083
      %v2116 = vpack.c.b16 %v2084, %v2084
      %v2117 = vpack.c.b16 %v2085, %v2085
      %v2118 = vpack.c.b16 %v2086, %v2086
      %v2119 = vpack.c.b16 %v2087, %v2087
      %v2120 = vpack.c.b16 %v2088, %v2088
      %v2121 = vpack.c.b16 %v2089, %v2089
      %v2122 = vpack.c.b16 %v2090, %v2090
      %v2123 = vpack.c.b16 %v2091, %v2091
      %v2124 = vpack.c.b16 %v2092, %v2092
      %v2125 = vpack.c.b16 %v2093, %v2093
      %v2126 = vpack.c.b16 %v2094, %v2094
      %v2127 = vpack.c.b16 %v2095, %v2095
      %v2128 = vpack.c.b16 %v2096, %v2096
      %v2129 = vpack.c.b16 %v2097, %v2097
      %v2130 = vpack.c.b16 %v2098, %v2098
      %v2131 = vpack.c.b16 %v2099, %v2099
      %v2132 = vpack.c.b16 %v2100, %v2100
      %v2133 = vpack.c.b16 %v2101, %v2101
      %v2134 = vpack.c.b16 %v2102, %v2102
      %v2135 = vpack.c.b16 %v2103, %v2103
      %v2136 = vpack.c.b16 %v2104, %v2104
      %v2137 = vpack.c.b16 %v2105, %v2105
      %v2138 = vpack.c.b16 %v2106, %v2106
      %v2139 = vpack.c.b16 %v2107, %v2107
      %v2140 = vpack.c.b16 %v2108, %v2108
      %v2141 = vpack.c.b16 %v2109, %v2109
      %v2142 = vpack.c.b16 %v2110, %v2110
      %v2143 = vpack.c.b16 %v2111, %v2111
      %v2144 = vpack.c.b16 %v2112, %v2112
      %v2145 = vpack.c.b16 %v2113, %v2113
      %vm2178 = vcmask 27648
      %2179 = vst.msk [vmem:[%s208] sm:$0xf] %vm2178, %v2114
      %2180 = vst.msk [vmem:[%s208 + $0x4] sm:$0xf] %vm2178, %v2115
      %2181 = vst.msk [vmem:[%s208 + $0x8] sm:$0xf] %vm2178, %v2116
      %2182 = vst.msk [vmem:[%s208 + $0xc] sm:$0xf] %vm2178, %v2117
      %2183 = vst.msk [vmem:[%s208 + $0x10] sm:$0xf] %vm2178, %v2118
      %2184 = vst.msk [vmem:[%s208 + $0x14] sm:$0xf] %vm2178, %v2119
      %2185 = vst.msk [vmem:[%s208 + $0x18] sm:$0xf] %vm2178, %v2120
      %2186 = vst.msk [vmem:[%s208 + $0x1c] sm:$0xf] %vm2178, %v2121
      %2187 = vst.msk [vmem:[%s208 + $0x20] sm:$0xf] %vm2178, %v2122
      %2188 = vst.msk [vmem:[%s208 + $0x24] sm:$0xf] %vm2178, %v2123
      %2189 = vst.msk [vmem:[%s208 + $0x28] sm:$0xf] %vm2178, %v2124
      %2190 = vst.msk [vmem:[%s208 + $0x2c] sm:$0xf] %vm2178, %v2125
      %2191 = vst.msk [vmem:[%s208 + $0x30] sm:$0xf] %vm2178, %v2126
      %2192 = vst.msk [vmem:[%s208 + $0x34] sm:$0xf] %vm2178, %v2127
      %2193 = vst.msk [vmem:[%s208 + $0x38] sm:$0xf] %vm2178, %v2128
      %2194 = vst.msk [vmem:[%s208 + $0x3c] sm:$0xf] %vm2178, %v2129
      %2195 = vst.msk [vmem:[%s208 + $0x40] sm:$0xf] %vm2178, %v2130
      %2196 = vst.msk [vmem:[%s208 + $0x44] sm:$0xf] %vm2178, %v2131
      %2197 = vst.msk [vmem:[%s208 + $0x48] sm:$0xf] %vm2178, %v2132
      %2198 = vst.msk [vmem:[%s208 + $0x4c] sm:$0xf] %vm2178, %v2133
      %2199 = vst.msk [vmem:[%s208 + $0x50] sm:$0xf] %vm2178, %v2134
      %2200 = vst.msk [vmem:[%s208 + $0x54] sm:$0xf] %vm2178, %v2135
      %2201 = vst.msk [vmem:[%s208 + $0x58] sm:$0xf] %vm2178, %v2136
      %2202 = vst.msk [vmem:[%s208 + $0x5c] sm:$0xf] %vm2178, %v2137
      %2203 = vst.msk [vmem:[%s208 + $0x60] sm:$0xf] %vm2178, %v2138
      %2204 = vst.msk [vmem:[%s208 + $0x64] sm:$0xf] %vm2178, %v2139
      %2205 = vst.msk [vmem:[%s208 + $0x68] sm:$0xf] %vm2178, %v2140
      %2206 = vst.msk [vmem:[%s208 + $0x6c] sm:$0xf] %vm2178, %v2141
      %2207 = vst.msk [vmem:[%s208 + $0x70] sm:$0xf] %vm2178, %v2142
      %2208 = vst.msk [vmem:[%s208 + $0x74] sm:$0xf] %vm2178, %v2143
      %2209 = vst.msk [vmem:[%s208 + $0x78] sm:$0xf] %vm2178, %v2144
      %2210 = vst.msk [vmem:[%s208 + $0x7c] sm:$0xf] %vm2178, %v2145
      %v2211 = vsel %vm955, %v2018, 0.0
      %v2212 = vsel %vm955, %v2019, 0.0
      %v2213 = vadd.f32 %v2211, %v2212
      %v2214 = vsel %vm955, %v2020, 0.0
      %v2215 = vadd.f32 %v2213, %v2214
      %v2216 = vsel %vm955, %v2021, 0.0
      %v2217 = vadd.f32 %v2215, %v2216
      %v2218 = vsel %vm955, %v2022, 0.0
      %v2219 = vadd.f32 %v2217, %v2218
      %v2220 = vsel %vm955, %v2023, 0.0
      %v2221 = vadd.f32 %v2219, %v2220
      %v2222 = vsel %vm955, %v2024, 0.0
      %v2223 = vadd.f32 %v2221, %v2222
      %v2224 = vsel %vm955, %v2025, 0.0
      %v2225 = vadd.f32 %v2223, %v2224
      %v2226 = vsel %vm955, %v2026, 0.0
      %v2227 = vadd.f32 %v2225, %v2226
      %v2228 = vsel %vm955, %v2027, 0.0
      %v2229 = vadd.f32 %v2227, %v2228
      %v2230 = vsel %vm955, %v2028, 0.0
      %v2231 = vadd.f32 %v2229, %v2230
      %v2232 = vsel %vm955, %v2029, 0.0
      %v2233 = vadd.f32 %v2231, %v2232
      %v2234 = vsel %vm955, %v2030, 0.0
      %v2235 = vadd.f32 %v2233, %v2234
      %v2236 = vsel %vm955, %v2031, 0.0
      %v2237 = vadd.f32 %v2235, %v2236
      %v2238 = vsel %vm955, %v2032, 0.0
      %v2239 = vadd.f32 %v2237, %v2238
      %v2240 = vsel %vm955, %v2033, 0.0
      %v2241 = vadd.f32 %v2239, %v2240
      %v2242 = vsel %vm955, %v2034, 0.0
      %v2243 = vadd.f32 %v2241, %v2242
      %v2244 = vsel %vm955, %v2035, 0.0
      %v2245 = vadd.f32 %v2243, %v2244
      %v2246 = vsel %vm955, %v2036, 0.0
      %v2247 = vadd.f32 %v2245, %v2246
      %v2248 = vsel %vm955, %v2037, 0.0
      %v2249 = vadd.f32 %v2247, %v2248
      %v2250 = vsel %vm955, %v2038, 0.0
      %v2251 = vadd.f32 %v2249, %v2250
      %v2252 = vsel %vm955, %v2039, 0.0
      %v2253 = vadd.f32 %v2251, %v2252
      %v2254 = vsel %vm955, %v2040, 0.0
      %v2255 = vadd.f32 %v2253, %v2254
      %v2256 = vsel %vm955, %v2041, 0.0
      %v2257 = vadd.f32 %v2255, %v2256
      %v2258 = vsel %vm955, %v2042, 0.0
      %v2259 = vadd.f32 %v2257, %v2258
      %v2260 = vsel %vm955, %v2043, 0.0
      %v2261 = vadd.f32 %v2259, %v2260
      %v2262 = vsel %vm955, %v2044, 0.0
      %v2263 = vadd.f32 %v2261, %v2262
      %v2264 = vsel %vm955, %v2045, 0.0
      %v2265 = vadd.f32 %v2263, %v2264
      %v2266 = vsel %vm955, %v2046, 0.0
      %v2267 = vadd.f32 %v2265, %v2266
      %v2268 = vsel %vm955, %v2047, 0.0
      %v2269 = vadd.f32 %v2267, %v2268
      %v2270 = vsel %vm955, %v2048, 0.0
      %v2271 = vadd.f32 %v2269, %v2270
      %v2272 = vsel %vm955, %v2049, 0.0
      %v2273 = vadd.f32 %v2271, %v2272
      %v2274 = vrot.slane %v2273, 4
      %v2275 = vadd.f32 %v2273, %v2274
      %v2276 = vrot.slane %v2275, 2
      %v2277 = vadd.f32 %v2275, %v2276
      %v2278 = vrot.slane %v2277, 1
      %v2279 = vadd.f32 %v2277, %v2278
      %vm2280 = vcmask 24576
      %2281 = vst.msk [vmem:[%s211] sm:$0x1] %vm2280, %v2279
      %v2282 = vmul.f32 %v2018, %v2018
      %v2283 = vmul.f32 %v2019, %v2019
      %v2284 = vmul.f32 %v2020, %v2020
      %v2285 = vmul.f32 %v2021, %v2021
      %v2286 = vmul.f32 %v2022, %v2022
      %v2287 = vmul.f32 %v2023, %v2023
      %v2288 = vmul.f32 %v2024, %v2024
      %v2289 = vmul.f32 %v2025, %v2025
      %v2290 = vmul.f32 %v2026, %v2026
      %v2291 = vmul.f32 %v2027, %v2027
      %v2292 = vmul.f32 %v2028, %v2028
      %v2293 = vmul.f32 %v2029, %v2029
      %v2294 = vmul.f32 %v2030, %v2030
      %v2295 = vmul.f32 %v2031, %v2031
      %v2296 = vmul.f32 %v2032, %v2032
      %v2297 = vmul.f32 %v2033, %v2033
      %v2298 = vmul.f32 %v2034, %v2034
      %v2299 = vmul.f32 %v2035, %v2035
      %v2300 = vmul.f32 %v2036, %v2036
      %v2301 = vmul.f32 %v2037, %v2037
      %v2302 = vmul.f32 %v2038, %v2038
      %v2303 = vmul.f32 %v2039, %v2039
      %v2304 = vmul.f32 %v2040, %v2040
      %v2305 = vmul.f32 %v2041, %v2041
      %v2306 = vmul.f32 %v2042, %v2042
      %v2307 = vmul.f32 %v2043, %v2043
      %v2308 = vmul.f32 %v2044, %v2044
      %v2309 = vmul.f32 %v2045, %v2045
      %v2310 = vmul.f32 %v2046, %v2046
      %v2311 = vmul.f32 %v2047, %v2047
      %v2312 = vmul.f32 %v2048, %v2048
      %v2313 = vmul.f32 %v2049, %v2049
      %v2314 = vsel %vm955, %v2282, 0.0
      %v2315 = vsel %vm955, %v2283, 0.0
      %v2316 = vadd.f32 %v2314, %v2315
      %v2317 = vsel %vm955, %v2284, 0.0
      %v2318 = vadd.f32 %v2316, %v2317
      %v2319 = vsel %vm955, %v2285, 0.0
      %v2320 = vadd.f32 %v2318, %v2319
      %v2321 = vsel %vm955, %v2286, 0.0
      %v2322 = vadd.f32 %v2320, %v2321
      %v2323 = vsel %vm955, %v2287, 0.0
      %v2324 = vadd.f32 %v2322, %v2323
      %v2325 = vsel %vm955, %v2288, 0.0
      %v2326 = vadd.f32 %v2324, %v2325
      %v2327 = vsel %vm955, %v2289, 0.0
      %v2328 = vadd.f32 %v2326, %v2327
      %v2329 = vsel %vm955, %v2290, 0.0
      %v2330 = vadd.f32 %v2328, %v2329
      %v2331 = vsel %vm955, %v2291, 0.0
      %v2332 = vadd.f32 %v2330, %v2331
      %v2333 = vsel %vm955, %v2292, 0.0
      %v2334 = vadd.f32 %v2332, %v2333
      %v2335 = vsel %vm955, %v2293, 0.0
      %v2336 = vadd.f32 %v2334, %v2335
      %v2337 = vsel %vm955, %v2294, 0.0
      %v2338 = vadd.f32 %v2336, %v2337
      %v2339 = vsel %vm955, %v2295, 0.0
      %v2340 = vadd.f32 %v2338, %v2339
      %v2341 = vsel %vm955, %v2296, 0.0
      %v2342 = vadd.f32 %v2340, %v2341
      %v2343 = vsel %vm955, %v2297, 0.0
      %v2344 = vadd.f32 %v2342, %v2343
      %v2345 = vsel %vm955, %v2298, 0.0
      %v2346 = vadd.f32 %v2344, %v2345
      %v2347 = vsel %vm955, %v2299, 0.0
      %v2348 = vadd.f32 %v2346, %v2347
      %v2349 = vsel %vm955, %v2300, 0.0
      %v2350 = vadd.f32 %v2348, %v2349
      %v2351 = vsel %vm955, %v2301, 0.0
      %v2352 = vadd.f32 %v2350, %v2351
      %v2353 = vsel %vm955, %v2302, 0.0
      %v2354 = vadd.f32 %v2352, %v2353
      %v2355 = vsel %vm955, %v2303, 0.0
      %v2356 = vadd.f32 %v2354, %v2355
      %v2357 = vsel %vm955, %v2304, 0.0
      %v2358 = vadd.f32 %v2356, %v2357
      %v2359 = vsel %vm955, %v2305, 0.0
      %v2360 = vadd.f32 %v2358, %v2359
      %v2361 = vsel %vm955, %v2306, 0.0
      %v2362 = vadd.f32 %v2360, %v2361
      %v2363 = vsel %vm955, %v2307, 0.0
      %v2364 = vadd.f32 %v2362, %v2363
      %v2365 = vsel %vm955, %v2308, 0.0
      %v2366 = vadd.f32 %v2364, %v2365
      %v2367 = vsel %vm955, %v2309, 0.0
      %v2368 = vadd.f32 %v2366, %v2367
      %v2369 = vsel %vm955, %v2310, 0.0
      %v2370 = vadd.f32 %v2368, %v2369
      %v2371 = vsel %vm955, %v2311, 0.0
      %v2372 = vadd.f32 %v2370, %v2371
      %v2373 = vsel %vm955, %v2312, 0.0
      %v2374 = vadd.f32 %v2372, %v2373
      %v2375 = vsel %vm955, %v2313, 0.0
      %v2376 = vadd.f32 %v2374, %v2375
      %v2377 = vrot.slane %v2376, 4
      %v2378 = vadd.f32 %v2376, %v2377
      %v2379 = vrot.slane %v2378, 2
      %v2380 = vadd.f32 %v2378, %v2379
      %v2381 = vrot.slane %v2380, 1
      %v2382 = vadd.f32 %v2380, %v2381
      %2383 = vst.msk [vmem:[%s214] sm:$0x1] %vm2280, %v2382
      %p2384 = scmp.lt.s32.totalorder %s16, 1
      %s2385 = scalar_select %p2384, %s16, 1
      %s2386 = smul.addr %s2385, 32
      %s2387 = smul.addr %s2386, 4
      %s2388 = scalar_lea.vmem %s2, %s2387
      %p2389 = scmp.lt.s32.totalorder %s16, 1
      %s2390 = scalar_select %p2389, %s16, 1
      %s2391 = scalar_lea.vmem %s3, %s2390
      %p2392 = scmp.lt.s32.totalorder %s16, 1
      %s2393 = scalar_select %p2392, %s16, 1
      %s2394 = scalar_lea.vmem %s4, %s2393
      // Predicated region
      $region29: #{residual_block.3} parent=27 // pred_check
        %p2395 = pneg %p81
      $region30: #{residual_block.3} parent=27 // pred_check_branch
        %2397 = sbr.rel (%p2395) target = $region32
      $region31: #{residual_block.3} parent=27 // pred_region
        _
      $region32: #{residual_block.3} parent=27 // pred_fallthru
        _
      // Predicated region
      $region33: #{residual_block.3} parent=27 // pred_check
        %p2398 = pneg %p107
      $region34: #{residual_block.3} parent=27 // pred_check_branch
        %2400 = sbr.rel (%p2398) target = $region36
      $region35: #{residual_block.3} parent=27 // pred_region
        _
      $region36: #{residual_block.3} parent=27 // pred_fallthru
        _
      // Predicated region
      $region37: #{residual_block.3} parent=27 // pred_check
        %p2401 = pneg %p133
      $region38: #{residual_block.3} parent=27 // pred_check_branch
        %2403 = sbr.rel (%p2401) target = $region40
      $region39: #{residual_block.3} parent=27 // pred_region
        _
      $region40: #{residual_block.3} parent=27 // pred_fallthru
        _
    $region28: #{residual_block.3} parent=5 // pred_fallthru
      _
    %p2404 = scmp.le.s32.totalorder 2, %s11
    // Predicated region
    $region41: #{residual_block.3} parent=5 // pred_check
      %p2405 = pneg %p2404
    $region42: #{residual_block.3} parent=5 // pred_check_branch
      %2407 = sbr.rel (%p2405) target = $region44
    $region43: #{residual_block.3} parent=5 // pred_region
      %s2408 = ssub.s32 %s11, 2
      // Predicated region
      $region45: #{residual_block.3} parent=43 // pred_check
        %p2409 = pneg %p87
      $region46: #{residual_block.3} parent=43 // pred_check_branch
        %2411 = sbr.rel (%p2409) target = $region48
      $region47: #{residual_block.3} parent=43 // pred_region
        %p2412 = scmp.lt.s32.totalorder %s17, 1
        %s2413 = scalar_select %p2412, %s17, 1
        %s2414 = smul.addr %s2413, 32
        %s2415 = smul.addr %s2414, 4
        %s2416 = scalar_lea.vmem %s2, %s2415
      $region48: #{residual_block.3} parent=43 // pred_fallthru
        _
      // Predicated region
      $region49: #{residual_block.3} parent=43 // pred_check
        %p2417 = pneg %p113
      $region50: #{residual_block.3} parent=43 // pred_check_branch
        %2419 = sbr.rel (%p2417) target = $region52
      $region51: #{residual_block.3} parent=43 // pred_region
        %p2420 = scmp.lt.s32.totalorder %s17, 1
        %s2421 = scalar_select %p2420, %s17, 1
        %s2422 = scalar_lea.vmem %s3, %s2421
      $region52: #{residual_block.3} parent=43 // pred_fallthru
        _
      // Predicated region
      $region53: #{residual_block.3} parent=43 // pred_check
        %p2423 = pneg %p139
      $region54: #{residual_block.3} parent=43 // pred_check_branch
        %2425 = sbr.rel (%p2423) target = $region56
      $region55: #{residual_block.3} parent=43 // pred_region
        %p2426 = scmp.lt.s32.totalorder %s17, 1
        %s2427 = scalar_select %p2426, %s17, 1
        %s2428 = scalar_lea.vmem %s4, %s2427
      $region56: #{residual_block.3} parent=43 // pred_fallthru
        _
    $region44: #{residual_block.3} parent=5 // pred_fallthru
      _
  $region6: #{residual_block.3} parent=0 // loop_footer
    %s15 = sadd.s32 1, %s11
  $region7: #{residual_block.3} parent=0 // loop_footer_branch
    %10 = sbr.rel target = $region3
  $region8: #{residual_block.3} parent=0 // loop_exit
    _

</llo_original>
